<compile_context>
chip_gen: v7x
topology: tpu7x:2x2x1
jax: 0.10.0
libtpu: 0.0.40
codegen_flags: <defaults>
</compile_context>

<pallas_src>
import functools
import math

import jax
import jax.numpy as jnp
from jax.experimental import pallas as pl
from jax.experimental.pallas import tpu as pltpu

# ----------------------- model hyper-parameters (small) -----------------------
PAD_IDX = 0
VOCAB = 32
EMB = 32          # embedding_size
DK = 16           # q_k_size
DV = 16           # v_size
FF = 64           # f_size
HEAD = 4
NBLOCKS = 2
BATCH = 2
SEQ = 8
LN_EPS = 1e-5

W_QKV = HEAD * (2 * DK + DV)       # 192 : fused QKV projection width
PB_QKV = 40                        # per-block rows in the QKV/FFN slabs (32 + 1, padded to /8)
PB_MISC = 136                      # per-block rows in the 32-wide slab (64+64+6, padded to /8)


# --------------------------- fused Pallas encoder ------------------------------
def _encoder_kernel(tok_ref, kbias_ref, wqkv_ref, wffn_ref, misc_ref, o_ref, *,
                    batch, seq, nblocks):
    """Embedding + positional encoding + ALL encoder blocks, fully in VMEM.

    tok_ref  : (B*S, 1)  int32   token ids (column layout for the one-hot lookup)
    kbias_ref: (B*H, 1, S) f32   additive key-pad bias (0 or -1e9)
    wqkv_ref : (NBLOCKS*PB_QKV, 192)  per block: rows[0:32]=Wqkv, row 32 = bqkv
    wffn_ref : (NBLOCKS*PB_QKV, 64)   per block: rows[0:32]=W1,   row 32 = b1
    misc_ref : (VOCAB + B*S + NBLOCKS*PB_MISC, 32)
               rows[0:VOCAB]=emb table, next B*S rows = PE (tiled over batch),
               then per block: 64 rows Wo, 64 rows W2,
               6 rows [bo, ln1_g, ln1_b, b2, ln2_g, ln2_b], 2 pad rows.
    """
    B, S = batch, seq
    R = B * S
    H = HEAD
    scale = jnp.float32(1.0 / math.sqrt(DK))

    # ---- embedding lookup as one-hot matmul + positional encoding (in-kernel) ----
    lane = jax.lax.broadcasted_iota(jnp.int32, (R, VOCAB), 1)
    onehot = jnp.where(tok_ref[...] == lane, jnp.float32(1.0), jnp.float32(0.0))
    emb_tbl = misc_ref[0:VOCAB, :]                       # (VOCAB, E)
    pe = misc_ref[VOCAB:VOCAB + R, :]                    # (R, E), already tiled over batch
    x = jnp.dot(onehot, emb_tbl, preferred_element_type=jnp.float32) + pe    # (R, E)

    kb = kbias_ref[...]                                  # (B*H, 1, S)

    for blk in range(nblocks):                           # static: fully unrolled
        rA = blk * PB_QKV
        wqkv = wqkv_ref[rA:rA + EMB, :]                  # (E, 192)
        bqkv = wqkv_ref[rA + EMB:rA + EMB + 1, :]        # (1, 192)
        w1 = wffn_ref[rA:rA + EMB, :]                    # (E, FF)
        b1 = wffn_ref[rA + EMB:rA + EMB + 1, :]          # (1, FF)

        rC = VOCAB + R + blk * PB_MISC
        wo = misc_ref[rC:rC + H * DV, :]                 # (H*DV, E)
        w2 = misc_ref[rC + H * DV:rC + H * DV + FF, :]   # (FF, E)
        v0 = rC + H * DV + FF
        bo = misc_ref[v0 + 0:v0 + 1, :]
        g1 = misc_ref[v0 + 1:v0 + 2, :]
        be1 = misc_ref[v0 + 2:v0 + 3, :]
        b2 = misc_ref[v0 + 3:v0 + 4, :]
        g2 = misc_ref[v0 + 4:v0 + 5, :]
        be2 = misc_ref[v0 + 5:v0 + 6, :]

        # ---- fused QKV projection: ONE (R,E)@(E,192) MXU pass ----
        qkv = jnp.dot(x, wqkv, preferred_element_type=jnp.float32) + bqkv    # (R, 192)

        # split heads -> (B*H, S, D) via static slices (no broadcast of x, no transpose)
        def split_heads(col0, d):
            return jnp.stack([qkv[b * S:(b + 1) * S, col0 + h * d:col0 + (h + 1) * d]
                              for b in range(B) for h in range(H)])
        q = split_heads(0, DK)                           # (B*H, S, DK)
        k = split_heads(H * DK, DK)
        v = split_heads(2 * H * DK, DV)

        # ---- attention batched over z = B*H ----
        s = jnp.einsum("zqd,zkd->zqk", q, k,
                       preferred_element_type=jnp.float32) * scale + kb      # (B*H, S, S)
        m = jnp.max(s, axis=-1, keepdims=True)           # kept for numerical safety
        e = jnp.exp(s - m)
        p = e * pl.reciprocal(jnp.sum(e, axis=-1, keepdims=True), approx=True)
        z = jnp.einsum("zqk,zkd->zqd", p, v,
                       preferred_element_type=jnp.float32)                   # (B*H, S, DV)

        # merge heads -> (R, H*DV): lane-concat per batch, sublane-concat over batch
        zcat = jnp.concatenate(
            [jnp.concatenate([z[b * H + h] for h in range(H)], axis=1) for b in range(B)],
            axis=0)                                                           # (R, H*DV)

        # ---- single output projection (R,64)@(64,E) ----
        att = jnp.dot(zcat, wo, preferred_element_type=jnp.float32) + bo      # (R, E)

        # ---- add & norm 1 ----
        h1 = att + x
        mu = jnp.mean(h1, axis=-1, keepdims=True)
        var = jnp.mean((h1 - mu) ** 2, axis=-1, keepdims=True)
        h1 = (h1 - mu) * jax.lax.rsqrt(var + LN_EPS) * g1 + be1

        # ---- feed-forward + add & norm 2 ----
        f = jnp.maximum(jnp.dot(h1, w1, preferred_element_type=jnp.float32) + b1, 0.0)
        f = jnp.dot(f, w2, preferred_element_type=jnp.float32) + b2
        h2 = f + h1
        mu2 = jnp.mean(h2, axis=-1, keepdims=True)
        var2 = jnp.mean((h2 - mu2) ** 2, axis=-1, keepdims=True)
        x = (h2 - mu2) * jax.lax.rsqrt(var2 + LN_EPS) * g2 + be2

    o_ref[...] = x


# ------------------------------ glue (plain JAX) ------------------------------
def sinusoidal_pe(seq_len, emb):
    pos = jnp.arange(seq_len, dtype=jnp.float32)[:, None]
    div = jnp.exp(-jnp.arange(0, emb, 2, dtype=jnp.float32) * (math.log(10000.0) / emb))
    ang = pos * div                                  # (S, E/2)
    pe = jnp.zeros((seq_len, emb), jnp.float32)
    pe = pe.at[:, 0::2].set(jnp.sin(ang))
    pe = pe.at[:, 1::2].set(jnp.cos(ang))
    return pe


def pack_params(params, batch, seq):
    """Pre-pack (ONCE, at init) all constants into 3 lane-dense slabs."""
    R = batch * seq
    blocks = params["blocks"]

    qkv_rows, ffn_rows = [], []
    for blk in blocks:
        wqkv = jnp.concatenate([blk["wq"], blk["wk"], blk["wv"]], axis=1)     # (E, 192)
        bqkv = jnp.concatenate([blk["bq"], blk["bk"], blk["bv"]], axis=1)     # (1, 192)
        pad_a = jnp.zeros((PB_QKV - EMB - 1, W_QKV), jnp.float32)
        qkv_rows.append(jnp.concatenate([wqkv, bqkv, pad_a], axis=0))
        pad_b = jnp.zeros((PB_QKV - EMB - 1, FF), jnp.float32)
        ffn_rows.append(jnp.concatenate([blk["w1"], blk["b1"], pad_b], axis=0))
    slab_qkv = jnp.concatenate(qkv_rows, axis=0)                               # (NB*40, 192)
    slab_ffn = jnp.concatenate(ffn_rows, axis=0)                               # (NB*40, 64)

    pe_tiled = jnp.tile(sinusoidal_pe(seq, EMB), (batch, 1))                   # (R, E)
    misc_rows = [params["emb"], pe_tiled]
    for blk in blocks:
        vecs = jnp.concatenate([blk["bo"], blk["ln1_g"], blk["ln1_b"],
                                blk["b2"], blk["ln2_g"], blk["ln2_b"]], axis=0)  # (6, E)
        pad_c = jnp.zeros((PB_MISC - HEAD * DV - FF - 6, EMB), jnp.float32)
        misc_rows.append(jnp.concatenate([blk["wo"], blk["w2"], vecs, pad_c], axis=0))
    slab_misc = jnp.concatenate(misc_rows, axis=0)     # (VOCAB + R + NB*136, 32)
    return slab_qkv, slab_ffn, slab_misc


def _full_spec(shape):
    nd = len(shape)
    return pl.BlockSpec(shape, lambda i, _nd=nd: (0,) * _nd)


@jax.jit
def encoder_forward(tokens, slab_qkv, slab_ffn, slab_misc):
    B, S = tokens.shape
    R = B * S
    tok_col = tokens.reshape(R, 1).astype(jnp.int32)
    # additive key-pad bias, pre-expanded per (batch, head): (B*H, 1, S)
    kb = jnp.where(tokens == PAD_IDX, jnp.float32(-1e9), jnp.float32(0.0))
    kb = jnp.broadcast_to(kb[:, None, None, :], (B, HEAD, 1, S)).reshape(B * HEAD, 1, S)

    args = (tok_col, kb, slab_qkv, slab_ffn, slab_misc)
    kernel = functools.partial(_encoder_kernel, batch=B, seq=S, nblocks=NBLOCKS)
    out = pl.pallas_call(
        kernel,
        out_shape=jax.ShapeDtypeStruct((R, EMB), jnp.float32),
        grid_spec=pltpu.PrefetchScalarGridSpec(
            num_scalar_prefetch=0,
            grid=(1,),                                  # single program, single TC
            in_specs=[_full_spec(a.shape) for a in args],
            out_specs=pl.BlockSpec((R, EMB), lambda i: (0, 0)),
        ),
        compiler_params=pltpu.CompilerParams(dimension_semantics=("arbitrary",)),
    )(*args)
    return out.reshape(B, S, EMB)


def init_params(key):
    def lin(k, fan_in, fan_out):
        kw, kb = jax.random.split(k)
        w = jax.random.normal(kw, (fan_in, fan_out), jnp.float32) * 0.05
        b = jax.random.normal(kb, (1, fan_out), jnp.float32) * 0.01
        return w, b

    keys = jax.random.split(key, 1 + NBLOCKS)
    emb_tbl = jax.random.normal(keys[0], (VOCAB, EMB), jnp.float32) * 0.1
    blocks = []
    for i in range(NBLOCKS):
        ks = jax.random.split(keys[1 + i], 6)
        wq, bq = lin(ks[0], EMB, HEAD * DK)
        wk, bk = lin(ks[1], EMB, HEAD * DK)
        wv, bv = lin(ks[2], EMB, HEAD * DV)
        wo, bo = lin(ks[3], HEAD * DV, EMB)
        w1, b1 = lin(ks[4], EMB, FF)
        w2, b2 = lin(ks[5], FF, EMB)
        blocks.append(dict(
            wq=wq, bq=bq, wk=wk, bk=bk, wv=wv, bv=bv, wo=wo, bo=bo,
            ln1_g=jnp.ones((1, EMB), jnp.float32), ln1_b=jnp.zeros((1, EMB), jnp.float32),
            w1=w1, b1=b1, w2=w2, b2=b2,
            ln2_g=jnp.ones((1, EMB), jnp.float32), ln2_b=jnp.zeros((1, EMB), jnp.float32),
        ))
    return dict(emb=emb_tbl, blocks=blocks)


# ----------------------------- pure-JAX reference ------------------------------
def _ref_block(x, mask, p):
    q = x @ p["wq"] + p["bq"]
    k = x @ p["wk"] + p["bk"]
    v = x @ p["wv"] + p["bv"]
    B, S, _ = x.shape
    q = q.reshape(B, S, HEAD, DK).transpose(0, 2, 1, 3)
    k = k.reshape(B, S, HEAD, DK).transpose(0, 2, 1, 3)
    v = v.reshape(B, S, HEAD, DV).transpose(0, 2, 1, 3)
    scores = jnp.einsum("bhqd,bhkd->bhqk", q, k) / math.sqrt(DK)
    scores = jnp.where(mask[:, None, :, :] > 0.5, -1e9, scores)
    attn = jax.nn.softmax(scores, axis=-1)
    z = jnp.einsum("bhqk,bhkd->bhqd", attn, v).transpose(0, 2, 1, 3).reshape(B, S, HEAD * DV)
    z = z @ p["wo"] + p["bo"]
    h1 = z + x
    h1 = (h1 - h1.mean(-1, keepdims=True)) / jnp.sqrt(h1.var(-1, keepdims=True) + LN_EPS)
    h1 = h1 * p["ln1_g"] + p["ln1_b"]
    f = jnp.maximum(h1 @ p["w1"] + p["b1"], 0.0) @ p["w2"] + p["b2"]
    h2 = f + h1
    h2 = (h2 - h2.mean(-1, keepdims=True)) / jnp.sqrt(h2.var(-1, keepdims=True) + LN_EPS)
    return h2 * p["ln2_g"] + p["ln2_b"]


def encoder_forward_ref(tokens, params):
    B, S = tokens.shape
    pad_mask = jnp.broadcast_to((tokens == PAD_IDX).astype(jnp.float32)[:, None, :], (B, S, S))
    x = jnp.take(params["emb"], tokens, axis=0) + sinusoidal_pe(S, EMB)[None]
    for blk in params["blocks"]:
        x = _ref_block(x, pad_mask, blk)
    return x


# ------------------------------------ main -------------------------------------
if __name__ == "__main__":
    key = jax.random.PRNGKey(0)
    k_tok, k_par = jax.random.split(key)
    params = init_params(k_par)

    tokens = jax.random.randint(k_tok, (BATCH, SEQ), 1, VOCAB, dtype=jnp.int32)
    # force some PAD positions to exercise the mask (no fully-PAD sequence)
    tokens = tokens.at[0, -2:].set(PAD_IDX).at[1, -3:].set(PAD_IDX)

    # weights are packed ONCE, outside the per-call path (perf-review item 7)
    slab_qkv, slab_ffn, slab_misc = pack_params(params, BATCH, SEQ)

    out = encoder_forward(tokens, slab_qkv, slab_ffn, slab_misc)
    out = jax.block_until_ready(out)

    ref = encoder_forward_ref(tokens, params)
    assert out.shape == (BATCH, SEQ, EMB)
    # Tolerance covers the EUP approximate reciprocal in the softmax normalization;
    # LayerNorm-scaled O(1) outputs make any structural bug far exceed 1e-2.
    assert jnp.allclose(out, ref, rtol=1e-2, atol=1e-2), "mismatch vs pure-JAX reference"

    print("KERNEL_OK")
</pallas_src>

<mosaic_0001>
module attributes {stable_mosaic.version = 11 : i64} {
  func.func @_encoder_kernel(%arg0: i32, %arg1: memref<16x1xi32, #tpu.memory_space<vmem>>, %arg2: memref<8x1x8xf32, #tpu.memory_space<vmem>>, %arg3: memref<80x192xf32, #tpu.memory_space<vmem>>, %arg4: memref<80x64xf32, #tpu.memory_space<vmem>>, %arg5: memref<320x32xf32, #tpu.memory_space<vmem>>, %arg6: memref<16x32xf32, #tpu.memory_space<vmem>>) attributes {dimension_semantics = [#tpu.dimension_semantics<arbitrary>], iteration_bounds = array<i64: 1>, scalar_prefetch = 0 : i64, scratch_operands = 0 : i64, tpu.core_type = #tpu.core_type<tc>, window_params = [{pipeline_mode = #tpu.pipeline_mode<synchronous>, transform_indices = @transform_0, window_bounds = array<i64: 16, 1>}, {pipeline_mode = #tpu.pipeline_mode<synchronous>, transform_indices = @transform_1, window_bounds = array<i64: 8, 1, 8>}, {pipeline_mode = #tpu.pipeline_mode<synchronous>, transform_indices = @transform_2, window_bounds = array<i64: 80, 192>}, {pipeline_mode = #tpu.pipeline_mode<synchronous>, transform_indices = @transform_3, window_bounds = array<i64: 80, 64>}, {pipeline_mode = #tpu.pipeline_mode<synchronous>, transform_indices = @transform_4, window_bounds = array<i64: 320, 32>}, {pipeline_mode = #tpu.pipeline_mode<synchronous>, transform_indices = @transform_5, window_bounds = array<i64: 16, 32>}]} {
    %0 = tpu.iota {dimensions = array<i32: 1>} : vector<16x32xi32>
    %c0 = arith.constant 0 : index
    %c0_0 = arith.constant 0 : index
    %1 = vector.load %arg1[%c0, %c0_0] : memref<16x1xi32, #tpu.memory_space<vmem>>, vector<16x1xi32>
    %2 = vector.broadcast %1 : vector<16x1xi32> to vector<16x32xi32>
    %3 = arith.cmpi eq, %2, %0 : vector<16x32xi32>
    %cst = arith.constant 1.000000e+00 : f32
    %cst_1 = arith.constant 0.000000e+00 : f32
    %4 = vector.broadcast %cst : f32 to vector<16x32xf32>
    %5 = vector.broadcast %cst_1 : f32 to vector<16x32xf32>
    %6 = arith.select %3, %4, %5 : vector<16x32xi1>, vector<16x32xf32>
    %c0_2 = arith.constant 0 : index
    %c0_3 = arith.constant 0 : index
    %7 = vector.load %arg5[%c0_2, %c0_3] : memref<320x32xf32, #tpu.memory_space<vmem>>, vector<32x32xf32>
    %c32 = arith.constant 32 : index
    %c0_4 = arith.constant 0 : index
    %8 = vector.load %arg5[%c32, %c0_4] : memref<320x32xf32, #tpu.memory_space<vmem>>, vector<16x32xf32>
    %cst_5 = arith.constant dense<0.000000e+00> : vector<16x32xf32>
    %9 = tpu.matmul %6, %7, %cst_5 {dimension_numbers = #tpu.dot_dimension_numbers<[1], [0], [0], [1], [0, 0, 1, 1], [], []>} : vector<16x32xf32>, vector<32x32xf32>, vector<16x32xf32> -> vector<16x32xf32>
    %10 = arith.addf %9, %8 : vector<16x32xf32>
    %c0_6 = arith.constant 0 : index
    %c0_7 = arith.constant 0 : index
    %c0_8 = arith.constant 0 : index
    %11 = vector.load %arg2[%c0_6, %c0_7, %c0_8] : memref<8x1x8xf32, #tpu.memory_space<vmem>>, vector<8x1x8xf32>
    %c0_9 = arith.constant 0 : index
    %c0_10 = arith.constant 0 : index
    %12 = vector.load %arg3[%c0_9, %c0_10] : memref<80x192xf32, #tpu.memory_space<vmem>>, vector<32x192xf32>
    %c32_11 = arith.constant 32 : index
    %c0_12 = arith.constant 0 : index
    %13 = vector.load %arg3[%c32_11, %c0_12] : memref<80x192xf32, #tpu.memory_space<vmem>>, vector<1x192xf32>
    %c0_13 = arith.constant 0 : index
    %c0_14 = arith.constant 0 : index
    %14 = vector.load %arg4[%c0_13, %c0_14] : memref<80x64xf32, #tpu.memory_space<vmem>>, vector<32x64xf32>
    %c32_15 = arith.constant 32 : index
    %c0_16 = arith.constant 0 : index
    %15 = vector.load %arg4[%c32_15, %c0_16] : memref<80x64xf32, #tpu.memory_space<vmem>>, vector<1x64xf32>
    %c48 = arith.constant 48 : index
    %c0_17 = arith.constant 0 : index
    %16 = vector.load %arg5[%c48, %c0_17] : memref<320x32xf32, #tpu.memory_space<vmem>>, vector<64x32xf32>
    %c112 = arith.constant 112 : index
    %c0_18 = arith.constant 0 : index
    %17 = vector.load %arg5[%c112, %c0_18] : memref<320x32xf32, #tpu.memory_space<vmem>>, vector<64x32xf32>
    %c176 = arith.constant 176 : index
    %c0_19 = arith.constant 0 : index
    %18 = vector.load %arg5[%c176, %c0_19] : memref<320x32xf32, #tpu.memory_space<vmem>>, vector<1x32xf32>
    %c177 = arith.constant 177 : index
    %c0_20 = arith.constant 0 : index
    %19 = vector.load %arg5[%c177, %c0_20] : memref<320x32xf32, #tpu.memory_space<vmem>>, vector<1x32xf32>
    %c178 = arith.constant 178 : index
    %c0_21 = arith.constant 0 : index
    %20 = vector.load %arg5[%c178, %c0_21] : memref<320x32xf32, #tpu.memory_space<vmem>>, vector<1x32xf32>
    %c179 = arith.constant 179 : index
    %c0_22 = arith.constant 0 : index
    %21 = vector.load %arg5[%c179, %c0_22] : memref<320x32xf32, #tpu.memory_space<vmem>>, vector<1x32xf32>
    %c180 = arith.constant 180 : index
    %c0_23 = arith.constant 0 : index
    %22 = vector.load %arg5[%c180, %c0_23] : memref<320x32xf32, #tpu.memory_space<vmem>>, vector<1x32xf32>
    %c181 = arith.constant 181 : index
    %c0_24 = arith.constant 0 : index
    %23 = vector.load %arg5[%c181, %c0_24] : memref<320x32xf32, #tpu.memory_space<vmem>>, vector<1x32xf32>
    %cst_25 = arith.constant dense<0.000000e+00> : vector<16x192xf32>
    %24 = tpu.matmul %10, %12, %cst_25 {dimension_numbers = #tpu.dot_dimension_numbers<[1], [0], [0], [1], [0, 0, 1, 1], [], []>} : vector<16x32xf32>, vector<32x192xf32>, vector<16x192xf32> -> vector<16x192xf32>
    %25 = vector.broadcast %13 : vector<1x192xf32> to vector<16x192xf32>
    %26 = arith.addf %24, %25 : vector<16x192xf32>
    %27 = vector.extract_strided_slice %26 {offsets = [0, 0], sizes = [8, 16], strides = [1, 1]} : vector<16x192xf32> to vector<8x16xf32>
    %28 = vector.extract_strided_slice %26 {offsets = [0, 16], sizes = [8, 16], strides = [1, 1]} : vector<16x192xf32> to vector<8x16xf32>
    %29 = vector.extract_strided_slice %26 {offsets = [0, 32], sizes = [8, 16], strides = [1, 1]} : vector<16x192xf32> to vector<8x16xf32>
    %30 = vector.extract_strided_slice %26 {offsets = [0, 48], sizes = [8, 16], strides = [1, 1]} : vector<16x192xf32> to vector<8x16xf32>
    %31 = vector.extract_strided_slice %26 {offsets = [8, 0], sizes = [8, 16], strides = [1, 1]} : vector<16x192xf32> to vector<8x16xf32>
    %32 = vector.extract_strided_slice %26 {offsets = [8, 16], sizes = [8, 16], strides = [1, 1]} : vector<16x192xf32> to vector<8x16xf32>
    %33 = vector.extract_strided_slice %26 {offsets = [8, 32], sizes = [8, 16], strides = [1, 1]} : vector<16x192xf32> to vector<8x16xf32>
    %34 = vector.extract_strided_slice %26 {offsets = [8, 48], sizes = [8, 16], strides = [1, 1]} : vector<16x192xf32> to vector<8x16xf32>
    %35 = vector.shape_cast %27 : vector<8x16xf32> to vector<1x8x16xf32>
    %36 = vector.shape_cast %28 : vector<8x16xf32> to vector<1x8x16xf32>
    %37 = vector.shape_cast %29 : vector<8x16xf32> to vector<1x8x16xf32>
    %38 = vector.shape_cast %30 : vector<8x16xf32> to vector<1x8x16xf32>
    %39 = vector.shape_cast %31 : vector<8x16xf32> to vector<1x8x16xf32>
    %40 = vector.shape_cast %32 : vector<8x16xf32> to vector<1x8x16xf32>
    %41 = vector.shape_cast %33 : vector<8x16xf32> to vector<1x8x16xf32>
    %42 = vector.shape_cast %34 : vector<8x16xf32> to vector<1x8x16xf32>
    %43 = tpu.concatenate %35, %36, %37, %38, %39, %40, %41, %42 in 0 : vector<1x8x16xf32>, vector<1x8x16xf32>, vector<1x8x16xf32>, vector<1x8x16xf32>, vector<1x8x16xf32>, vector<1x8x16xf32>, vector<1x8x16xf32>, vector<1x8x16xf32> -> vector<8x8x16xf32>
    %44 = vector.extract_strided_slice %26 {offsets = [0, 64], sizes = [8, 16], strides = [1, 1]} : vector<16x192xf32> to vector<8x16xf32>
    %45 = vector.extract_strided_slice %26 {offsets = [0, 80], sizes = [8, 16], strides = [1, 1]} : vector<16x192xf32> to vector<8x16xf32>
    %46 = vector.extract_strided_slice %26 {offsets = [0, 96], sizes = [8, 16], strides = [1, 1]} : vector<16x192xf32> to vector<8x16xf32>
    %47 = vector.extract_strided_slice %26 {offsets = [0, 112], sizes = [8, 16], strides = [1, 1]} : vector<16x192xf32> to vector<8x16xf32>
    %48 = vector.extract_strided_slice %26 {offsets = [8, 64], sizes = [8, 16], strides = [1, 1]} : vector<16x192xf32> to vector<8x16xf32>
    %49 = vector.extract_strided_slice %26 {offsets = [8, 80], sizes = [8, 16], strides = [1, 1]} : vector<16x192xf32> to vector<8x16xf32>
    %50 = vector.extract_strided_slice %26 {offsets = [8, 96], sizes = [8, 16], strides = [1, 1]} : vector<16x192xf32> to vector<8x16xf32>
    %51 = vector.extract_strided_slice %26 {offsets = [8, 112], sizes = [8, 16], strides = [1, 1]} : vector<16x192xf32> to vector<8x16xf32>
    %52 = vector.shape_cast %44 : vector<8x16xf32> to vector<1x8x16xf32>
    %53 = vector.shape_cast %45 : vector<8x16xf32> to vector<1x8x16xf32>
    %54 = vector.shape_cast %46 : vector<8x16xf32> to vector<1x8x16xf32>
    %55 = vector.shape_cast %47 : vector<8x16xf32> to vector<1x8x16xf32>
    %56 = vector.shape_cast %48 : vector<8x16xf32> to vector<1x8x16xf32>
    %57 = vector.shape_cast %49 : vector<8x16xf32> to vector<1x8x16xf32>
    %58 = vector.shape_cast %50 : vector<8x16xf32> to vector<1x8x16xf32>
    %59 = vector.shape_cast %51 : vector<8x16xf32> to vector<1x8x16xf32>
    %60 = tpu.concatenate %52, %53, %54, %55, %56, %57, %58, %59 in 0 : vector<1x8x16xf32>, vector<1x8x16xf32>, vector<1x8x16xf32>, vector<1x8x16xf32>, vector<1x8x16xf32>, vector<1x8x16xf32>, vector<1x8x16xf32>, vector<1x8x16xf32> -> vector<8x8x16xf32>
    %61 = vector.extract_strided_slice %26 {offsets = [0, 128], sizes = [8, 16], strides = [1, 1]} : vector<16x192xf32> to vector<8x16xf32>
    %62 = vector.extract_strided_slice %26 {offsets = [0, 144], sizes = [8, 16], strides = [1, 1]} : vector<16x192xf32> to vector<8x16xf32>
    %63 = vector.extract_strided_slice %26 {offsets = [0, 160], sizes = [8, 16], strides = [1, 1]} : vector<16x192xf32> to vector<8x16xf32>
    %64 = vector.extract_strided_slice %26 {offsets = [0, 176], sizes = [8, 16], strides = [1, 1]} : vector<16x192xf32> to vector<8x16xf32>
    %65 = vector.extract_strided_slice %26 {offsets = [8, 128], sizes = [8, 16], strides = [1, 1]} : vector<16x192xf32> to vector<8x16xf32>
    %66 = vector.extract_strided_slice %26 {offsets = [8, 144], sizes = [8, 16], strides = [1, 1]} : vector<16x192xf32> to vector<8x16xf32>
    %67 = vector.extract_strided_slice %26 {offsets = [8, 160], sizes = [8, 16], strides = [1, 1]} : vector<16x192xf32> to vector<8x16xf32>
    %68 = vector.extract_strided_slice %26 {offsets = [8, 176], sizes = [8, 16], strides = [1, 1]} : vector<16x192xf32> to vector<8x16xf32>
    %69 = vector.shape_cast %61 : vector<8x16xf32> to vector<1x8x16xf32>
    %70 = vector.shape_cast %62 : vector<8x16xf32> to vector<1x8x16xf32>
    %71 = vector.shape_cast %63 : vector<8x16xf32> to vector<1x8x16xf32>
    %72 = vector.shape_cast %64 : vector<8x16xf32> to vector<1x8x16xf32>
    %73 = vector.shape_cast %65 : vector<8x16xf32> to vector<1x8x16xf32>
    %74 = vector.shape_cast %66 : vector<8x16xf32> to vector<1x8x16xf32>
    %75 = vector.shape_cast %67 : vector<8x16xf32> to vector<1x8x16xf32>
    %76 = vector.shape_cast %68 : vector<8x16xf32> to vector<1x8x16xf32>
    %77 = tpu.concatenate %69, %70, %71, %72, %73, %74, %75, %76 in 0 : vector<1x8x16xf32>, vector<1x8x16xf32>, vector<1x8x16xf32>, vector<1x8x16xf32>, vector<1x8x16xf32>, vector<1x8x16xf32>, vector<1x8x16xf32>, vector<1x8x16xf32> -> vector<8x8x16xf32>
    "tpu.trace_start"() <{level = 10 : i32, message = "zqd,zkd->zqk"}> : () -> ()
    %cst_26 = arith.constant dense<0.000000e+00> : vector<8x8x8xf32>
    %78 = tpu.matmul %43, %60, %cst_26 {dimension_numbers = #tpu.dot_dimension_numbers<[2], [2], [1], [1], [0, 0, 0, 1, 1, 1], [0], [0]>} : vector<8x8x16xf32>, vector<8x8x16xf32>, vector<8x8x8xf32> -> vector<8x8x8xf32>
    "tpu.trace_stop"() : () -> ()
    %cst_27 = arith.constant 2.500000e-01 : f32
    %79 = vector.broadcast %cst_27 : f32 to vector<8x8x8xf32>
    %80 = arith.mulf %78, %79 : vector<8x8x8xf32>
    %81 = vector.broadcast %11 : vector<8x1x8xf32> to vector<8x8x8xf32>
    %82 = arith.addf %80, %81 : vector<8x8x8xf32>
    %cst_28 = arith.constant dense<0xFF800000> : vector<8x8xf32>
    %83 = vector.multi_reduction <maximumf>, %82, %cst_28 [2] : vector<8x8x8xf32> to vector<8x8xf32>
    %84 = vector.shape_cast %83 : vector<8x8xf32> to vector<8x8x1xf32>
    %85 = vector.broadcast %84 : vector<8x8x1xf32> to vector<8x8x8xf32>
    %86 = arith.subf %82, %85 : vector<8x8x8xf32>
    %87 = math.exp %86 : vector<8x8x8xf32>
    %cst_29 = arith.constant dense<0.000000e+00> : vector<8x8xf32>
    %88 = vector.multi_reduction <add>, %87, %cst_29 [2] : vector<8x8x8xf32> to vector<8x8xf32>
    %89 = vector.shape_cast %88 : vector<8x8xf32> to vector<8x8x1xf32>
    %90 = tpu.reciprocal %89 {approx = true} : vector<8x8x1xf32> -> vector<8x8x1xf32>
    %91 = vector.broadcast %90 : vector<8x8x1xf32> to vector<8x8x8xf32>
    %92 = arith.mulf %87, %91 : vector<8x8x8xf32>
    "tpu.trace_start"() <{level = 10 : i32, message = "zqk,zkd->zqd"}> : () -> ()
    %cst_30 = arith.constant dense<0.000000e+00> : vector<8x8x16xf32>
    %93 = tpu.matmul %92, %77, %cst_30 {dimension_numbers = #tpu.dot_dimension_numbers<[2], [1], [1], [2], [0, 0, 0, 1, 1, 2], [0], [0]>} : vector<8x8x8xf32>, vector<8x8x16xf32>, vector<8x8x16xf32> -> vector<8x8x16xf32>
    "tpu.trace_stop"() : () -> ()
    %94 = vector.extract_strided_slice %93 {offsets = [0, 0, 0], sizes = [1, 8, 16], strides = [1, 1, 1]} : vector<8x8x16xf32> to vector<1x8x16xf32>
    %95 = vector.shape_cast %94 : vector<1x8x16xf32> to vector<8x16xf32>
    %96 = vector.extract_strided_slice %93 {offsets = [1, 0, 0], sizes = [1, 8, 16], strides = [1, 1, 1]} : vector<8x8x16xf32> to vector<1x8x16xf32>
    %97 = vector.shape_cast %96 : vector<1x8x16xf32> to vector<8x16xf32>
    %98 = vector.extract_strided_slice %93 {offsets = [2, 0, 0], sizes = [1, 8, 16], strides = [1, 1, 1]} : vector<8x8x16xf32> to vector<1x8x16xf32>
    %99 = vector.shape_cast %98 : vector<1x8x16xf32> to vector<8x16xf32>
    %100 = vector.extract_strided_slice %93 {offsets = [3, 0, 0], sizes = [1, 8, 16], strides = [1, 1, 1]} : vector<8x8x16xf32> to vector<1x8x16xf32>
    %101 = vector.shape_cast %100 : vector<1x8x16xf32> to vector<8x16xf32>
    %102 = tpu.concatenate %95, %97, %99, %101 in 1 : vector<8x16xf32>, vector<8x16xf32>, vector<8x16xf32>, vector<8x16xf32> -> vector<8x64xf32>
    %103 = vector.extract_strided_slice %93 {offsets = [4, 0, 0], sizes = [1, 8, 16], strides = [1, 1, 1]} : vector<8x8x16xf32> to vector<1x8x16xf32>
    %104 = vector.shape_cast %103 : vector<1x8x16xf32> to vector<8x16xf32>
    %105 = vector.extract_strided_slice %93 {offsets = [5, 0, 0], sizes = [1, 8, 16], strides = [1, 1, 1]} : vector<8x8x16xf32> to vector<1x8x16xf32>
    %106 = vector.shape_cast %105 : vector<1x8x16xf32> to vector<8x16xf32>
    %107 = vector.extract_strided_slice %93 {offsets = [6, 0, 0], sizes = [1, 8, 16], strides = [1, 1, 1]} : vector<8x8x16xf32> to vector<1x8x16xf32>
    %108 = vector.shape_cast %107 : vector<1x8x16xf32> to vector<8x16xf32>
    %109 = vector.extract_strided_slice %93 {offsets = [7, 0, 0], sizes = [1, 8, 16], strides = [1, 1, 1]} : vector<8x8x16xf32> to vector<1x8x16xf32>
    %110 = vector.shape_cast %109 : vector<1x8x16xf32> to vector<8x16xf32>
    %111 = tpu.concatenate %104, %106, %108, %110 in 1 : vector<8x16xf32>, vector<8x16xf32>, vector<8x16xf32>, vector<8x16xf32> -> vector<8x64xf32>
    %112 = tpu.concatenate %102, %111 in 0 : vector<8x64xf32>, vector<8x64xf32> -> vector<16x64xf32>
    %cst_31 = arith.constant dense<0.000000e+00> : vector<16x32xf32>
    %113 = tpu.matmul %112, %16, %cst_31 {dimension_numbers = #tpu.dot_dimension_numbers<[1], [0], [0], [1], [0, 0, 1, 1], [], []>} : vector<16x64xf32>, vector<64x32xf32>, vector<16x32xf32> -> vector<16x32xf32>
    %114 = vector.broadcast %18 : vector<1x32xf32> to vector<16x32xf32>
    %115 = arith.addf %113, %114 : vector<16x32xf32>
    %116 = arith.addf %115, %10 : vector<16x32xf32>
    %cst_32 = arith.constant dense<0.000000e+00> : vector<16xf32>
    %117 = vector.multi_reduction <add>, %116, %cst_32 [1] : vector<16x32xf32> to vector<16xf32>
    %118 = vector.shape_cast %117 : vector<16xf32> to vector<16x1xf32>
    %cst_33 = arith.constant 3.200000e+01 : f32
    %119 = vector.broadcast %cst_33 : f32 to vector<16x1xf32>
    %120 = arith.divf %118, %119 : vector<16x1xf32>
    %121 = vector.broadcast %120 : vector<16x1xf32> to vector<16x32xf32>
    %122 = arith.subf %116, %121 : vector<16x32xf32>
    %123 = arith.mulf %122, %122 : vector<16x32xf32>
    %cst_34 = arith.constant dense<0.000000e+00> : vector<16xf32>
    %124 = vector.multi_reduction <add>, %123, %cst_34 [1] : vector<16x32xf32> to vector<16xf32>
    %125 = vector.shape_cast %124 : vector<16xf32> to vector<16x1xf32>
    %cst_35 = arith.constant 3.200000e+01 : f32
    %126 = vector.broadcast %cst_35 : f32 to vector<16x1xf32>
    %127 = arith.divf %125, %126 : vector<16x1xf32>
    %128 = vector.broadcast %120 : vector<16x1xf32> to vector<16x32xf32>
    %129 = arith.subf %116, %128 : vector<16x32xf32>
    %cst_36 = arith.constant 9.99999974E-6 : f32
    %130 = vector.broadcast %cst_36 : f32 to vector<16x1xf32>
    %131 = arith.addf %127, %130 : vector<16x1xf32>
    %132 = math.rsqrt %131 : vector<16x1xf32>
    %133 = vector.broadcast %132 : vector<16x1xf32> to vector<16x32xf32>
    %134 = arith.mulf %129, %133 : vector<16x32xf32>
    %135 = vector.broadcast %19 : vector<1x32xf32> to vector<16x32xf32>
    %136 = arith.mulf %134, %135 : vector<16x32xf32>
    %137 = vector.broadcast %20 : vector<1x32xf32> to vector<16x32xf32>
    %138 = arith.addf %136, %137 : vector<16x32xf32>
    %cst_37 = arith.constant dense<0.000000e+00> : vector<16x64xf32>
    %139 = tpu.matmul %138, %14, %cst_37 {dimension_numbers = #tpu.dot_dimension_numbers<[1], [0], [0], [1], [0, 0, 1, 1], [], []>} : vector<16x32xf32>, vector<32x64xf32>, vector<16x64xf32> -> vector<16x64xf32>
    %140 = vector.broadcast %15 : vector<1x64xf32> to vector<16x64xf32>
    %141 = arith.addf %139, %140 : vector<16x64xf32>
    %cst_38 = arith.constant 0.000000e+00 : f32
    %142 = vector.broadcast %cst_38 : f32 to vector<16x64xf32>
    %143 = arith.maximumf %141, %142 : vector<16x64xf32>
    %cst_39 = arith.constant dense<0.000000e+00> : vector<16x32xf32>
    %144 = tpu.matmul %143, %17, %cst_39 {dimension_numbers = #tpu.dot_dimension_numbers<[1], [0], [0], [1], [0, 0, 1, 1], [], []>} : vector<16x64xf32>, vector<64x32xf32>, vector<16x32xf32> -> vector<16x32xf32>
    %145 = vector.broadcast %21 : vector<1x32xf32> to vector<16x32xf32>
    %146 = arith.addf %144, %145 : vector<16x32xf32>
    %147 = arith.addf %146, %138 : vector<16x32xf32>
    %cst_40 = arith.constant dense<0.000000e+00> : vector<16xf32>
    %148 = vector.multi_reduction <add>, %147, %cst_40 [1] : vector<16x32xf32> to vector<16xf32>
    %149 = vector.shape_cast %148 : vector<16xf32> to vector<16x1xf32>
    %cst_41 = arith.constant 3.200000e+01 : f32
    %150 = vector.broadcast %cst_41 : f32 to vector<16x1xf32>
    %151 = arith.divf %149, %150 : vector<16x1xf32>
    %152 = vector.broadcast %151 : vector<16x1xf32> to vector<16x32xf32>
    %153 = arith.subf %147, %152 : vector<16x32xf32>
    %154 = arith.mulf %153, %153 : vector<16x32xf32>
    %cst_42 = arith.constant dense<0.000000e+00> : vector<16xf32>
    %155 = vector.multi_reduction <add>, %154, %cst_42 [1] : vector<16x32xf32> to vector<16xf32>
    %156 = vector.shape_cast %155 : vector<16xf32> to vector<16x1xf32>
    %cst_43 = arith.constant 3.200000e+01 : f32
    %157 = vector.broadcast %cst_43 : f32 to vector<16x1xf32>
    %158 = arith.divf %156, %157 : vector<16x1xf32>
    %159 = vector.broadcast %151 : vector<16x1xf32> to vector<16x32xf32>
    %160 = arith.subf %147, %159 : vector<16x32xf32>
    %cst_44 = arith.constant 9.99999974E-6 : f32
    %161 = vector.broadcast %cst_44 : f32 to vector<16x1xf32>
    %162 = arith.addf %158, %161 : vector<16x1xf32>
    %163 = math.rsqrt %162 : vector<16x1xf32>
    %164 = vector.broadcast %163 : vector<16x1xf32> to vector<16x32xf32>
    %165 = arith.mulf %160, %164 : vector<16x32xf32>
    %166 = vector.broadcast %22 : vector<1x32xf32> to vector<16x32xf32>
    %167 = arith.mulf %165, %166 : vector<16x32xf32>
    %168 = vector.broadcast %23 : vector<1x32xf32> to vector<16x32xf32>
    %169 = arith.addf %167, %168 : vector<16x32xf32>
    %c40 = arith.constant 40 : index
    %c0_45 = arith.constant 0 : index
    %170 = vector.load %arg3[%c40, %c0_45] : memref<80x192xf32, #tpu.memory_space<vmem>>, vector<32x192xf32>
    %c72 = arith.constant 72 : index
    %c0_46 = arith.constant 0 : index
    %171 = vector.load %arg3[%c72, %c0_46] : memref<80x192xf32, #tpu.memory_space<vmem>>, vector<1x192xf32>
    %c40_47 = arith.constant 40 : index
    %c0_48 = arith.constant 0 : index
    %172 = vector.load %arg4[%c40_47, %c0_48] : memref<80x64xf32, #tpu.memory_space<vmem>>, vector<32x64xf32>
    %c72_49 = arith.constant 72 : index
    %c0_50 = arith.constant 0 : index
    %173 = vector.load %arg4[%c72_49, %c0_50] : memref<80x64xf32, #tpu.memory_space<vmem>>, vector<1x64xf32>
    %c184 = arith.constant 184 : index
    %c0_51 = arith.constant 0 : index
    %174 = vector.load %arg5[%c184, %c0_51] : memref<320x32xf32, #tpu.memory_space<vmem>>, vector<64x32xf32>
    %c248 = arith.constant 248 : index
    %c0_52 = arith.constant 0 : index
    %175 = vector.load %arg5[%c248, %c0_52] : memref<320x32xf32, #tpu.memory_space<vmem>>, vector<64x32xf32>
    %c312 = arith.constant 312 : index
    %c0_53 = arith.constant 0 : index
    %176 = vector.load %arg5[%c312, %c0_53] : memref<320x32xf32, #tpu.memory_space<vmem>>, vector<1x32xf32>
    %c313 = arith.constant 313 : index
    %c0_54 = arith.constant 0 : index
    %177 = vector.load %arg5[%c313, %c0_54] : memref<320x32xf32, #tpu.memory_space<vmem>>, vector<1x32xf32>
    %c314 = arith.constant 314 : index
    %c0_55 = arith.constant 0 : index
    %178 = vector.load %arg5[%c314, %c0_55] : memref<320x32xf32, #tpu.memory_space<vmem>>, vector<1x32xf32>
    %c315 = arith.constant 315 : index
    %c0_56 = arith.constant 0 : index
    %179 = vector.load %arg5[%c315, %c0_56] : memref<320x32xf32, #tpu.memory_space<vmem>>, vector<1x32xf32>
    %c316 = arith.constant 316 : index
    %c0_57 = arith.constant 0 : index
    %180 = vector.load %arg5[%c316, %c0_57] : memref<320x32xf32, #tpu.memory_space<vmem>>, vector<1x32xf32>
    %c317 = arith.constant 317 : index
    %c0_58 = arith.constant 0 : index
    %181 = vector.load %arg5[%c317, %c0_58] : memref<320x32xf32, #tpu.memory_space<vmem>>, vector<1x32xf32>
    %cst_59 = arith.constant dense<0.000000e+00> : vector<16x192xf32>
    %182 = tpu.matmul %169, %170, %cst_59 {dimension_numbers = #tpu.dot_dimension_numbers<[1], [0], [0], [1], [0, 0, 1, 1], [], []>} : vector<16x32xf32>, vector<32x192xf32>, vector<16x192xf32> -> vector<16x192xf32>
    %183 = vector.broadcast %171 : vector<1x192xf32> to vector<16x192xf32>
    %184 = arith.addf %182, %183 : vector<16x192xf32>
    %185 = vector.extract_strided_slice %184 {offsets = [0, 0], sizes = [8, 16], strides = [1, 1]} : vector<16x192xf32> to vector<8x16xf32>
    %186 = vector.extract_strided_slice %184 {offsets = [0, 16], sizes = [8, 16], strides = [1, 1]} : vector<16x192xf32> to vector<8x16xf32>
    %187 = vector.extract_strided_slice %184 {offsets = [0, 32], sizes = [8, 16], strides = [1, 1]} : vector<16x192xf32> to vector<8x16xf32>
    %188 = vector.extract_strided_slice %184 {offsets = [0, 48], sizes = [8, 16], strides = [1, 1]} : vector<16x192xf32> to vector<8x16xf32>
    %189 = vector.extract_strided_slice %184 {offsets = [8, 0], sizes = [8, 16], strides = [1, 1]} : vector<16x192xf32> to vector<8x16xf32>
    %190 = vector.extract_strided_slice %184 {offsets = [8, 16], sizes = [8, 16], strides = [1, 1]} : vector<16x192xf32> to vector<8x16xf32>
    %191 = vector.extract_strided_slice %184 {offsets = [8, 32], sizes = [8, 16], strides = [1, 1]} : vector<16x192xf32> to vector<8x16xf32>
    %192 = vector.extract_strided_slice %184 {offsets = [8, 48], sizes = [8, 16], strides = [1, 1]} : vector<16x192xf32> to vector<8x16xf32>
    %193 = vector.shape_cast %185 : vector<8x16xf32> to vector<1x8x16xf32>
    %194 = vector.shape_cast %186 : vector<8x16xf32> to vector<1x8x16xf32>
    %195 = vector.shape_cast %187 : vector<8x16xf32> to vector<1x8x16xf32>
    %196 = vector.shape_cast %188 : vector<8x16xf32> to vector<1x8x16xf32>
    %197 = vector.shape_cast %189 : vector<8x16xf32> to vector<1x8x16xf32>
    %198 = vector.shape_cast %190 : vector<8x16xf32> to vector<1x8x16xf32>
    %199 = vector.shape_cast %191 : vector<8x16xf32> to vector<1x8x16xf32>
    %200 = vector.shape_cast %192 : vector<8x16xf32> to vector<1x8x16xf32>
    %201 = tpu.concatenate %193, %194, %195, %196, %197, %198, %199, %200 in 0 : vector<1x8x16xf32>, vector<1x8x16xf32>, vector<1x8x16xf32>, vector<1x8x16xf32>, vector<1x8x16xf32>, vector<1x8x16xf32>, vector<1x8x16xf32>, vector<1x8x16xf32> -> vector<8x8x16xf32>
    %202 = vector.extract_strided_slice %184 {offsets = [0, 64], sizes = [8, 16], strides = [1, 1]} : vector<16x192xf32> to vector<8x16xf32>
    %203 = vector.extract_strided_slice %184 {offsets = [0, 80], sizes = [8, 16], strides = [1, 1]} : vector<16x192xf32> to vector<8x16xf32>
    %204 = vector.extract_strided_slice %184 {offsets = [0, 96], sizes = [8, 16], strides = [1, 1]} : vector<16x192xf32> to vector<8x16xf32>
    %205 = vector.extract_strided_slice %184 {offsets = [0, 112], sizes = [8, 16], strides = [1, 1]} : vector<16x192xf32> to vector<8x16xf32>
    %206 = vector.extract_strided_slice %184 {offsets = [8, 64], sizes = [8, 16], strides = [1, 1]} : vector<16x192xf32> to vector<8x16xf32>
    %207 = vector.extract_strided_slice %184 {offsets = [8, 80], sizes = [8, 16], strides = [1, 1]} : vector<16x192xf32> to vector<8x16xf32>
    %208 = vector.extract_strided_slice %184 {offsets = [8, 96], sizes = [8, 16], strides = [1, 1]} : vector<16x192xf32> to vector<8x16xf32>
    %209 = vector.extract_strided_slice %184 {offsets = [8, 112], sizes = [8, 16], strides = [1, 1]} : vector<16x192xf32> to vector<8x16xf32>
    %210 = vector.shape_cast %202 : vector<8x16xf32> to vector<1x8x16xf32>
    %211 = vector.shape_cast %203 : vector<8x16xf32> to vector<1x8x16xf32>
    %212 = vector.shape_cast %204 : vector<8x16xf32> to vector<1x8x16xf32>
    %213 = vector.shape_cast %205 : vector<8x16xf32> to vector<1x8x16xf32>
    %214 = vector.shape_cast %206 : vector<8x16xf32> to vector<1x8x16xf32>
    %215 = vector.shape_cast %207 : vector<8x16xf32> to vector<1x8x16xf32>
    %216 = vector.shape_cast %208 : vector<8x16xf32> to vector<1x8x16xf32>
    %217 = vector.shape_cast %209 : vector<8x16xf32> to vector<1x8x16xf32>
    %218 = tpu.concatenate %210, %211, %212, %213, %214, %215, %216, %217 in 0 : vector<1x8x16xf32>, vector<1x8x16xf32>, vector<1x8x16xf32>, vector<1x8x16xf32>, vector<1x8x16xf32>, vector<1x8x16xf32>, vector<1x8x16xf32>, vector<1x8x16xf32> -> vector<8x8x16xf32>
    %219 = vector.extract_strided_slice %184 {offsets = [0, 128], sizes = [8, 16], strides = [1, 1]} : vector<16x192xf32> to vector<8x16xf32>
    %220 = vector.extract_strided_slice %184 {offsets = [0, 144], sizes = [8, 16], strides = [1, 1]} : vector<16x192xf32> to vector<8x16xf32>
    %221 = vector.extract_strided_slice %184 {offsets = [0, 160], sizes = [8, 16], strides = [1, 1]} : vector<16x192xf32> to vector<8x16xf32>
    %222 = vector.extract_strided_slice %184 {offsets = [0, 176], sizes = [8, 16], strides = [1, 1]} : vector<16x192xf32> to vector<8x16xf32>
    %223 = vector.extract_strided_slice %184 {offsets = [8, 128], sizes = [8, 16], strides = [1, 1]} : vector<16x192xf32> to vector<8x16xf32>
    %224 = vector.extract_strided_slice %184 {offsets = [8, 144], sizes = [8, 16], strides = [1, 1]} : vector<16x192xf32> to vector<8x16xf32>
    %225 = vector.extract_strided_slice %184 {offsets = [8, 160], sizes = [8, 16], strides = [1, 1]} : vector<16x192xf32> to vector<8x16xf32>
    %226 = vector.extract_strided_slice %184 {offsets = [8, 176], sizes = [8, 16], strides = [1, 1]} : vector<16x192xf32> to vector<8x16xf32>
    %227 = vector.shape_cast %219 : vector<8x16xf32> to vector<1x8x16xf32>
    %228 = vector.shape_cast %220 : vector<8x16xf32> to vector<1x8x16xf32>
    %229 = vector.shape_cast %221 : vector<8x16xf32> to vector<1x8x16xf32>
    %230 = vector.shape_cast %222 : vector<8x16xf32> to vector<1x8x16xf32>
    %231 = vector.shape_cast %223 : vector<8x16xf32> to vector<1x8x16xf32>
    %232 = vector.shape_cast %224 : vector<8x16xf32> to vector<1x8x16xf32>
    %233 = vector.shape_cast %225 : vector<8x16xf32> to vector<1x8x16xf32>
    %234 = vector.shape_cast %226 : vector<8x16xf32> to vector<1x8x16xf32>
    %235 = tpu.concatenate %227, %228, %229, %230, %231, %232, %233, %234 in 0 : vector<1x8x16xf32>, vector<1x8x16xf32>, vector<1x8x16xf32>, vector<1x8x16xf32>, vector<1x8x16xf32>, vector<1x8x16xf32>, vector<1x8x16xf32>, vector<1x8x16xf32> -> vector<8x8x16xf32>
    "tpu.trace_start"() <{level = 10 : i32, message = "zqd,zkd->zqk"}> : () -> ()
    %cst_60 = arith.constant dense<0.000000e+00> : vector<8x8x8xf32>
    %236 = tpu.matmul %201, %218, %cst_60 {dimension_numbers = #tpu.dot_dimension_numbers<[2], [2], [1], [1], [0, 0, 0, 1, 1, 1], [0], [0]>} : vector<8x8x16xf32>, vector<8x8x16xf32>, vector<8x8x8xf32> -> vector<8x8x8xf32>
    "tpu.trace_stop"() : () -> ()
    %cst_61 = arith.constant 2.500000e-01 : f32
    %237 = vector.broadcast %cst_61 : f32 to vector<8x8x8xf32>
    %238 = arith.mulf %236, %237 : vector<8x8x8xf32>
    %239 = vector.broadcast %11 : vector<8x1x8xf32> to vector<8x8x8xf32>
    %240 = arith.addf %238, %239 : vector<8x8x8xf32>
    %cst_62 = arith.constant dense<0xFF800000> : vector<8x8xf32>
    %241 = vector.multi_reduction <maximumf>, %240, %cst_62 [2] : vector<8x8x8xf32> to vector<8x8xf32>
    %242 = vector.shape_cast %241 : vector<8x8xf32> to vector<8x8x1xf32>
    %243 = vector.broadcast %242 : vector<8x8x1xf32> to vector<8x8x8xf32>
    %244 = arith.subf %240, %243 : vector<8x8x8xf32>
    %245 = math.exp %244 : vector<8x8x8xf32>
    %cst_63 = arith.constant dense<0.000000e+00> : vector<8x8xf32>
    %246 = vector.multi_reduction <add>, %245, %cst_63 [2] : vector<8x8x8xf32> to vector<8x8xf32>
    %247 = vector.shape_cast %246 : vector<8x8xf32> to vector<8x8x1xf32>
    %248 = tpu.reciprocal %247 {approx = true} : vector<8x8x1xf32> -> vector<8x8x1xf32>
    %249 = vector.broadcast %248 : vector<8x8x1xf32> to vector<8x8x8xf32>
    %250 = arith.mulf %245, %249 : vector<8x8x8xf32>
    "tpu.trace_start"() <{level = 10 : i32, message = "zqk,zkd->zqd"}> : () -> ()
    %cst_64 = arith.constant dense<0.000000e+00> : vector<8x8x16xf32>
    %251 = tpu.matmul %250, %235, %cst_64 {dimension_numbers = #tpu.dot_dimension_numbers<[2], [1], [1], [2], [0, 0, 0, 1, 1, 2], [0], [0]>} : vector<8x8x8xf32>, vector<8x8x16xf32>, vector<8x8x16xf32> -> vector<8x8x16xf32>
    "tpu.trace_stop"() : () -> ()
    %252 = vector.extract_strided_slice %251 {offsets = [0, 0, 0], sizes = [1, 8, 16], strides = [1, 1, 1]} : vector<8x8x16xf32> to vector<1x8x16xf32>
    %253 = vector.shape_cast %252 : vector<1x8x16xf32> to vector<8x16xf32>
    %254 = vector.extract_strided_slice %251 {offsets = [1, 0, 0], sizes = [1, 8, 16], strides = [1, 1, 1]} : vector<8x8x16xf32> to vector<1x8x16xf32>
    %255 = vector.shape_cast %254 : vector<1x8x16xf32> to vector<8x16xf32>
    %256 = vector.extract_strided_slice %251 {offsets = [2, 0, 0], sizes = [1, 8, 16], strides = [1, 1, 1]} : vector<8x8x16xf32> to vector<1x8x16xf32>
    %257 = vector.shape_cast %256 : vector<1x8x16xf32> to vector<8x16xf32>
    %258 = vector.extract_strided_slice %251 {offsets = [3, 0, 0], sizes = [1, 8, 16], strides = [1, 1, 1]} : vector<8x8x16xf32> to vector<1x8x16xf32>
    %259 = vector.shape_cast %258 : vector<1x8x16xf32> to vector<8x16xf32>
    %260 = tpu.concatenate %253, %255, %257, %259 in 1 : vector<8x16xf32>, vector<8x16xf32>, vector<8x16xf32>, vector<8x16xf32> -> vector<8x64xf32>
    %261 = vector.extract_strided_slice %251 {offsets = [4, 0, 0], sizes = [1, 8, 16], strides = [1, 1, 1]} : vector<8x8x16xf32> to vector<1x8x16xf32>
    %262 = vector.shape_cast %261 : vector<1x8x16xf32> to vector<8x16xf32>
    %263 = vector.extract_strided_slice %251 {offsets = [5, 0, 0], sizes = [1, 8, 16], strides = [1, 1, 1]} : vector<8x8x16xf32> to vector<1x8x16xf32>
    %264 = vector.shape_cast %263 : vector<1x8x16xf32> to vector<8x16xf32>
    %265 = vector.extract_strided_slice %251 {offsets = [6, 0, 0], sizes = [1, 8, 16], strides = [1, 1, 1]} : vector<8x8x16xf32> to vector<1x8x16xf32>
    %266 = vector.shape_cast %265 : vector<1x8x16xf32> to vector<8x16xf32>
    %267 = vector.extract_strided_slice %251 {offsets = [7, 0, 0], sizes = [1, 8, 16], strides = [1, 1, 1]} : vector<8x8x16xf32> to vector<1x8x16xf32>
    %268 = vector.shape_cast %267 : vector<1x8x16xf32> to vector<8x16xf32>
    %269 = tpu.concatenate %262, %264, %266, %268 in 1 : vector<8x16xf32>, vector<8x16xf32>, vector<8x16xf32>, vector<8x16xf32> -> vector<8x64xf32>
    %270 = tpu.concatenate %260, %269 in 0 : vector<8x64xf32>, vector<8x64xf32> -> vector<16x64xf32>
    %cst_65 = arith.constant dense<0.000000e+00> : vector<16x32xf32>
    %271 = tpu.matmul %270, %174, %cst_65 {dimension_numbers = #tpu.dot_dimension_numbers<[1], [0], [0], [1], [0, 0, 1, 1], [], []>} : vector<16x64xf32>, vector<64x32xf32>, vector<16x32xf32> -> vector<16x32xf32>
    %272 = vector.broadcast %176 : vector<1x32xf32> to vector<16x32xf32>
    %273 = arith.addf %271, %272 : vector<16x32xf32>
    %274 = arith.addf %273, %169 : vector<16x32xf32>
    %cst_66 = arith.constant dense<0.000000e+00> : vector<16xf32>
    %275 = vector.multi_reduction <add>, %274, %cst_66 [1] : vector<16x32xf32> to vector<16xf32>
    %276 = vector.shape_cast %275 : vector<16xf32> to vector<16x1xf32>
    %cst_67 = arith.constant 3.200000e+01 : f32
    %277 = vector.broadcast %cst_67 : f32 to vector<16x1xf32>
    %278 = arith.divf %276, %277 : vector<16x1xf32>
    %279 = vector.broadcast %278 : vector<16x1xf32> to vector<16x32xf32>
    %280 = arith.subf %274, %279 : vector<16x32xf32>
    %281 = arith.mulf %280, %280 : vector<16x32xf32>
    %cst_68 = arith.constant dense<0.000000e+00> : vector<16xf32>
    %282 = vector.multi_reduction <add>, %281, %cst_68 [1] : vector<16x32xf32> to vector<16xf32>
    %283 = vector.shape_cast %282 : vector<16xf32> to vector<16x1xf32>
    %cst_69 = arith.constant 3.200000e+01 : f32
    %284 = vector.broadcast %cst_69 : f32 to vector<16x1xf32>
    %285 = arith.divf %283, %284 : vector<16x1xf32>
    %286 = vector.broadcast %278 : vector<16x1xf32> to vector<16x32xf32>
    %287 = arith.subf %274, %286 : vector<16x32xf32>
    %cst_70 = arith.constant 9.99999974E-6 : f32
    %288 = vector.broadcast %cst_70 : f32 to vector<16x1xf32>
    %289 = arith.addf %285, %288 : vector<16x1xf32>
    %290 = math.rsqrt %289 : vector<16x1xf32>
    %291 = vector.broadcast %290 : vector<16x1xf32> to vector<16x32xf32>
    %292 = arith.mulf %287, %291 : vector<16x32xf32>
    %293 = vector.broadcast %177 : vector<1x32xf32> to vector<16x32xf32>
    %294 = arith.mulf %292, %293 : vector<16x32xf32>
    %295 = vector.broadcast %178 : vector<1x32xf32> to vector<16x32xf32>
    %296 = arith.addf %294, %295 : vector<16x32xf32>
    %cst_71 = arith.constant dense<0.000000e+00> : vector<16x64xf32>
    %297 = tpu.matmul %296, %172, %cst_71 {dimension_numbers = #tpu.dot_dimension_numbers<[1], [0], [0], [1], [0, 0, 1, 1], [], []>} : vector<16x32xf32>, vector<32x64xf32>, vector<16x64xf32> -> vector<16x64xf32>
    %298 = vector.broadcast %173 : vector<1x64xf32> to vector<16x64xf32>
    %299 = arith.addf %297, %298 : vector<16x64xf32>
    %cst_72 = arith.constant 0.000000e+00 : f32
    %300 = vector.broadcast %cst_72 : f32 to vector<16x64xf32>
    %301 = arith.maximumf %299, %300 : vector<16x64xf32>
    %cst_73 = arith.constant dense<0.000000e+00> : vector<16x32xf32>
    %302 = tpu.matmul %301, %175, %cst_73 {dimension_numbers = #tpu.dot_dimension_numbers<[1], [0], [0], [1], [0, 0, 1, 1], [], []>} : vector<16x64xf32>, vector<64x32xf32>, vector<16x32xf32> -> vector<16x32xf32>
    %303 = vector.broadcast %179 : vector<1x32xf32> to vector<16x32xf32>
    %304 = arith.addf %302, %303 : vector<16x32xf32>
    %305 = arith.addf %304, %296 : vector<16x32xf32>
    %cst_74 = arith.constant dense<0.000000e+00> : vector<16xf32>
    %306 = vector.multi_reduction <add>, %305, %cst_74 [1] : vector<16x32xf32> to vector<16xf32>
    %307 = vector.shape_cast %306 : vector<16xf32> to vector<16x1xf32>
    %cst_75 = arith.constant 3.200000e+01 : f32
    %308 = vector.broadcast %cst_75 : f32 to vector<16x1xf32>
    %309 = arith.divf %307, %308 : vector<16x1xf32>
    %310 = vector.broadcast %309 : vector<16x1xf32> to vector<16x32xf32>
    %311 = arith.subf %305, %310 : vector<16x32xf32>
    %312 = arith.mulf %311, %311 : vector<16x32xf32>
    %cst_76 = arith.constant dense<0.000000e+00> : vector<16xf32>
    %313 = vector.multi_reduction <add>, %312, %cst_76 [1] : vector<16x32xf32> to vector<16xf32>
    %314 = vector.shape_cast %313 : vector<16xf32> to vector<16x1xf32>
    %cst_77 = arith.constant 3.200000e+01 : f32
    %315 = vector.broadcast %cst_77 : f32 to vector<16x1xf32>
    %316 = arith.divf %314, %315 : vector<16x1xf32>
    %317 = vector.broadcast %309 : vector<16x1xf32> to vector<16x32xf32>
    %318 = arith.subf %305, %317 : vector<16x32xf32>
    %cst_78 = arith.constant 9.99999974E-6 : f32
    %319 = vector.broadcast %cst_78 : f32 to vector<16x1xf32>
    %320 = arith.addf %316, %319 : vector<16x1xf32>
    %321 = math.rsqrt %320 : vector<16x1xf32>
    %322 = vector.broadcast %321 : vector<16x1xf32> to vector<16x32xf32>
    %323 = arith.mulf %318, %322 : vector<16x32xf32>
    %324 = vector.broadcast %180 : vector<1x32xf32> to vector<16x32xf32>
    %325 = arith.mulf %323, %324 : vector<16x32xf32>
    %326 = vector.broadcast %181 : vector<1x32xf32> to vector<16x32xf32>
    %327 = arith.addf %325, %326 : vector<16x32xf32>
    %c0_79 = arith.constant 0 : index
    %c0_80 = arith.constant 0 : index
    %328 = vector.load %arg6[%c0_79, %c0_80] : memref<16x32xf32, #tpu.memory_space<vmem>>, vector<16x32xf32>
    tpu.vector_store %arg6[%c0_79, %c0_80], %327 {strides = array<i32>} : memref<16x32xf32, #tpu.memory_space<vmem>>, vector<16x32xf32>,
    return
  }
  func.func @transform_0(%arg0: i32) -> (i32, i32) {
    %c0_i32 = arith.constant 0 : i32
    %c0_i32_0 = arith.constant 0 : i32
    %c0_i32_1 = arith.constant 0 : i32
    return %c0_i32, %c0_i32_0 : i32, i32
  }
  func.func @transform_1(%arg0: i32) -> (i32, i32, i32) {
    %c0_i32 = arith.constant 0 : i32
    %c0_i32_0 = arith.constant 0 : i32
    %c0_i32_1 = arith.constant 0 : i32
    %c0_i32_2 = arith.constant 0 : i32
    return %c0_i32, %c0_i32_0, %c0_i32_1 : i32, i32, i32
  }
  func.func @transform_2(%arg0: i32) -> (i32, i32) {
    %c0_i32 = arith.constant 0 : i32
    %c0_i32_0 = arith.constant 0 : i32
    %c0_i32_1 = arith.constant 0 : i32
    return %c0_i32, %c0_i32_0 : i32, i32
  }
  func.func @transform_3(%arg0: i32) -> (i32, i32) {
    %c0_i32 = arith.constant 0 : i32
    %c0_i32_0 = arith.constant 0 : i32
    %c0_i32_1 = arith.constant 0 : i32
    return %c0_i32, %c0_i32_0 : i32, i32
  }
  func.func @transform_4(%arg0: i32) -> (i32, i32) {
    %c0_i32 = arith.constant 0 : i32
    %c0_i32_0 = arith.constant 0 : i32
    %c0_i32_1 = arith.constant 0 : i32
    return %c0_i32, %c0_i32_0 : i32, i32
  }
  func.func @transform_5(%arg0: i32) -> (i32, i32) {
    %c0_i32 = arith.constant 0 : i32
    %c0_i32_0 = arith.constant 0 : i32
    %c0_i32_1 = arith.constant 0 : i32
    return %c0_i32, %c0_i32_0 : i32, i32
  }
}

</mosaic_0001>

<llo_original>
// kernel: encoder_forward.1
$region0: #{encoder_forward.1}
  #allocation0 [shape = 'u32[]', space=smem, size = 0x4, offset = 0x4, fixed_abs, tag = 'smem constant byte address 0x4 - core index']
  #allocation1 [shape = 'u32[144,128]{1,0:T(1,128)}', space=vmem, size = 0x12000, scoped, tag = 'internal scratch']
  %s0 = inlined_call_operand.vmem [shape: s32[16,1], index: 0, kind: input, shape index: {}]
  %s1 = inlined_call_operand.vmem [shape: f32[8,1,8], index: 1, kind: input, shape index: {}]
  %s2 = inlined_call_operand.vmem [shape: f32[80,192], index: 2, kind: input, shape index: {}]
  %s3 = inlined_call_operand.vmem [shape: f32[80,64], index: 3, kind: input, shape index: {}]
  %s4 = inlined_call_operand.vmem [shape: f32[320,32], index: 4, kind: input, shape index: {}]
  %s5 = inlined_call_operand.hbm [shape: f32[16,32], index: 5, kind: output, shape index: {}]
  %s6 = sld [smem:[#allocation0]]
  $region30: #{encoder_forward.1} parent=0
    _
  %s8 = ssub.s32 1, %s6
  %s9 = scalar_select 0, %s8, %s6
  $region1: #{encoder_forward.1} parent=0
    #allocation2 [shape = 'u8[8192]{0}', space=vmem, size = 0x2000, scoped, tag = 'output window, operand 0, single buffered']
    #allocation3 [shape = 's32[1]{0}', space=sflag, size = 0x4, scoped, tag = 'scoped memory for encoder_forward.1']
    %10 = vsyncpa [#allocation3], 0
    // Predicated region
    $region2: #{encoder_forward.1} parent=1 // pred_check
      _
    $region3: #{encoder_forward.1} parent=1 // pred_check_branch
      %12 = sbr.rel (0) target = $region5
    $region4: #{encoder_forward.1} parent=1 // pred_region
      _
    $region5: #{encoder_forward.1} parent=1 // pred_fallthru
      _
    // Predicated region
    $region6: #{encoder_forward.1} parent=1 // pred_check
      _
    $region7: #{encoder_forward.1} parent=1 // pred_check_branch
      %14 = sbr.rel (0) target = $region9
    $region8: #{encoder_forward.1} parent=1 // pred_region
      _
    $region9: #{encoder_forward.1} parent=1 // pred_fallthru
      _
    // Predicated region
    $region10: #{encoder_forward.1} parent=1 // pred_check
      _
    $region11: #{encoder_forward.1} parent=1 // pred_check_branch
      %16 = sbr.rel (0) target = $region13
    $region12: #{encoder_forward.1} parent=1 // pred_region
      _
    $region13: #{encoder_forward.1} parent=1 // pred_fallthru
      _
    // Predicated region
    $region14: #{encoder_forward.1} parent=1 // pred_check
      _
    $region15: #{encoder_forward.1} parent=1 // pred_check_branch
      %18 = sbr.rel (0) target = $region17
    $region16: #{encoder_forward.1} parent=1 // pred_region
      _
    $region17: #{encoder_forward.1} parent=1 // pred_fallthru
      _
    // Predicated region
    $region18: #{encoder_forward.1} parent=1 // pred_check
      _
    $region19: #{encoder_forward.1} parent=1 // pred_check_branch
      %20 = sbr.rel (0) target = $region21
    $region20: #{encoder_forward.1} parent=1 // pred_region
      _
    $region21: #{encoder_forward.1} parent=1 // pred_fallthru
      _
    %v21 = vlaneseq
    %v22 = vand.u32 %v21, 127
    %v23 = vld [vmem:[%s0] sm:$0xff]
    %v24 = vld [vmem:[%s0 + $0x8] sm:$0xff]
    %25 = vset.pattern.permute.xlu0 0
    %26 = vperm.xlu0 %25, %v23
    %v27 = vpop.permute.xlu0 %26
    %28 = vset.pattern.permute.xlu0 0
    %29 = vperm.xlu0 %28, %v24
    %v30 = vpop.permute.xlu0 %29
    %vm31 = vcmp.eq.s32.totalorder %v27, %v22
    %vm32 = vcmp.eq.s32.totalorder %v30, %v22
    %v33 = vsel %vm31, 1.0, 0.0
    %v34 = vsel %vm32, 1.0, 0.0
    %v35 = vld [vmem:[%s4] sm:$0xff]
    %v36 = vld [vmem:[%s4 + $0x8] sm:$0xff]
    %v37 = vld [vmem:[%s4 + $0x10] sm:$0xff]
    %v38 = vld [vmem:[%s4 + $0x18] sm:$0xff]
    %v39 = vld [vmem:[%s4 + $0x20] sm:$0xff]
    %v40 = vld [vmem:[%s4 + $0x28] sm:$0xff]
    %vm41 = vcmask 261120
    %v43 = vsel %vm41, %v33, 0
    %v46 = vsel %vm41, %v34, 0
    %48 = vmatprep.subr.mxu0 0.0
    %49 = vmatpush1.msra.mxu0 %v35
    %50 = vmatprep.subr.mxu0 0.0
    %51 = vmatpush1.msra.mxu0 %v36
    %52 = vmatprep.subr.mxu0 0.0
    %53 = vmatpush1.msra.mxu0 %v37
    %54 = vmatprep.subr.mxu0 0.0
    %55 = vmatpush1.msra.mxu0 %v38
    %56 = vmatprep.subr.mxu0 0.0
    %57 = vmatpush1.msra.mxu0 0.0
    %58 = vmatprep.subr.mxu0 0.0
    %59 = vmatpush1.msra.mxu0 0.0
    %60 = vmatprep.subr.mxu0 0.0
    %61 = vmatpush1.msra.mxu0 0.0
    %62 = vmatprep.subr.mxu0 0.0
    %63 = vmatpush1.msra.mxu0 0.0
    %64 = vmatprep.subr.mxu0 0.0
    %65 = vmatpush1.msra.mxu0 0.0
    %66 = vmatprep.subr.mxu0 0.0
    %67 = vmatpush1.msra.mxu0 0.0
    %68 = vmatprep.subr.mxu0 0.0
    %69 = vmatpush1.msra.mxu0 0.0
    %70 = vmatprep.subr.mxu0 0.0
    %71 = vmatpush1.msra.mxu0 0.0
    %72 = vmatprep.subr.mxu0 0.0
    %73 = vmatpush1.msra.mxu0 0.0
    %74 = vmatprep.subr.mxu0 0.0
    %75 = vmatpush1.msra.mxu0 0.0
    %76 = vmatprep.subr.mxu0 0.0
    %77 = vmatpush1.msra.mxu0 0.0
    %78 = vmatprep.subr.mxu0 0.0
    %79 = vmatpush1.msra.mxu0 0.0
    %80 = vmatprep.subr.mxu0 0.0
    %81 = vmatpush1.msra.mxu0 0.0
    %82 = vmatprep.subr.mxu0 0.0
    %83 = vmatpush1.msra.mxu0 0.0
    %84 = vmatprep.subr.mxu0 0.0
    %85 = vmatpush1.msra.mxu0 0.0
    %86 = vmatprep.subr.mxu0 0.0
    %87 = vmatpush1.msra.mxu0 0.0
    %88 = vmatprep.subr.mxu0 0.0
    %89 = vmatpush1.msra.mxu0 0.0
    %90 = vmatprep.subr.mxu0 0.0
    %91 = vmatpush1.msra.mxu0 0.0
    %92 = vmatprep.subr.mxu0 0.0
    %93 = vmatpush1.msra.mxu0 0.0
    %94 = vmatprep.subr.mxu0 0.0
    %95 = vmatpush1.msra.mxu0 0.0
    %96 = vmatprep.subr.mxu0 0.0
    %97 = vmatpush1.msra.mxu0 0.0
    %98 = vmatprep.subr.mxu0 0.0
    %99 = vmatpush1.msra.mxu0 0.0
    %100 = vmatprep.subr.mxu0 0.0
    %101 = vmatpush1.msra.mxu0 0.0
    %102 = vmatprep.subr.mxu0 0.0
    %103 = vmatpush1.msra.mxu0 0.0
    %104 = vmatprep.subr.mxu0 0.0
    %105 = vmatpush1.msra.mxu0 0.0
    %106 = vmatprep.subr.mxu0 0.0
    %107 = vmatpush1.msra.mxu0 0.0
    %108 = vmatprep.subr.mxu0 0.0
    %109 = vmatpush1.msra.mxu0 0.0
    %110 = vmatprep.subr.mxu0 0.0
    %111 = vmatpush1.msra.mxu0 0.0
    %112 = vmatprep.mubr.f32.mxu0 0.0
    %113 = vmatmul.mubr.f32.gmra.mrb[0].mxu0 %v43
    %v114 = vpop.f32.mrb[0].mxu0
    %v115 = vadd.f32 %v39, %v114
    %v116 = vpop.f32.mrb[0].mxu0
    %117 = vmatprep.mubr.f32.mxu0 0.0
    %118 = vmatmul.mubr.f32.gmra.mrb[0].mxu0 %v46
    %v119 = vpop.f32.mrb[0].mxu0
    %v120 = vadd.f32 %v40, %v119
    %v121 = vpop.f32.mrb[0].mxu0
    %122 = vdwg.mxu0
    %v123 = vld [vmem:[%s1] sm:$0x1]
    %v124 = vld [vmem:[%s1 + $0x1] sm:$0x1]
    %v125 = vld [vmem:[%s1 + $0x2] sm:$0x1]
    %v126 = vld [vmem:[%s1 + $0x3] sm:$0x1]
    %v127 = vld [vmem:[%s1 + $0x4] sm:$0x1]
    %v128 = vld [vmem:[%s1 + $0x5] sm:$0x1]
    %v129 = vld [vmem:[%s1 + $0x6] sm:$0x1]
    %v130 = vld [vmem:[%s1 + $0x7] sm:$0x1]
    %v131 = vld [vmem:[%s2] sm:$0xff]
    %v132 = vld [vmem:[%s2 + $0x8] sm:$0xff]
    %v133 = vld [vmem:[%s2 + $0x10] sm:$0xff]
    %v134 = vld [vmem:[%s2 + $0x18] sm:$0xff]
    %v135 = vld [vmem:[%s2 + $0x20] sm:$0xff]
    %v136 = vld [vmem:[%s2 + $0x28] sm:$0xff]
    %v137 = vld [vmem:[%s2 + $0x30] sm:$0xff]
    %v138 = vld [vmem:[%s2 + $0x38] sm:$0xff]
    %s139 = scalar_lea.vmem %s2, 64
    %v140 = vld [vmem:[%s139] ss:$8 sm:$0x3]
    %v141 = vld [vmem:[%s3] sm:$0xff]
    %v142 = vld [vmem:[%s3 + $0x8] sm:$0xff]
    %v143 = vld [vmem:[%s3 + $0x10] sm:$0xff]
    %v144 = vld [vmem:[%s3 + $0x18] sm:$0xff]
    %v145 = vld [vmem:[%s3 + $0x20] sm:$0x1]
    %v146 = vld [vmem:[%s4 + $0x30] sm:$0xff]
    %v147 = vld [vmem:[%s4 + $0x38] sm:$0xff]
    %v148 = vld [vmem:[%s4 + $0x40] sm:$0xff]
    %v149 = vld [vmem:[%s4 + $0x48] sm:$0xff]
    %v150 = vld [vmem:[%s4 + $0x50] sm:$0xff]
    %v151 = vld [vmem:[%s4 + $0x58] sm:$0xff]
    %v152 = vld [vmem:[%s4 + $0x60] sm:$0xff]
    %v153 = vld [vmem:[%s4 + $0x68] sm:$0xff]
    %v154 = vld [vmem:[%s4 + $0x70] sm:$0xff]
    %v155 = vld [vmem:[%s4 + $0x78] sm:$0xff]
    %v156 = vld [vmem:[%s4 + $0x80] sm:$0xff]
    %v157 = vld [vmem:[%s4 + $0x88] sm:$0xff]
    %v158 = vld [vmem:[%s4 + $0x90] sm:$0xff]
    %v159 = vld [vmem:[%s4 + $0x98] sm:$0xff]
    %v160 = vld [vmem:[%s4 + $0xa0] sm:$0xff]
    %v161 = vld [vmem:[%s4 + $0xa8] sm:$0xff]
    %v162 = vld [vmem:[%s4 + $0xb0] sm:$0x1]
    %v163 = vld [vmem:[%s4 + $0xb1] sm:$0x1]
    %v164 = vld [vmem:[%s4 + $0xb2] sm:$0x1]
    %v165 = vld [vmem:[%s4 + $0xb3] sm:$0x1]
    %v166 = vld [vmem:[%s4 + $0xb4] sm:$0x1]
    %v167 = vld [vmem:[%s4 + $0xb5] sm:$0x1]
    %v169 = vlaneseq
    %v170 = vshrl.u32 %v169, 7
    %v171 = vsub.s32 0, %v170
    %v172 = vrot.slane %v140, %v171
    %v173 = vlaneseq
    %v174 = vshrl.u32 %v173, 7
    %v175 = vsub.s32 1, %v174
    %v176 = vrot.slane %v140, %v175
    %v180 = vsel %vm41, %v115, 0
    %v183 = vsel %vm41, %v120, 0
    %185 = vmatprep.subr.mxu0 %v132
    %186 = vmatpush1.msra.mxu0 %v131
    %187 = vmatprep.subr.mxu0 %v134
    %188 = vmatpush1.msra.mxu0 %v133
    %189 = vmatprep.subr.mxu0 %v136
    %190 = vmatpush1.msra.mxu0 %v135
    %191 = vmatprep.subr.mxu0 %v138
    %192 = vmatpush1.msra.mxu0 %v137
    %193 = vmatprep.subr.mxu0 0.0
    %194 = vmatpush1.msra.mxu0 0.0
    %195 = vmatprep.subr.mxu0 0.0
    %196 = vmatpush1.msra.mxu0 0.0
    %197 = vmatprep.subr.mxu0 0.0
    %198 = vmatpush1.msra.mxu0 0.0
    %199 = vmatprep.subr.mxu0 0.0
    %200 = vmatpush1.msra.mxu0 0.0
    %201 = vmatprep.subr.mxu0 0.0
    %202 = vmatpush1.msra.mxu0 0.0
    %203 = vmatprep.subr.mxu0 0.0
    %204 = vmatpush1.msra.mxu0 0.0
    %205 = vmatprep.subr.mxu0 0.0
    %206 = vmatpush1.msra.mxu0 0.0
    %207 = vmatprep.subr.mxu0 0.0
    %208 = vmatpush1.msra.mxu0 0.0
    %209 = vmatprep.subr.mxu0 0.0
    %210 = vmatpush1.msra.mxu0 0.0
    %211 = vmatprep.subr.mxu0 0.0
    %212 = vmatpush1.msra.mxu0 0.0
    %213 = vmatprep.subr.mxu0 0.0
    %214 = vmatpush1.msra.mxu0 0.0
    %215 = vmatprep.subr.mxu0 0.0
    %216 = vmatpush1.msra.mxu0 0.0
    %217 = vmatprep.subr.mxu0 0.0
    %218 = vmatpush1.msra.mxu0 0.0
    %219 = vmatprep.subr.mxu0 0.0
    %220 = vmatpush1.msra.mxu0 0.0
    %221 = vmatprep.subr.mxu0 0.0
    %222 = vmatpush1.msra.mxu0 0.0
    %223 = vmatprep.subr.mxu0 0.0
    %224 = vmatpush1.msra.mxu0 0.0
    %225 = vmatprep.subr.mxu0 0.0
    %226 = vmatpush1.msra.mxu0 0.0
    %227 = vmatprep.subr.mxu0 0.0
    %228 = vmatpush1.msra.mxu0 0.0
    %229 = vmatprep.subr.mxu0 0.0
    %230 = vmatpush1.msra.mxu0 0.0
    %231 = vmatprep.subr.mxu0 0.0
    %232 = vmatpush1.msra.mxu0 0.0
    %233 = vmatprep.subr.mxu0 0.0
    %234 = vmatpush1.msra.mxu0 0.0
    %235 = vmatprep.subr.mxu0 0.0
    %236 = vmatpush1.msra.mxu0 0.0
    %237 = vmatprep.subr.mxu0 0.0
    %238 = vmatpush1.msra.mxu0 0.0
    %239 = vmatprep.subr.mxu0 0.0
    %240 = vmatpush1.msra.mxu0 0.0
    %241 = vmatprep.subr.mxu0 0.0
    %242 = vmatpush1.msra.mxu0 0.0
    %243 = vmatprep.subr.mxu0 0.0
    %244 = vmatpush1.msra.mxu0 0.0
    %245 = vmatprep.subr.mxu0 0.0
    %246 = vmatpush1.msra.mxu0 0.0
    %247 = vmatprep.subr.mxu0 0.0
    %248 = vmatpush1.msra.mxu0 0.0
    %249 = vmatprep.mubr.f32.mxu0 0.0
    %250 = vmatmul.mubr.f32.gmra.mrb[0].mxu0 %v180
    %v251 = vpop.f32.mrb[0].mxu0
    %v252 = vadd.f32 %v172, %v251
    %v253 = vpop.f32.mrb[0].mxu0
    %v254 = vadd.f32 %v176, %v253
    %255 = vmatprep.mubr.f32.mxu0 0.0
    %256 = vmatmul.mubr.f32.gmra.mrb[0].mxu0 %v183
    %v257 = vpop.f32.mrb[0].mxu0
    %v258 = vadd.f32 %v172, %v257
    %v259 = vpop.f32.mrb[0].mxu0
    %v260 = vadd.f32 %v176, %v259
    %261 = vdwg.mxu0
    %263 = vrot.lane.b32.xlu0 %v252, 112
    %v264 = vpop.permute.xlu0 %263
    %265 = vrot.lane.b32.xlu0 %v252, 96
    %v266 = vpop.permute.xlu0 %265
    %267 = vrot.lane.b32.xlu0 %v252, 80
    %v268 = vpop.permute.xlu0 %267
    %270 = vrot.lane.b32.xlu0 %v258, 112
    %v271 = vpop.permute.xlu0 %270
    %272 = vrot.lane.b32.xlu0 %v258, 96
    %v273 = vpop.permute.xlu0 %272
    %274 = vrot.lane.b32.xlu0 %v258, 80
    %v275 = vpop.permute.xlu0 %274
    %277 = vrot.lane.b32.xlu0 %v254, 112
    %v278 = vpop.permute.xlu0 %277
    %280 = vrot.lane.b32.xlu0 %v254, 96
    %v281 = vpop.permute.xlu0 %280
    %283 = vrot.lane.b32.xlu0 %v254, 80
    %v284 = vpop.permute.xlu0 %283
    %287 = vrot.lane.b32.xlu0 %v260, 112
    %v288 = vpop.permute.xlu0 %287
    %290 = vrot.lane.b32.xlu0 %v260, 96
    %v291 = vpop.permute.xlu0 %290
    %293 = vrot.lane.b32.xlu0 %v260, 80
    %v294 = vpop.permute.xlu0 %293
    %296 = vrot.lane.b32.xlu0 %v252, 64
    %v297 = vpop.permute.xlu0 %296
    %vm298 = vcmask 130048
    %v299 = vsel %vm298, %v252, 0
    %v301 = vsel %vm298, %v297, 0
    %303 = vmatprep.subr.mxu0 0.0
    %304 = vmatpush1.xpose.msra.mxu0 %v301
    %305 = vmatprep.subr.mxu0 0.0
    %306 = vmatpush1.xpose.msra.mxu0 0.0
    %307 = vmatprep.subr.mxu0 0.0
    %308 = vmatpush1.xpose.msra.mxu0 0.0
    %309 = vmatprep.subr.mxu0 0.0
    %310 = vmatpush1.xpose.msra.mxu0 0.0
    %311 = vmatprep.subr.mxu0 0.0
    %312 = vmatpush1.xpose.msra.mxu0 0.0
    %313 = vmatprep.subr.mxu0 0.0
    %314 = vmatpush1.xpose.msra.mxu0 0.0
    %315 = vmatprep.subr.mxu0 0.0
    %316 = vmatpush1.xpose.msra.mxu0 0.0
    %317 = vmatprep.subr.mxu0 0.0
    %318 = vmatpush1.xpose.msra.mxu0 0.0
    %319 = vmatprep.subr.mxu0 0.0
    %320 = vmatpush1.xpose.msra.mxu0 0.0
    %321 = vmatprep.subr.mxu0 0.0
    %322 = vmatpush1.xpose.msra.mxu0 0.0
    %323 = vmatprep.subr.mxu0 0.0
    %324 = vmatpush1.xpose.msra.mxu0 0.0
    %325 = vmatprep.subr.mxu0 0.0
    %326 = vmatpush1.xpose.msra.mxu0 0.0
    %327 = vmatprep.subr.mxu0 0.0
    %328 = vmatpush1.xpose.msra.mxu0 0.0
    %329 = vmatprep.subr.mxu0 0.0
    %330 = vmatpush1.xpose.msra.mxu0 0.0
    %331 = vmatprep.subr.mxu0 0.0
    %332 = vmatpush1.xpose.msra.mxu0 0.0
    %333 = vmatprep.subr.mxu0 0.0
    %334 = vmatpush1.xpose.msra.mxu0 0.0
    %335 = vmatprep.subr.mxu0 0.0
    %336 = vmatpush1.xpose.msra.mxu0 0.0
    %337 = vmatprep.subr.mxu0 0.0
    %338 = vmatpush1.xpose.msra.mxu0 0.0
    %339 = vmatprep.subr.mxu0 0.0
    %340 = vmatpush1.xpose.msra.mxu0 0.0
    %341 = vmatprep.subr.mxu0 0.0
    %342 = vmatpush1.xpose.msra.mxu0 0.0
    %343 = vmatprep.subr.mxu0 0.0
    %344 = vmatpush1.xpose.msra.mxu0 0.0
    %345 = vmatprep.subr.mxu0 0.0
    %346 = vmatpush1.xpose.msra.mxu0 0.0
    %347 = vmatprep.subr.mxu0 0.0
    %348 = vmatpush1.xpose.msra.mxu0 0.0
    %349 = vmatprep.subr.mxu0 0.0
    %350 = vmatpush1.xpose.msra.mxu0 0.0
    %351 = vmatprep.subr.mxu0 0.0
    %352 = vmatpush1.xpose.msra.mxu0 0.0
    %353 = vmatprep.subr.mxu0 0.0
    %354 = vmatpush1.xpose.msra.mxu0 0.0
    %355 = vmatprep.subr.mxu0 0.0
    %356 = vmatpush1.xpose.msra.mxu0 0.0
    %357 = vmatprep.subr.mxu0 0.0
    %358 = vmatpush1.xpose.msra.mxu0 0.0
    %359 = vmatprep.subr.mxu0 0.0
    %360 = vmatpush1.xpose.msra.mxu0 0.0
    %361 = vmatprep.subr.mxu0 0.0
    %362 = vmatpush1.xpose.msra.mxu0 0.0
    %363 = vmatprep.subr.mxu0 0.0
    %364 = vmatpush1.xpose.msra.mxu0 0.0
    %365 = vmatprep.subr.mxu0 0.0
    %366 = vmatpush1.xpose.msra.mxu0 0.0
    %367 = vmatprep.mubr.f32.mxu0 0.0
    %368 = vmatmul.mubr.f32.gmra.mrb[0].mxu0 %v299
    %v369 = vpop.f32.mrb[0].mxu0
    %v370 = vadd.f32 0.0, %v369
    %v371 = vpop.f32.mrb[0].mxu0
    %372 = vdwg.mxu0
    %373 = vrot.lane.b32.xlu0 %v264, 64
    %v374 = vpop.permute.xlu0 %373
    %v375 = vsel %vm298, %v264, 0
    %v377 = vsel %vm298, %v374, 0
    %379 = vmatprep.subr.mxu0 0.0
    %380 = vmatpush1.xpose.msra.mxu0 %v377
    %381 = vmatprep.subr.mxu0 0.0
    %382 = vmatpush1.xpose.msra.mxu0 0.0
    %383 = vmatprep.subr.mxu0 0.0
    %384 = vmatpush1.xpose.msra.mxu0 0.0
    %385 = vmatprep.subr.mxu0 0.0
    %386 = vmatpush1.xpose.msra.mxu0 0.0
    %387 = vmatprep.subr.mxu0 0.0
    %388 = vmatpush1.xpose.msra.mxu0 0.0
    %389 = vmatprep.subr.mxu0 0.0
    %390 = vmatpush1.xpose.msra.mxu0 0.0
    %391 = vmatprep.subr.mxu0 0.0
    %392 = vmatpush1.xpose.msra.mxu0 0.0
    %393 = vmatprep.subr.mxu0 0.0
    %394 = vmatpush1.xpose.msra.mxu0 0.0
    %395 = vmatprep.subr.mxu0 0.0
    %396 = vmatpush1.xpose.msra.mxu0 0.0
    %397 = vmatprep.subr.mxu0 0.0
    %398 = vmatpush1.xpose.msra.mxu0 0.0
    %399 = vmatprep.subr.mxu0 0.0
    %400 = vmatpush1.xpose.msra.mxu0 0.0
    %401 = vmatprep.subr.mxu0 0.0
    %402 = vmatpush1.xpose.msra.mxu0 0.0
    %403 = vmatprep.subr.mxu0 0.0
    %404 = vmatpush1.xpose.msra.mxu0 0.0
    %405 = vmatprep.subr.mxu0 0.0
    %406 = vmatpush1.xpose.msra.mxu0 0.0
    %407 = vmatprep.subr.mxu0 0.0
    %408 = vmatpush1.xpose.msra.mxu0 0.0
    %409 = vmatprep.subr.mxu0 0.0
    %410 = vmatpush1.xpose.msra.mxu0 0.0
    %411 = vmatprep.subr.mxu0 0.0
    %412 = vmatpush1.xpose.msra.mxu0 0.0
    %413 = vmatprep.subr.mxu0 0.0
    %414 = vmatpush1.xpose.msra.mxu0 0.0
    %415 = vmatprep.subr.mxu0 0.0
    %416 = vmatpush1.xpose.msra.mxu0 0.0
    %417 = vmatprep.subr.mxu0 0.0
    %418 = vmatpush1.xpose.msra.mxu0 0.0
    %419 = vmatprep.subr.mxu0 0.0
    %420 = vmatpush1.xpose.msra.mxu0 0.0
    %421 = vmatprep.subr.mxu0 0.0
    %422 = vmatpush1.xpose.msra.mxu0 0.0
    %423 = vmatprep.subr.mxu0 0.0
    %424 = vmatpush1.xpose.msra.mxu0 0.0
    %425 = vmatprep.subr.mxu0 0.0
    %426 = vmatpush1.xpose.msra.mxu0 0.0
    %427 = vmatprep.subr.mxu0 0.0
    %428 = vmatpush1.xpose.msra.mxu0 0.0
    %429 = vmatprep.subr.mxu0 0.0
    %430 = vmatpush1.xpose.msra.mxu0 0.0
    %431 = vmatprep.subr.mxu0 0.0
    %432 = vmatpush1.xpose.msra.mxu0 0.0
    %433 = vmatprep.subr.mxu0 0.0
    %434 = vmatpush1.xpose.msra.mxu0 0.0
    %435 = vmatprep.subr.mxu0 0.0
    %436 = vmatpush1.xpose.msra.mxu0 0.0
    %437 = vmatprep.subr.mxu0 0.0
    %438 = vmatpush1.xpose.msra.mxu0 0.0
    %439 = vmatprep.subr.mxu0 0.0
    %440 = vmatpush1.xpose.msra.mxu0 0.0
    %441 = vmatprep.subr.mxu0 0.0
    %442 = vmatpush1.xpose.msra.mxu0 0.0
    %443 = vmatprep.mubr.f32.mxu0 0.0
    %444 = vmatmul.mubr.f32.gmra.mrb[0].mxu0 %v375
    %v445 = vpop.f32.mrb[0].mxu0
    %v446 = vadd.f32 0.0, %v445
    %v447 = vpop.f32.mrb[0].mxu0
    %448 = vdwg.mxu0
    %449 = vrot.lane.b32.xlu0 %v266, 64
    %v450 = vpop.permute.xlu0 %449
    %v451 = vsel %vm298, %v266, 0
    %v453 = vsel %vm298, %v450, 0
    %455 = vmatprep.subr.mxu0 0.0
    %456 = vmatpush1.xpose.msra.mxu0 %v453
    %457 = vmatprep.subr.mxu0 0.0
    %458 = vmatpush1.xpose.msra.mxu0 0.0
    %459 = vmatprep.subr.mxu0 0.0
    %460 = vmatpush1.xpose.msra.mxu0 0.0
    %461 = vmatprep.subr.mxu0 0.0
    %462 = vmatpush1.xpose.msra.mxu0 0.0
    %463 = vmatprep.subr.mxu0 0.0
    %464 = vmatpush1.xpose.msra.mxu0 0.0
    %465 = vmatprep.subr.mxu0 0.0
    %466 = vmatpush1.xpose.msra.mxu0 0.0
    %467 = vmatprep.subr.mxu0 0.0
    %468 = vmatpush1.xpose.msra.mxu0 0.0
    %469 = vmatprep.subr.mxu0 0.0
    %470 = vmatpush1.xpose.msra.mxu0 0.0
    %471 = vmatprep.subr.mxu0 0.0
    %472 = vmatpush1.xpose.msra.mxu0 0.0
    %473 = vmatprep.subr.mxu0 0.0
    %474 = vmatpush1.xpose.msra.mxu0 0.0
    %475 = vmatprep.subr.mxu0 0.0
    %476 = vmatpush1.xpose.msra.mxu0 0.0
    %477 = vmatprep.subr.mxu0 0.0
    %478 = vmatpush1.xpose.msra.mxu0 0.0
    %479 = vmatprep.subr.mxu0 0.0
    %480 = vmatpush1.xpose.msra.mxu0 0.0
    %481 = vmatprep.subr.mxu0 0.0
    %482 = vmatpush1.xpose.msra.mxu0 0.0
    %483 = vmatprep.subr.mxu0 0.0
    %484 = vmatpush1.xpose.msra.mxu0 0.0
    %485 = vmatprep.subr.mxu0 0.0
    %486 = vmatpush1.xpose.msra.mxu0 0.0
    %487 = vmatprep.subr.mxu0 0.0
    %488 = vmatpush1.xpose.msra.mxu0 0.0
    %489 = vmatprep.subr.mxu0 0.0
    %490 = vmatpush1.xpose.msra.mxu0 0.0
    %491 = vmatprep.subr.mxu0 0.0
    %492 = vmatpush1.xpose.msra.mxu0 0.0
    %493 = vmatprep.subr.mxu0 0.0
    %494 = vmatpush1.xpose.msra.mxu0 0.0
    %495 = vmatprep.subr.mxu0 0.0
    %496 = vmatpush1.xpose.msra.mxu0 0.0
    %497 = vmatprep.subr.mxu0 0.0
    %498 = vmatpush1.xpose.msra.mxu0 0.0
    %499 = vmatprep.subr.mxu0 0.0
    %500 = vmatpush1.xpose.msra.mxu0 0.0
    %501 = vmatprep.subr.mxu0 0.0
    %502 = vmatpush1.xpose.msra.mxu0 0.0
    %503 = vmatprep.subr.mxu0 0.0
    %504 = vmatpush1.xpose.msra.mxu0 0.0
    %505 = vmatprep.subr.mxu0 0.0
    %506 = vmatpush1.xpose.msra.mxu0 0.0
    %507 = vmatprep.subr.mxu0 0.0
    %508 = vmatpush1.xpose.msra.mxu0 0.0
    %509 = vmatprep.subr.mxu0 0.0
    %510 = vmatpush1.xpose.msra.mxu0 0.0
    %511 = vmatprep.subr.mxu0 0.0
    %512 = vmatpush1.xpose.msra.mxu0 0.0
    %513 = vmatprep.subr.mxu0 0.0
    %514 = vmatpush1.xpose.msra.mxu0 0.0
    %515 = vmatprep.subr.mxu0 0.0
    %516 = vmatpush1.xpose.msra.mxu0 0.0
    %517 = vmatprep.subr.mxu0 0.0
    %518 = vmatpush1.xpose.msra.mxu0 0.0
    %519 = vmatprep.mubr.f32.mxu0 0.0
    %520 = vmatmul.mubr.f32.gmra.mrb[0].mxu0 %v451
    %v521 = vpop.f32.mrb[0].mxu0
    %v522 = vadd.f32 0.0, %v521
    %v523 = vpop.f32.mrb[0].mxu0
    %524 = vdwg.mxu0
    %525 = vrot.lane.b32.xlu0 %v268, 64
    %v526 = vpop.permute.xlu0 %525
    %v527 = vsel %vm298, %v268, 0
    %v529 = vsel %vm298, %v526, 0
    %531 = vmatprep.subr.mxu0 0.0
    %532 = vmatpush1.xpose.msra.mxu0 %v529
    %533 = vmatprep.subr.mxu0 0.0
    %534 = vmatpush1.xpose.msra.mxu0 0.0
    %535 = vmatprep.subr.mxu0 0.0
    %536 = vmatpush1.xpose.msra.mxu0 0.0
    %537 = vmatprep.subr.mxu0 0.0
    %538 = vmatpush1.xpose.msra.mxu0 0.0
    %539 = vmatprep.subr.mxu0 0.0
    %540 = vmatpush1.xpose.msra.mxu0 0.0
    %541 = vmatprep.subr.mxu0 0.0
    %542 = vmatpush1.xpose.msra.mxu0 0.0
    %543 = vmatprep.subr.mxu0 0.0
    %544 = vmatpush1.xpose.msra.mxu0 0.0
    %545 = vmatprep.subr.mxu0 0.0
    %546 = vmatpush1.xpose.msra.mxu0 0.0
    %547 = vmatprep.subr.mxu0 0.0
    %548 = vmatpush1.xpose.msra.mxu0 0.0
    %549 = vmatprep.subr.mxu0 0.0
    %550 = vmatpush1.xpose.msra.mxu0 0.0
    %551 = vmatprep.subr.mxu0 0.0
    %552 = vmatpush1.xpose.msra.mxu0 0.0
    %553 = vmatprep.subr.mxu0 0.0
    %554 = vmatpush1.xpose.msra.mxu0 0.0
    %555 = vmatprep.subr.mxu0 0.0
    %556 = vmatpush1.xpose.msra.mxu0 0.0
    %557 = vmatprep.subr.mxu0 0.0
    %558 = vmatpush1.xpose.msra.mxu0 0.0
    %559 = vmatprep.subr.mxu0 0.0
    %560 = vmatpush1.xpose.msra.mxu0 0.0
    %561 = vmatprep.subr.mxu0 0.0
    %562 = vmatpush1.xpose.msra.mxu0 0.0
    %563 = vmatprep.subr.mxu0 0.0
    %564 = vmatpush1.xpose.msra.mxu0 0.0
    %565 = vmatprep.subr.mxu0 0.0
    %566 = vmatpush1.xpose.msra.mxu0 0.0
    %567 = vmatprep.subr.mxu0 0.0
    %568 = vmatpush1.xpose.msra.mxu0 0.0
    %569 = vmatprep.subr.mxu0 0.0
    %570 = vmatpush1.xpose.msra.mxu0 0.0
    %571 = vmatprep.subr.mxu0 0.0
    %572 = vmatpush1.xpose.msra.mxu0 0.0
    %573 = vmatprep.subr.mxu0 0.0
    %574 = vmatpush1.xpose.msra.mxu0 0.0
    %575 = vmatprep.subr.mxu0 0.0
    %576 = vmatpush1.xpose.msra.mxu0 0.0
    %577 = vmatprep.subr.mxu0 0.0
    %578 = vmatpush1.xpose.msra.mxu0 0.0
    %579 = vmatprep.subr.mxu0 0.0
    %580 = vmatpush1.xpose.msra.mxu0 0.0
    %581 = vmatprep.subr.mxu0 0.0
    %582 = vmatpush1.xpose.msra.mxu0 0.0
    %583 = vmatprep.subr.mxu0 0.0
    %584 = vmatpush1.xpose.msra.mxu0 0.0
    %585 = vmatprep.subr.mxu0 0.0
    %586 = vmatpush1.xpose.msra.mxu0 0.0
    %587 = vmatprep.subr.mxu0 0.0
    %588 = vmatpush1.xpose.msra.mxu0 0.0
    %589 = vmatprep.subr.mxu0 0.0
    %590 = vmatpush1.xpose.msra.mxu0 0.0
    %591 = vmatprep.subr.mxu0 0.0
    %592 = vmatpush1.xpose.msra.mxu0 0.0
    %593 = vmatprep.subr.mxu0 0.0
    %594 = vmatpush1.xpose.msra.mxu0 0.0
    %595 = vmatprep.mubr.f32.mxu0 0.0
    %596 = vmatmul.mubr.f32.gmra.mrb[0].mxu0 %v527
    %v597 = vpop.f32.mrb[0].mxu0
    %v598 = vadd.f32 0.0, %v597
    %v599 = vpop.f32.mrb[0].mxu0
    %600 = vdwg.mxu0
    %601 = vrot.lane.b32.xlu0 %v258, 64
    %v602 = vpop.permute.xlu0 %601
    %v603 = vsel %vm298, %v258, 0
    %v605 = vsel %vm298, %v602, 0
    %607 = vmatprep.subr.mxu0 0.0
    %608 = vmatpush1.xpose.msra.mxu0 %v605
    %609 = vmatprep.subr.mxu0 0.0
    %610 = vmatpush1.xpose.msra.mxu0 0.0
    %611 = vmatprep.subr.mxu0 0.0
    %612 = vmatpush1.xpose.msra.mxu0 0.0
    %613 = vmatprep.subr.mxu0 0.0
    %614 = vmatpush1.xpose.msra.mxu0 0.0
    %615 = vmatprep.subr.mxu0 0.0
    %616 = vmatpush1.xpose.msra.mxu0 0.0
    %617 = vmatprep.subr.mxu0 0.0
    %618 = vmatpush1.xpose.msra.mxu0 0.0
    %619 = vmatprep.subr.mxu0 0.0
    %620 = vmatpush1.xpose.msra.mxu0 0.0
    %621 = vmatprep.subr.mxu0 0.0
    %622 = vmatpush1.xpose.msra.mxu0 0.0
    %623 = vmatprep.subr.mxu0 0.0
    %624 = vmatpush1.xpose.msra.mxu0 0.0
    %625 = vmatprep.subr.mxu0 0.0
    %626 = vmatpush1.xpose.msra.mxu0 0.0
    %627 = vmatprep.subr.mxu0 0.0
    %628 = vmatpush1.xpose.msra.mxu0 0.0
    %629 = vmatprep.subr.mxu0 0.0
    %630 = vmatpush1.xpose.msra.mxu0 0.0
    %631 = vmatprep.subr.mxu0 0.0
    %632 = vmatpush1.xpose.msra.mxu0 0.0
    %633 = vmatprep.subr.mxu0 0.0
    %634 = vmatpush1.xpose.msra.mxu0 0.0
    %635 = vmatprep.subr.mxu0 0.0
    %636 = vmatpush1.xpose.msra.mxu0 0.0
    %637 = vmatprep.subr.mxu0 0.0
    %638 = vmatpush1.xpose.msra.mxu0 0.0
    %639 = vmatprep.subr.mxu0 0.0
    %640 = vmatpush1.xpose.msra.mxu0 0.0
    %641 = vmatprep.subr.mxu0 0.0
    %642 = vmatpush1.xpose.msra.mxu0 0.0
    %643 = vmatprep.subr.mxu0 0.0
    %644 = vmatpush1.xpose.msra.mxu0 0.0
    %645 = vmatprep.subr.mxu0 0.0
    %646 = vmatpush1.xpose.msra.mxu0 0.0
    %647 = vmatprep.subr.mxu0 0.0
    %648 = vmatpush1.xpose.msra.mxu0 0.0
    %649 = vmatprep.subr.mxu0 0.0
    %650 = vmatpush1.xpose.msra.mxu0 0.0
    %651 = vmatprep.subr.mxu0 0.0
    %652 = vmatpush1.xpose.msra.mxu0 0.0
    %653 = vmatprep.subr.mxu0 0.0
    %654 = vmatpush1.xpose.msra.mxu0 0.0
    %655 = vmatprep.subr.mxu0 0.0
    %656 = vmatpush1.xpose.msra.mxu0 0.0
    %657 = vmatprep.subr.mxu0 0.0
    %658 = vmatpush1.xpose.msra.mxu0 0.0
    %659 = vmatprep.subr.mxu0 0.0
    %660 = vmatpush1.xpose.msra.mxu0 0.0
    %661 = vmatprep.subr.mxu0 0.0
    %662 = vmatpush1.xpose.msra.mxu0 0.0
    %663 = vmatprep.subr.mxu0 0.0
    %664 = vmatpush1.xpose.msra.mxu0 0.0
    %665 = vmatprep.subr.mxu0 0.0
    %666 = vmatpush1.xpose.msra.mxu0 0.0
    %667 = vmatprep.subr.mxu0 0.0
    %668 = vmatpush1.xpose.msra.mxu0 0.0
    %669 = vmatprep.subr.mxu0 0.0
    %670 = vmatpush1.xpose.msra.mxu0 0.0
    %671 = vmatprep.mubr.f32.mxu0 0.0
    %672 = vmatmul.mubr.f32.gmra.mrb[0].mxu0 %v603
    %v673 = vpop.f32.mrb[0].mxu0
    %v674 = vadd.f32 0.0, %v673
    %v675 = vpop.f32.mrb[0].mxu0
    %676 = vdwg.mxu0
    %677 = vrot.lane.b32.xlu0 %v271, 64
    %v678 = vpop.permute.xlu0 %677
    %v679 = vsel %vm298, %v271, 0
    %v681 = vsel %vm298, %v678, 0
    %683 = vmatprep.subr.mxu0 0.0
    %684 = vmatpush1.xpose.msra.mxu0 %v681
    %685 = vmatprep.subr.mxu0 0.0
    %686 = vmatpush1.xpose.msra.mxu0 0.0
    %687 = vmatprep.subr.mxu0 0.0
    %688 = vmatpush1.xpose.msra.mxu0 0.0
    %689 = vmatprep.subr.mxu0 0.0
    %690 = vmatpush1.xpose.msra.mxu0 0.0
    %691 = vmatprep.subr.mxu0 0.0
    %692 = vmatpush1.xpose.msra.mxu0 0.0
    %693 = vmatprep.subr.mxu0 0.0
    %694 = vmatpush1.xpose.msra.mxu0 0.0
    %695 = vmatprep.subr.mxu0 0.0
    %696 = vmatpush1.xpose.msra.mxu0 0.0
    %697 = vmatprep.subr.mxu0 0.0
    %698 = vmatpush1.xpose.msra.mxu0 0.0
    %699 = vmatprep.subr.mxu0 0.0
    %700 = vmatpush1.xpose.msra.mxu0 0.0
    %701 = vmatprep.subr.mxu0 0.0
    %702 = vmatpush1.xpose.msra.mxu0 0.0
    %703 = vmatprep.subr.mxu0 0.0
    %704 = vmatpush1.xpose.msra.mxu0 0.0
    %705 = vmatprep.subr.mxu0 0.0
    %706 = vmatpush1.xpose.msra.mxu0 0.0
    %707 = vmatprep.subr.mxu0 0.0
    %708 = vmatpush1.xpose.msra.mxu0 0.0
    %709 = vmatprep.subr.mxu0 0.0
    %710 = vmatpush1.xpose.msra.mxu0 0.0
    %711 = vmatprep.subr.mxu0 0.0
    %712 = vmatpush1.xpose.msra.mxu0 0.0
    %713 = vmatprep.subr.mxu0 0.0
    %714 = vmatpush1.xpose.msra.mxu0 0.0
    %715 = vmatprep.subr.mxu0 0.0
    %716 = vmatpush1.xpose.msra.mxu0 0.0
    %717 = vmatprep.subr.mxu0 0.0
    %718 = vmatpush1.xpose.msra.mxu0 0.0
    %719 = vmatprep.subr.mxu0 0.0
    %720 = vmatpush1.xpose.msra.mxu0 0.0
    %721 = vmatprep.subr.mxu0 0.0
    %722 = vmatpush1.xpose.msra.mxu0 0.0
    %723 = vmatprep.subr.mxu0 0.0
    %724 = vmatpush1.xpose.msra.mxu0 0.0
    %725 = vmatprep.subr.mxu0 0.0
    %726 = vmatpush1.xpose.msra.mxu0 0.0
    %727 = vmatprep.subr.mxu0 0.0
    %728 = vmatpush1.xpose.msra.mxu0 0.0
    %729 = vmatprep.subr.mxu0 0.0
    %730 = vmatpush1.xpose.msra.mxu0 0.0
    %731 = vmatprep.subr.mxu0 0.0
    %732 = vmatpush1.xpose.msra.mxu0 0.0
    %733 = vmatprep.subr.mxu0 0.0
    %734 = vmatpush1.xpose.msra.mxu0 0.0
    %735 = vmatprep.subr.mxu0 0.0
    %736 = vmatpush1.xpose.msra.mxu0 0.0
    %737 = vmatprep.subr.mxu0 0.0
    %738 = vmatpush1.xpose.msra.mxu0 0.0
    %739 = vmatprep.subr.mxu0 0.0
    %740 = vmatpush1.xpose.msra.mxu0 0.0
    %741 = vmatprep.subr.mxu0 0.0
    %742 = vmatpush1.xpose.msra.mxu0 0.0
    %743 = vmatprep.subr.mxu0 0.0
    %744 = vmatpush1.xpose.msra.mxu0 0.0
    %745 = vmatprep.subr.mxu0 0.0
    %746 = vmatpush1.xpose.msra.mxu0 0.0
    %747 = vmatprep.mubr.f32.mxu0 0.0
    %748 = vmatmul.mubr.f32.gmra.mrb[0].mxu0 %v679
    %v749 = vpop.f32.mrb[0].mxu0
    %v750 = vadd.f32 0.0, %v749
    %v751 = vpop.f32.mrb[0].mxu0
    %752 = vdwg.mxu0
    %753 = vrot.lane.b32.xlu0 %v273, 64
    %v754 = vpop.permute.xlu0 %753
    %v755 = vsel %vm298, %v273, 0
    %v757 = vsel %vm298, %v754, 0
    %759 = vmatprep.subr.mxu0 0.0
    %760 = vmatpush1.xpose.msra.mxu0 %v757
    %761 = vmatprep.subr.mxu0 0.0
    %762 = vmatpush1.xpose.msra.mxu0 0.0
    %763 = vmatprep.subr.mxu0 0.0
    %764 = vmatpush1.xpose.msra.mxu0 0.0
    %765 = vmatprep.subr.mxu0 0.0
    %766 = vmatpush1.xpose.msra.mxu0 0.0
    %767 = vmatprep.subr.mxu0 0.0
    %768 = vmatpush1.xpose.msra.mxu0 0.0
    %769 = vmatprep.subr.mxu0 0.0
    %770 = vmatpush1.xpose.msra.mxu0 0.0
    %771 = vmatprep.subr.mxu0 0.0
    %772 = vmatpush1.xpose.msra.mxu0 0.0
    %773 = vmatprep.subr.mxu0 0.0
    %774 = vmatpush1.xpose.msra.mxu0 0.0
    %775 = vmatprep.subr.mxu0 0.0
    %776 = vmatpush1.xpose.msra.mxu0 0.0
    %777 = vmatprep.subr.mxu0 0.0
    %778 = vmatpush1.xpose.msra.mxu0 0.0
    %779 = vmatprep.subr.mxu0 0.0
    %780 = vmatpush1.xpose.msra.mxu0 0.0
    %781 = vmatprep.subr.mxu0 0.0
    %782 = vmatpush1.xpose.msra.mxu0 0.0
    %783 = vmatprep.subr.mxu0 0.0
    %784 = vmatpush1.xpose.msra.mxu0 0.0
    %785 = vmatprep.subr.mxu0 0.0
    %786 = vmatpush1.xpose.msra.mxu0 0.0
    %787 = vmatprep.subr.mxu0 0.0
    %788 = vmatpush1.xpose.msra.mxu0 0.0
    %789 = vmatprep.subr.mxu0 0.0
    %790 = vmatpush1.xpose.msra.mxu0 0.0
    %791 = vmatprep.subr.mxu0 0.0
    %792 = vmatpush1.xpose.msra.mxu0 0.0
    %793 = vmatprep.subr.mxu0 0.0
    %794 = vmatpush1.xpose.msra.mxu0 0.0
    %795 = vmatprep.subr.mxu0 0.0
    %796 = vmatpush1.xpose.msra.mxu0 0.0
    %797 = vmatprep.subr.mxu0 0.0
    %798 = vmatpush1.xpose.msra.mxu0 0.0
    %799 = vmatprep.subr.mxu0 0.0
    %800 = vmatpush1.xpose.msra.mxu0 0.0
    %801 = vmatprep.subr.mxu0 0.0
    %802 = vmatpush1.xpose.msra.mxu0 0.0
    %803 = vmatprep.subr.mxu0 0.0
    %804 = vmatpush1.xpose.msra.mxu0 0.0
    %805 = vmatprep.subr.mxu0 0.0
    %806 = vmatpush1.xpose.msra.mxu0 0.0
    %807 = vmatprep.subr.mxu0 0.0
    %808 = vmatpush1.xpose.msra.mxu0 0.0
    %809 = vmatprep.subr.mxu0 0.0
    %810 = vmatpush1.xpose.msra.mxu0 0.0
    %811 = vmatprep.subr.mxu0 0.0
    %812 = vmatpush1.xpose.msra.mxu0 0.0
    %813 = vmatprep.subr.mxu0 0.0
    %814 = vmatpush1.xpose.msra.mxu0 0.0
    %815 = vmatprep.subr.mxu0 0.0
    %816 = vmatpush1.xpose.msra.mxu0 0.0
    %817 = vmatprep.subr.mxu0 0.0
    %818 = vmatpush1.xpose.msra.mxu0 0.0
    %819 = vmatprep.subr.mxu0 0.0
    %820 = vmatpush1.xpose.msra.mxu0 0.0
    %821 = vmatprep.subr.mxu0 0.0
    %822 = vmatpush1.xpose.msra.mxu0 0.0
    %823 = vmatprep.mubr.f32.mxu0 0.0
    %824 = vmatmul.mubr.f32.gmra.mrb[0].mxu0 %v755
    %v825 = vpop.f32.mrb[0].mxu0
    %v826 = vadd.f32 0.0, %v825
    %v827 = vpop.f32.mrb[0].mxu0
    %828 = vdwg.mxu0
    %829 = vrot.lane.b32.xlu0 %v275, 64
    %v830 = vpop.permute.xlu0 %829
    %v831 = vsel %vm298, %v275, 0
    %v833 = vsel %vm298, %v830, 0
    %835 = vmatprep.subr.mxu0 0.0
    %836 = vmatpush1.xpose.msra.mxu0 %v833
    %837 = vmatprep.subr.mxu0 0.0
    %838 = vmatpush1.xpose.msra.mxu0 0.0
    %839 = vmatprep.subr.mxu0 0.0
    %840 = vmatpush1.xpose.msra.mxu0 0.0
    %841 = vmatprep.subr.mxu0 0.0
    %842 = vmatpush1.xpose.msra.mxu0 0.0
    %843 = vmatprep.subr.mxu0 0.0
    %844 = vmatpush1.xpose.msra.mxu0 0.0
    %845 = vmatprep.subr.mxu0 0.0
    %846 = vmatpush1.xpose.msra.mxu0 0.0
    %847 = vmatprep.subr.mxu0 0.0
    %848 = vmatpush1.xpose.msra.mxu0 0.0
    %849 = vmatprep.subr.mxu0 0.0
    %850 = vmatpush1.xpose.msra.mxu0 0.0
    %851 = vmatprep.subr.mxu0 0.0
    %852 = vmatpush1.xpose.msra.mxu0 0.0
    %853 = vmatprep.subr.mxu0 0.0
    %854 = vmatpush1.xpose.msra.mxu0 0.0
    %855 = vmatprep.subr.mxu0 0.0
    %856 = vmatpush1.xpose.msra.mxu0 0.0
    %857 = vmatprep.subr.mxu0 0.0
    %858 = vmatpush1.xpose.msra.mxu0 0.0
    %859 = vmatprep.subr.mxu0 0.0
    %860 = vmatpush1.xpose.msra.mxu0 0.0
    %861 = vmatprep.subr.mxu0 0.0
    %862 = vmatpush1.xpose.msra.mxu0 0.0
    %863 = vmatprep.subr.mxu0 0.0
    %864 = vmatpush1.xpose.msra.mxu0 0.0
    %865 = vmatprep.subr.mxu0 0.0
    %866 = vmatpush1.xpose.msra.mxu0 0.0
    %867 = vmatprep.subr.mxu0 0.0
    %868 = vmatpush1.xpose.msra.mxu0 0.0
    %869 = vmatprep.subr.mxu0 0.0
    %870 = vmatpush1.xpose.msra.mxu0 0.0
    %871 = vmatprep.subr.mxu0 0.0
    %872 = vmatpush1.xpose.msra.mxu0 0.0
    %873 = vmatprep.subr.mxu0 0.0
    %874 = vmatpush1.xpose.msra.mxu0 0.0
    %875 = vmatprep.subr.mxu0 0.0
    %876 = vmatpush1.xpose.msra.mxu0 0.0
    %877 = vmatprep.subr.mxu0 0.0
    %878 = vmatpush1.xpose.msra.mxu0 0.0
    %879 = vmatprep.subr.mxu0 0.0
    %880 = vmatpush1.xpose.msra.mxu0 0.0
    %881 = vmatprep.subr.mxu0 0.0
    %882 = vmatpush1.xpose.msra.mxu0 0.0
    %883 = vmatprep.subr.mxu0 0.0
    %884 = vmatpush1.xpose.msra.mxu0 0.0
    %885 = vmatprep.subr.mxu0 0.0
    %886 = vmatpush1.xpose.msra.mxu0 0.0
    %887 = vmatprep.subr.mxu0 0.0
    %888 = vmatpush1.xpose.msra.mxu0 0.0
    %889 = vmatprep.subr.mxu0 0.0
    %890 = vmatpush1.xpose.msra.mxu0 0.0
    %891 = vmatprep.subr.mxu0 0.0
    %892 = vmatpush1.xpose.msra.mxu0 0.0
    %893 = vmatprep.subr.mxu0 0.0
    %894 = vmatpush1.xpose.msra.mxu0 0.0
    %895 = vmatprep.subr.mxu0 0.0
    %896 = vmatpush1.xpose.msra.mxu0 0.0
    %897 = vmatprep.subr.mxu0 0.0
    %898 = vmatpush1.xpose.msra.mxu0 0.0
    %899 = vmatprep.mubr.f32.mxu0 0.0
    %900 = vmatmul.mubr.f32.gmra.mrb[0].mxu0 %v831
    %v901 = vpop.f32.mrb[0].mxu0
    %v902 = vadd.f32 0.0, %v901
    %v903 = vpop.f32.mrb[0].mxu0
    %904 = vdwg.mxu0
    %v905 = vmul.f32 %v370, 0.25
    %v906 = vmul.f32 %v446, 0.25
    %v907 = vmul.f32 %v522, 0.25
    %v908 = vmul.f32 %v598, 0.25
    %v909 = vmul.f32 %v674, 0.25
    %v910 = vmul.f32 %v750, 0.25
    %v911 = vmul.f32 %v826, 0.25
    %v912 = vmul.f32 %v902, 0.25
    %v921 = vlaneseq
    %v922 = vshrl.u32 %v921, 7
    %v923 = vsub.s32 0, %v922
    %v924 = vrot.slane %v123, %v923
    %v925 = vlaneseq
    %v926 = vshrl.u32 %v925, 7
    %v927 = vsub.s32 0, %v926
    %v928 = vrot.slane %v124, %v927
    %v929 = vlaneseq
    %v930 = vshrl.u32 %v929, 7
    %v931 = vsub.s32 0, %v930
    %v932 = vrot.slane %v125, %v931
    %v933 = vlaneseq
    %v934 = vshrl.u32 %v933, 7
    %v935 = vsub.s32 0, %v934
    %v936 = vrot.slane %v126, %v935
    %v937 = vlaneseq
    %v938 = vshrl.u32 %v937, 7
    %v939 = vsub.s32 0, %v938
    %v940 = vrot.slane %v127, %v939
    %v941 = vlaneseq
    %v942 = vshrl.u32 %v941, 7
    %v943 = vsub.s32 0, %v942
    %v944 = vrot.slane %v128, %v943
    %v945 = vlaneseq
    %v946 = vshrl.u32 %v945, 7
    %v947 = vsub.s32 0, %v946
    %v948 = vrot.slane %v129, %v947
    %v949 = vlaneseq
    %v950 = vshrl.u32 %v949, 7
    %v951 = vsub.s32 0, %v950
    %v952 = vrot.slane %v130, %v951
    %v961 = vadd.f32 %v905, %v924
    %v962 = vadd.f32 %v906, %v928
    %v963 = vadd.f32 %v907, %v932
    %v964 = vadd.f32 %v908, %v936
    %v965 = vadd.f32 %v909, %v940
    %v966 = vadd.f32 %v910, %v944
    %v967 = vadd.f32 %v911, %v948
    %v968 = vadd.f32 %v912, %v952
    %vm969 = vcmask 64512
    %v970 = vsel %vm969, %v961, -inf
    %971 = vmax.xlane.f32.xlu0 %v970
    %v972 = vpop.xlane.xlu0 %971
    %v973 = vsel %vm969, %v962, -inf
    %974 = vmax.xlane.f32.xlu0 %v973
    %v975 = vpop.xlane.xlu0 %974
    %v976 = vsel %vm969, %v963, -inf
    %977 = vmax.xlane.f32.xlu0 %v976
    %v978 = vpop.xlane.xlu0 %977
    %v979 = vsel %vm969, %v964, -inf
    %980 = vmax.xlane.f32.xlu0 %v979
    %v981 = vpop.xlane.xlu0 %980
    %v982 = vsel %vm969, %v965, -inf
    %983 = vmax.xlane.f32.xlu0 %v982
    %v984 = vpop.xlane.xlu0 %983
    %v985 = vsel %vm969, %v966, -inf
    %986 = vmax.xlane.f32.xlu0 %v985
    %v987 = vpop.xlane.xlu0 %986
    %v988 = vsel %vm969, %v967, -inf
    %989 = vmax.xlane.f32.xlu0 %v988
    %v990 = vpop.xlane.xlu0 %989
    %v991 = vsel %vm969, %v968, -inf
    %992 = vmax.xlane.f32.xlu0 %v991
    %v993 = vpop.xlane.xlu0 %992
    %v994 = vsub.f32 %v961, %v972
    %v995 = vsub.f32 %v962, %v975
    %v996 = vsub.f32 %v963, %v978
    %v997 = vsub.f32 %v964, %v981
    %v998 = vsub.f32 %v965, %v984
    %v999 = vsub.f32 %v966, %v987
    %v1000 = vsub.f32 %v967, %v990
    %v1001 = vsub.f32 %v968, %v993
    %v1002 = vmul.f32 %v994, 1.442695
    %v1003 = vpow.pop %v1002
    %v1004 = vmul.f32 %v995, 1.442695
    %v1005 = vpow.pop %v1004
    %v1006 = vmul.f32 %v996, 1.442695
    %v1007 = vpow.pop %v1006
    %v1008 = vmul.f32 %v997, 1.442695
    %v1009 = vpow.pop %v1008
    %v1010 = vmul.f32 %v998, 1.442695
    %v1011 = vpow.pop %v1010
    %v1012 = vmul.f32 %v999, 1.442695
    %v1013 = vpow.pop %v1012
    %v1014 = vmul.f32 %v1000, 1.442695
    %v1015 = vpow.pop %v1014
    %v1016 = vmul.f32 %v1001, 1.442695
    %v1017 = vpow.pop %v1016
    %v1018 = vsel %vm969, %v1003, 0.0
    %1019 = vadd.xlane.f32.xlu0 %v1018
    %v1020 = vpop.xlane.xlu0 %1019
    %v1021 = vsel %vm969, %v1005, 0.0
    %1022 = vadd.xlane.f32.xlu0 %v1021
    %v1023 = vpop.xlane.xlu0 %1022
    %v1024 = vsel %vm969, %v1007, 0.0
    %1025 = vadd.xlane.f32.xlu0 %v1024
    %v1026 = vpop.xlane.xlu0 %1025
    %v1027 = vsel %vm969, %v1009, 0.0
    %1028 = vadd.xlane.f32.xlu0 %v1027
    %v1029 = vpop.xlane.xlu0 %1028
    %v1030 = vsel %vm969, %v1011, 0.0
    %1031 = vadd.xlane.f32.xlu0 %v1030
    %v1032 = vpop.xlane.xlu0 %1031
    %v1033 = vsel %vm969, %v1013, 0.0
    %1034 = vadd.xlane.f32.xlu0 %v1033
    %v1035 = vpop.xlane.xlu0 %1034
    %v1036 = vsel %vm969, %v1015, 0.0
    %1037 = vadd.xlane.f32.xlu0 %v1036
    %v1038 = vpop.xlane.xlu0 %1037
    %v1039 = vsel %vm969, %v1017, 0.0
    %1040 = vadd.xlane.f32.xlu0 %v1039
    %v1041 = vpop.xlane.xlu0 %1040
    %v1042 = vrcp.pop %v1020
    %v1043 = vrcp.pop %v1023
    %v1044 = vrcp.pop %v1026
    %v1045 = vrcp.pop %v1029
    %v1046 = vrcp.pop %v1032
    %v1047 = vrcp.pop %v1035
    %v1048 = vrcp.pop %v1038
    %v1049 = vrcp.pop %v1041
    %v1050 = vmul.f32 %v1003, %v1042
    %v1051 = vmul.f32 %v1005, %v1043
    %v1052 = vmul.f32 %v1007, %v1044
    %v1053 = vmul.f32 %v1009, %v1045
    %v1054 = vmul.f32 %v1011, %v1046
    %v1055 = vmul.f32 %v1013, %v1047
    %v1056 = vmul.f32 %v1015, %v1048
    %v1057 = vmul.f32 %v1017, %v1049
    %v1059 = vsel %vm969, %v1050, 0
    %1061 = vmatprep.subr.mxu0 0.0
    %1062 = vmatpush1.msra.mxu0 %v254
    %1063 = vmatprep.subr.mxu0 0.0
    %1064 = vmatpush1.msra.mxu0 0.0
    %1065 = vmatprep.subr.mxu0 0.0
    %1066 = vmatpush1.msra.mxu0 0.0
    %1067 = vmatprep.subr.mxu0 0.0
    %1068 = vmatpush1.msra.mxu0 0.0
    %1069 = vmatprep.subr.mxu0 0.0
    %1070 = vmatpush1.msra.mxu0 0.0
    %1071 = vmatprep.subr.mxu0 0.0
    %1072 = vmatpush1.msra.mxu0 0.0
    %1073 = vmatprep.subr.mxu0 0.0
    %1074 = vmatpush1.msra.mxu0 0.0
    %1075 = vmatprep.subr.mxu0 0.0
    %1076 = vmatpush1.msra.mxu0 0.0
    %1077 = vmatprep.subr.mxu0 0.0
    %1078 = vmatpush1.msra.mxu0 0.0
    %1079 = vmatprep.subr.mxu0 0.0
    %1080 = vmatpush1.msra.mxu0 0.0
    %1081 = vmatprep.subr.mxu0 0.0
    %1082 = vmatpush1.msra.mxu0 0.0
    %1083 = vmatprep.subr.mxu0 0.0
    %1084 = vmatpush1.msra.mxu0 0.0
    %1085 = vmatprep.subr.mxu0 0.0
    %1086 = vmatpush1.msra.mxu0 0.0
    %1087 = vmatprep.subr.mxu0 0.0
    %1088 = vmatpush1.msra.mxu0 0.0
    %1089 = vmatprep.subr.mxu0 0.0
    %1090 = vmatpush1.msra.mxu0 0.0
    %1091 = vmatprep.subr.mxu0 0.0
    %1092 = vmatpush1.msra.mxu0 0.0
    %1093 = vmatprep.subr.mxu0 0.0
    %1094 = vmatpush1.msra.mxu0 0.0
    %1095 = vmatprep.subr.mxu0 0.0
    %1096 = vmatpush1.msra.mxu0 0.0
    %1097 = vmatprep.subr.mxu0 0.0
    %1098 = vmatpush1.msra.mxu0 0.0
    %1099 = vmatprep.subr.mxu0 0.0
    %1100 = vmatpush1.msra.mxu0 0.0
    %1101 = vmatprep.subr.mxu0 0.0
    %1102 = vmatpush1.msra.mxu0 0.0
    %1103 = vmatprep.subr.mxu0 0.0
    %1104 = vmatpush1.msra.mxu0 0.0
    %1105 = vmatprep.subr.mxu0 0.0
    %1106 = vmatpush1.msra.mxu0 0.0
    %1107 = vmatprep.subr.mxu0 0.0
    %1108 = vmatpush1.msra.mxu0 0.0
    %1109 = vmatprep.subr.mxu0 0.0
    %1110 = vmatpush1.msra.mxu0 0.0
    %1111 = vmatprep.subr.mxu0 0.0
    %1112 = vmatpush1.msra.mxu0 0.0
    %1113 = vmatprep.subr.mxu0 0.0
    %1114 = vmatpush1.msra.mxu0 0.0
    %1115 = vmatprep.subr.mxu0 0.0
    %1116 = vmatpush1.msra.mxu0 0.0
    %1117 = vmatprep.subr.mxu0 0.0
    %1118 = vmatpush1.msra.mxu0 0.0
    %1119 = vmatprep.subr.mxu0 0.0
    %1120 = vmatpush1.msra.mxu0 0.0
    %1121 = vmatprep.subr.mxu0 0.0
    %1122 = vmatpush1.msra.mxu0 0.0
    %1123 = vmatprep.subr.mxu0 0.0
    %1124 = vmatpush1.msra.mxu0 0.0
    %1125 = vmatprep.mubr.f32.mxu0 0.0
    %1126 = vmatmul.mubr.f32.gmra.mrb[0].mxu0 %v1059
    %v1127 = vpop.f32.mrb[0].mxu0
    %v1128 = vadd.f32 0.0, %v1127
    %v1129 = vpop.f32.mrb[0].mxu0
    %1130 = vdwg.mxu0
    %v1132 = vsel %vm969, %v1051, 0
    %1134 = vmatprep.subr.mxu0 0.0
    %1135 = vmatpush1.msra.mxu0 %v278
    %1136 = vmatprep.subr.mxu0 0.0
    %1137 = vmatpush1.msra.mxu0 0.0
    %1138 = vmatprep.subr.mxu0 0.0
    %1139 = vmatpush1.msra.mxu0 0.0
    %1140 = vmatprep.subr.mxu0 0.0
    %1141 = vmatpush1.msra.mxu0 0.0
    %1142 = vmatprep.subr.mxu0 0.0
    %1143 = vmatpush1.msra.mxu0 0.0
    %1144 = vmatprep.subr.mxu0 0.0
    %1145 = vmatpush1.msra.mxu0 0.0
    %1146 = vmatprep.subr.mxu0 0.0
    %1147 = vmatpush1.msra.mxu0 0.0
    %1148 = vmatprep.subr.mxu0 0.0
    %1149 = vmatpush1.msra.mxu0 0.0
    %1150 = vmatprep.subr.mxu0 0.0
    %1151 = vmatpush1.msra.mxu0 0.0
    %1152 = vmatprep.subr.mxu0 0.0
    %1153 = vmatpush1.msra.mxu0 0.0
    %1154 = vmatprep.subr.mxu0 0.0
    %1155 = vmatpush1.msra.mxu0 0.0
    %1156 = vmatprep.subr.mxu0 0.0
    %1157 = vmatpush1.msra.mxu0 0.0
    %1158 = vmatprep.subr.mxu0 0.0
    %1159 = vmatpush1.msra.mxu0 0.0
    %1160 = vmatprep.subr.mxu0 0.0
    %1161 = vmatpush1.msra.mxu0 0.0
    %1162 = vmatprep.subr.mxu0 0.0
    %1163 = vmatpush1.msra.mxu0 0.0
    %1164 = vmatprep.subr.mxu0 0.0
    %1165 = vmatpush1.msra.mxu0 0.0
    %1166 = vmatprep.subr.mxu0 0.0
    %1167 = vmatpush1.msra.mxu0 0.0
    %1168 = vmatprep.subr.mxu0 0.0
    %1169 = vmatpush1.msra.mxu0 0.0
    %1170 = vmatprep.subr.mxu0 0.0
    %1171 = vmatpush1.msra.mxu0 0.0
    %1172 = vmatprep.subr.mxu0 0.0
    %1173 = vmatpush1.msra.mxu0 0.0
    %1174 = vmatprep.subr.mxu0 0.0
    %1175 = vmatpush1.msra.mxu0 0.0
    %1176 = vmatprep.subr.mxu0 0.0
    %1177 = vmatpush1.msra.mxu0 0.0
    %1178 = vmatprep.subr.mxu0 0.0
    %1179 = vmatpush1.msra.mxu0 0.0
    %1180 = vmatprep.subr.mxu0 0.0
    %1181 = vmatpush1.msra.mxu0 0.0
    %1182 = vmatprep.subr.mxu0 0.0
    %1183 = vmatpush1.msra.mxu0 0.0
    %1184 = vmatprep.subr.mxu0 0.0
    %1185 = vmatpush1.msra.mxu0 0.0
    %1186 = vmatprep.subr.mxu0 0.0
    %1187 = vmatpush1.msra.mxu0 0.0
    %1188 = vmatprep.subr.mxu0 0.0
    %1189 = vmatpush1.msra.mxu0 0.0
    %1190 = vmatprep.subr.mxu0 0.0
    %1191 = vmatpush1.msra.mxu0 0.0
    %1192 = vmatprep.subr.mxu0 0.0
    %1193 = vmatpush1.msra.mxu0 0.0
    %1194 = vmatprep.subr.mxu0 0.0
    %1195 = vmatpush1.msra.mxu0 0.0
    %1196 = vmatprep.subr.mxu0 0.0
    %1197 = vmatpush1.msra.mxu0 0.0
    %1198 = vmatprep.mubr.f32.mxu0 0.0
    %1199 = vmatmul.mubr.f32.gmra.mrb[0].mxu0 %v1132
    %v1200 = vpop.f32.mrb[0].mxu0
    %v1201 = vadd.f32 0.0, %v1200
    %v1202 = vpop.f32.mrb[0].mxu0
    %1203 = vdwg.mxu0
    %v1205 = vsel %vm969, %v1052, 0
    %1207 = vmatprep.subr.mxu0 0.0
    %1208 = vmatpush1.msra.mxu0 %v281
    %1209 = vmatprep.subr.mxu0 0.0
    %1210 = vmatpush1.msra.mxu0 0.0
    %1211 = vmatprep.subr.mxu0 0.0
    %1212 = vmatpush1.msra.mxu0 0.0
    %1213 = vmatprep.subr.mxu0 0.0
    %1214 = vmatpush1.msra.mxu0 0.0
    %1215 = vmatprep.subr.mxu0 0.0
    %1216 = vmatpush1.msra.mxu0 0.0
    %1217 = vmatprep.subr.mxu0 0.0
    %1218 = vmatpush1.msra.mxu0 0.0
    %1219 = vmatprep.subr.mxu0 0.0
    %1220 = vmatpush1.msra.mxu0 0.0
    %1221 = vmatprep.subr.mxu0 0.0
    %1222 = vmatpush1.msra.mxu0 0.0
    %1223 = vmatprep.subr.mxu0 0.0
    %1224 = vmatpush1.msra.mxu0 0.0
    %1225 = vmatprep.subr.mxu0 0.0
    %1226 = vmatpush1.msra.mxu0 0.0
    %1227 = vmatprep.subr.mxu0 0.0
    %1228 = vmatpush1.msra.mxu0 0.0
    %1229 = vmatprep.subr.mxu0 0.0
    %1230 = vmatpush1.msra.mxu0 0.0
    %1231 = vmatprep.subr.mxu0 0.0
    %1232 = vmatpush1.msra.mxu0 0.0
    %1233 = vmatprep.subr.mxu0 0.0
    %1234 = vmatpush1.msra.mxu0 0.0
    %1235 = vmatprep.subr.mxu0 0.0
    %1236 = vmatpush1.msra.mxu0 0.0
    %1237 = vmatprep.subr.mxu0 0.0
    %1238 = vmatpush1.msra.mxu0 0.0
    %1239 = vmatprep.subr.mxu0 0.0
    %1240 = vmatpush1.msra.mxu0 0.0
    %1241 = vmatprep.subr.mxu0 0.0
    %1242 = vmatpush1.msra.mxu0 0.0
    %1243 = vmatprep.subr.mxu0 0.0
    %1244 = vmatpush1.msra.mxu0 0.0
    %1245 = vmatprep.subr.mxu0 0.0
    %1246 = vmatpush1.msra.mxu0 0.0
    %1247 = vmatprep.subr.mxu0 0.0
    %1248 = vmatpush1.msra.mxu0 0.0
    %1249 = vmatprep.subr.mxu0 0.0
    %1250 = vmatpush1.msra.mxu0 0.0
    %1251 = vmatprep.subr.mxu0 0.0
    %1252 = vmatpush1.msra.mxu0 0.0
    %1253 = vmatprep.subr.mxu0 0.0
    %1254 = vmatpush1.msra.mxu0 0.0
    %1255 = vmatprep.subr.mxu0 0.0
    %1256 = vmatpush1.msra.mxu0 0.0
    %1257 = vmatprep.subr.mxu0 0.0
    %1258 = vmatpush1.msra.mxu0 0.0
    %1259 = vmatprep.subr.mxu0 0.0
    %1260 = vmatpush1.msra.mxu0 0.0
    %1261 = vmatprep.subr.mxu0 0.0
    %1262 = vmatpush1.msra.mxu0 0.0
    %1263 = vmatprep.subr.mxu0 0.0
    %1264 = vmatpush1.msra.mxu0 0.0
    %1265 = vmatprep.subr.mxu0 0.0
    %1266 = vmatpush1.msra.mxu0 0.0
    %1267 = vmatprep.subr.mxu0 0.0
    %1268 = vmatpush1.msra.mxu0 0.0
    %1269 = vmatprep.subr.mxu0 0.0
    %1270 = vmatpush1.msra.mxu0 0.0
    %1271 = vmatprep.mubr.f32.mxu0 0.0
    %1272 = vmatmul.mubr.f32.gmra.mrb[0].mxu0 %v1205
    %v1273 = vpop.f32.mrb[0].mxu0
    %v1274 = vadd.f32 0.0, %v1273
    %v1275 = vpop.f32.mrb[0].mxu0
    %1276 = vdwg.mxu0
    %v1278 = vsel %vm969, %v1053, 0
    %1280 = vmatprep.subr.mxu0 0.0
    %1281 = vmatpush1.msra.mxu0 %v284
    %1282 = vmatprep.subr.mxu0 0.0
    %1283 = vmatpush1.msra.mxu0 0.0
    %1284 = vmatprep.subr.mxu0 0.0
    %1285 = vmatpush1.msra.mxu0 0.0
    %1286 = vmatprep.subr.mxu0 0.0
    %1287 = vmatpush1.msra.mxu0 0.0
    %1288 = vmatprep.subr.mxu0 0.0
    %1289 = vmatpush1.msra.mxu0 0.0
    %1290 = vmatprep.subr.mxu0 0.0
    %1291 = vmatpush1.msra.mxu0 0.0
    %1292 = vmatprep.subr.mxu0 0.0
    %1293 = vmatpush1.msra.mxu0 0.0
    %1294 = vmatprep.subr.mxu0 0.0
    %1295 = vmatpush1.msra.mxu0 0.0
    %1296 = vmatprep.subr.mxu0 0.0
    %1297 = vmatpush1.msra.mxu0 0.0
    %1298 = vmatprep.subr.mxu0 0.0
    %1299 = vmatpush1.msra.mxu0 0.0
    %1300 = vmatprep.subr.mxu0 0.0
    %1301 = vmatpush1.msra.mxu0 0.0
    %1302 = vmatprep.subr.mxu0 0.0
    %1303 = vmatpush1.msra.mxu0 0.0
    %1304 = vmatprep.subr.mxu0 0.0
    %1305 = vmatpush1.msra.mxu0 0.0
    %1306 = vmatprep.subr.mxu0 0.0
    %1307 = vmatpush1.msra.mxu0 0.0
    %1308 = vmatprep.subr.mxu0 0.0
    %1309 = vmatpush1.msra.mxu0 0.0
    %1310 = vmatprep.subr.mxu0 0.0
    %1311 = vmatpush1.msra.mxu0 0.0
    %1312 = vmatprep.subr.mxu0 0.0
    %1313 = vmatpush1.msra.mxu0 0.0
    %1314 = vmatprep.subr.mxu0 0.0
    %1315 = vmatpush1.msra.mxu0 0.0
    %1316 = vmatprep.subr.mxu0 0.0
    %1317 = vmatpush1.msra.mxu0 0.0
    %1318 = vmatprep.subr.mxu0 0.0
    %1319 = vmatpush1.msra.mxu0 0.0
    %1320 = vmatprep.subr.mxu0 0.0
    %1321 = vmatpush1.msra.mxu0 0.0
    %1322 = vmatprep.subr.mxu0 0.0
    %1323 = vmatpush1.msra.mxu0 0.0
    %1324 = vmatprep.subr.mxu0 0.0
    %1325 = vmatpush1.msra.mxu0 0.0
    %1326 = vmatprep.subr.mxu0 0.0
    %1327 = vmatpush1.msra.mxu0 0.0
    %1328 = vmatprep.subr.mxu0 0.0
    %1329 = vmatpush1.msra.mxu0 0.0
    %1330 = vmatprep.subr.mxu0 0.0
    %1331 = vmatpush1.msra.mxu0 0.0
    %1332 = vmatprep.subr.mxu0 0.0
    %1333 = vmatpush1.msra.mxu0 0.0
    %1334 = vmatprep.subr.mxu0 0.0
    %1335 = vmatpush1.msra.mxu0 0.0
    %1336 = vmatprep.subr.mxu0 0.0
    %1337 = vmatpush1.msra.mxu0 0.0
    %1338 = vmatprep.subr.mxu0 0.0
    %1339 = vmatpush1.msra.mxu0 0.0
    %1340 = vmatprep.subr.mxu0 0.0
    %1341 = vmatpush1.msra.mxu0 0.0
    %1342 = vmatprep.subr.mxu0 0.0
    %1343 = vmatpush1.msra.mxu0 0.0
    %1344 = vmatprep.mubr.f32.mxu0 0.0
    %1345 = vmatmul.mubr.f32.gmra.mrb[0].mxu0 %v1278
    %v1346 = vpop.f32.mrb[0].mxu0
    %v1347 = vadd.f32 0.0, %v1346
    %v1348 = vpop.f32.mrb[0].mxu0
    %1349 = vdwg.mxu0
    %v1351 = vsel %vm969, %v1054, 0
    %1353 = vmatprep.subr.mxu0 0.0
    %1354 = vmatpush1.msra.mxu0 %v260
    %1355 = vmatprep.subr.mxu0 0.0
    %1356 = vmatpush1.msra.mxu0 0.0
    %1357 = vmatprep.subr.mxu0 0.0
    %1358 = vmatpush1.msra.mxu0 0.0
    %1359 = vmatprep.subr.mxu0 0.0
    %1360 = vmatpush1.msra.mxu0 0.0
    %1361 = vmatprep.subr.mxu0 0.0
    %1362 = vmatpush1.msra.mxu0 0.0
    %1363 = vmatprep.subr.mxu0 0.0
    %1364 = vmatpush1.msra.mxu0 0.0
    %1365 = vmatprep.subr.mxu0 0.0
    %1366 = vmatpush1.msra.mxu0 0.0
    %1367 = vmatprep.subr.mxu0 0.0
    %1368 = vmatpush1.msra.mxu0 0.0
    %1369 = vmatprep.subr.mxu0 0.0
    %1370 = vmatpush1.msra.mxu0 0.0
    %1371 = vmatprep.subr.mxu0 0.0
    %1372 = vmatpush1.msra.mxu0 0.0
    %1373 = vmatprep.subr.mxu0 0.0
    %1374 = vmatpush1.msra.mxu0 0.0
    %1375 = vmatprep.subr.mxu0 0.0
    %1376 = vmatpush1.msra.mxu0 0.0
    %1377 = vmatprep.subr.mxu0 0.0
    %1378 = vmatpush1.msra.mxu0 0.0
    %1379 = vmatprep.subr.mxu0 0.0
    %1380 = vmatpush1.msra.mxu0 0.0
    %1381 = vmatprep.subr.mxu0 0.0
    %1382 = vmatpush1.msra.mxu0 0.0
    %1383 = vmatprep.subr.mxu0 0.0
    %1384 = vmatpush1.msra.mxu0 0.0
    %1385 = vmatprep.subr.mxu0 0.0
    %1386 = vmatpush1.msra.mxu0 0.0
    %1387 = vmatprep.subr.mxu0 0.0
    %1388 = vmatpush1.msra.mxu0 0.0
    %1389 = vmatprep.subr.mxu0 0.0
    %1390 = vmatpush1.msra.mxu0 0.0
    %1391 = vmatprep.subr.mxu0 0.0
    %1392 = vmatpush1.msra.mxu0 0.0
    %1393 = vmatprep.subr.mxu0 0.0
    %1394 = vmatpush1.msra.mxu0 0.0
    %1395 = vmatprep.subr.mxu0 0.0
    %1396 = vmatpush1.msra.mxu0 0.0
    %1397 = vmatprep.subr.mxu0 0.0
    %1398 = vmatpush1.msra.mxu0 0.0
    %1399 = vmatprep.subr.mxu0 0.0
    %1400 = vmatpush1.msra.mxu0 0.0
    %1401 = vmatprep.subr.mxu0 0.0
    %1402 = vmatpush1.msra.mxu0 0.0
    %1403 = vmatprep.subr.mxu0 0.0
    %1404 = vmatpush1.msra.mxu0 0.0
    %1405 = vmatprep.subr.mxu0 0.0
    %1406 = vmatpush1.msra.mxu0 0.0
    %1407 = vmatprep.subr.mxu0 0.0
    %1408 = vmatpush1.msra.mxu0 0.0
    %1409 = vmatprep.subr.mxu0 0.0
    %1410 = vmatpush1.msra.mxu0 0.0
    %1411 = vmatprep.subr.mxu0 0.0
    %1412 = vmatpush1.msra.mxu0 0.0
    %1413 = vmatprep.subr.mxu0 0.0
    %1414 = vmatpush1.msra.mxu0 0.0
    %1415 = vmatprep.subr.mxu0 0.0
    %1416 = vmatpush1.msra.mxu0 0.0
    %1417 = vmatprep.mubr.f32.mxu0 0.0
    %1418 = vmatmul.mubr.f32.gmra.mrb[0].mxu0 %v1351
    %v1419 = vpop.f32.mrb[0].mxu0
    %v1420 = vadd.f32 0.0, %v1419
    %v1421 = vpop.f32.mrb[0].mxu0
    %1422 = vdwg.mxu0
    %v1424 = vsel %vm969, %v1055, 0
    %1426 = vmatprep.subr.mxu0 0.0
    %1427 = vmatpush1.msra.mxu0 %v288
    %1428 = vmatprep.subr.mxu0 0.0
    %1429 = vmatpush1.msra.mxu0 0.0
    %1430 = vmatprep.subr.mxu0 0.0
    %1431 = vmatpush1.msra.mxu0 0.0
    %1432 = vmatprep.subr.mxu0 0.0
    %1433 = vmatpush1.msra.mxu0 0.0
    %1434 = vmatprep.subr.mxu0 0.0
    %1435 = vmatpush1.msra.mxu0 0.0
    %1436 = vmatprep.subr.mxu0 0.0
    %1437 = vmatpush1.msra.mxu0 0.0
    %1438 = vmatprep.subr.mxu0 0.0
    %1439 = vmatpush1.msra.mxu0 0.0
    %1440 = vmatprep.subr.mxu0 0.0
    %1441 = vmatpush1.msra.mxu0 0.0
    %1442 = vmatprep.subr.mxu0 0.0
    %1443 = vmatpush1.msra.mxu0 0.0
    %1444 = vmatprep.subr.mxu0 0.0
    %1445 = vmatpush1.msra.mxu0 0.0
    %1446 = vmatprep.subr.mxu0 0.0
    %1447 = vmatpush1.msra.mxu0 0.0
    %1448 = vmatprep.subr.mxu0 0.0
    %1449 = vmatpush1.msra.mxu0 0.0
    %1450 = vmatprep.subr.mxu0 0.0
    %1451 = vmatpush1.msra.mxu0 0.0
    %1452 = vmatprep.subr.mxu0 0.0
    %1453 = vmatpush1.msra.mxu0 0.0
    %1454 = vmatprep.subr.mxu0 0.0
    %1455 = vmatpush1.msra.mxu0 0.0
    %1456 = vmatprep.subr.mxu0 0.0
    %1457 = vmatpush1.msra.mxu0 0.0
    %1458 = vmatprep.subr.mxu0 0.0
    %1459 = vmatpush1.msra.mxu0 0.0
    %1460 = vmatprep.subr.mxu0 0.0
    %1461 = vmatpush1.msra.mxu0 0.0
    %1462 = vmatprep.subr.mxu0 0.0
    %1463 = vmatpush1.msra.mxu0 0.0
    %1464 = vmatprep.subr.mxu0 0.0
    %1465 = vmatpush1.msra.mxu0 0.0
    %1466 = vmatprep.subr.mxu0 0.0
    %1467 = vmatpush1.msra.mxu0 0.0
    %1468 = vmatprep.subr.mxu0 0.0
    %1469 = vmatpush1.msra.mxu0 0.0
    %1470 = vmatprep.subr.mxu0 0.0
    %1471 = vmatpush1.msra.mxu0 0.0
    %1472 = vmatprep.subr.mxu0 0.0
    %1473 = vmatpush1.msra.mxu0 0.0
    %1474 = vmatprep.subr.mxu0 0.0
    %1475 = vmatpush1.msra.mxu0 0.0
    %1476 = vmatprep.subr.mxu0 0.0
    %1477 = vmatpush1.msra.mxu0 0.0
    %1478 = vmatprep.subr.mxu0 0.0
    %1479 = vmatpush1.msra.mxu0 0.0
    %1480 = vmatprep.subr.mxu0 0.0
    %1481 = vmatpush1.msra.mxu0 0.0
    %1482 = vmatprep.subr.mxu0 0.0
    %1483 = vmatpush1.msra.mxu0 0.0
    %1484 = vmatprep.subr.mxu0 0.0
    %1485 = vmatpush1.msra.mxu0 0.0
    %1486 = vmatprep.subr.mxu0 0.0
    %1487 = vmatpush1.msra.mxu0 0.0
    %1488 = vmatprep.subr.mxu0 0.0
    %1489 = vmatpush1.msra.mxu0 0.0
    %1490 = vmatprep.mubr.f32.mxu0 0.0
    %1491 = vmatmul.mubr.f32.gmra.mrb[0].mxu0 %v1424
    %v1492 = vpop.f32.mrb[0].mxu0
    %v1493 = vadd.f32 0.0, %v1492
    %v1494 = vpop.f32.mrb[0].mxu0
    %1495 = vdwg.mxu0
    %v1497 = vsel %vm969, %v1056, 0
    %1499 = vmatprep.subr.mxu0 0.0
    %1500 = vmatpush1.msra.mxu0 %v291
    %1501 = vmatprep.subr.mxu0 0.0
    %1502 = vmatpush1.msra.mxu0 0.0
    %1503 = vmatprep.subr.mxu0 0.0
    %1504 = vmatpush1.msra.mxu0 0.0
    %1505 = vmatprep.subr.mxu0 0.0
    %1506 = vmatpush1.msra.mxu0 0.0
    %1507 = vmatprep.subr.mxu0 0.0
    %1508 = vmatpush1.msra.mxu0 0.0
    %1509 = vmatprep.subr.mxu0 0.0
    %1510 = vmatpush1.msra.mxu0 0.0
    %1511 = vmatprep.subr.mxu0 0.0
    %1512 = vmatpush1.msra.mxu0 0.0
    %1513 = vmatprep.subr.mxu0 0.0
    %1514 = vmatpush1.msra.mxu0 0.0
    %1515 = vmatprep.subr.mxu0 0.0
    %1516 = vmatpush1.msra.mxu0 0.0
    %1517 = vmatprep.subr.mxu0 0.0
    %1518 = vmatpush1.msra.mxu0 0.0
    %1519 = vmatprep.subr.mxu0 0.0
    %1520 = vmatpush1.msra.mxu0 0.0
    %1521 = vmatprep.subr.mxu0 0.0
    %1522 = vmatpush1.msra.mxu0 0.0
    %1523 = vmatprep.subr.mxu0 0.0
    %1524 = vmatpush1.msra.mxu0 0.0
    %1525 = vmatprep.subr.mxu0 0.0
    %1526 = vmatpush1.msra.mxu0 0.0
    %1527 = vmatprep.subr.mxu0 0.0
    %1528 = vmatpush1.msra.mxu0 0.0
    %1529 = vmatprep.subr.mxu0 0.0
    %1530 = vmatpush1.msra.mxu0 0.0
    %1531 = vmatprep.subr.mxu0 0.0
    %1532 = vmatpush1.msra.mxu0 0.0
    %1533 = vmatprep.subr.mxu0 0.0
    %1534 = vmatpush1.msra.mxu0 0.0
    %1535 = vmatprep.subr.mxu0 0.0
    %1536 = vmatpush1.msra.mxu0 0.0
    %1537 = vmatprep.subr.mxu0 0.0
    %1538 = vmatpush1.msra.mxu0 0.0
    %1539 = vmatprep.subr.mxu0 0.0
    %1540 = vmatpush1.msra.mxu0 0.0
    %1541 = vmatprep.subr.mxu0 0.0
    %1542 = vmatpush1.msra.mxu0 0.0
    %1543 = vmatprep.subr.mxu0 0.0
    %1544 = vmatpush1.msra.mxu0 0.0
    %1545 = vmatprep.subr.mxu0 0.0
    %1546 = vmatpush1.msra.mxu0 0.0
    %1547 = vmatprep.subr.mxu0 0.0
    %1548 = vmatpush1.msra.mxu0 0.0
    %1549 = vmatprep.subr.mxu0 0.0
    %1550 = vmatpush1.msra.mxu0 0.0
    %1551 = vmatprep.subr.mxu0 0.0
    %1552 = vmatpush1.msra.mxu0 0.0
    %1553 = vmatprep.subr.mxu0 0.0
    %1554 = vmatpush1.msra.mxu0 0.0
    %1555 = vmatprep.subr.mxu0 0.0
    %1556 = vmatpush1.msra.mxu0 0.0
    %1557 = vmatprep.subr.mxu0 0.0
    %1558 = vmatpush1.msra.mxu0 0.0
    %1559 = vmatprep.subr.mxu0 0.0
    %1560 = vmatpush1.msra.mxu0 0.0
    %1561 = vmatprep.subr.mxu0 0.0
    %1562 = vmatpush1.msra.mxu0 0.0
    %1563 = vmatprep.mubr.f32.mxu0 0.0
    %1564 = vmatmul.mubr.f32.gmra.mrb[0].mxu0 %v1497
    %v1565 = vpop.f32.mrb[0].mxu0
    %v1566 = vadd.f32 0.0, %v1565
    %v1567 = vpop.f32.mrb[0].mxu0
    %1568 = vdwg.mxu0
    %v1570 = vsel %vm969, %v1057, 0
    %1572 = vmatprep.subr.mxu0 0.0
    %1573 = vmatpush1.msra.mxu0 %v294
    %1574 = vmatprep.subr.mxu0 0.0
    %1575 = vmatpush1.msra.mxu0 0.0
    %1576 = vmatprep.subr.mxu0 0.0
    %1577 = vmatpush1.msra.mxu0 0.0
    %1578 = vmatprep.subr.mxu0 0.0
    %1579 = vmatpush1.msra.mxu0 0.0
    %1580 = vmatprep.subr.mxu0 0.0
    %1581 = vmatpush1.msra.mxu0 0.0
    %1582 = vmatprep.subr.mxu0 0.0
    %1583 = vmatpush1.msra.mxu0 0.0
    %1584 = vmatprep.subr.mxu0 0.0
    %1585 = vmatpush1.msra.mxu0 0.0
    %1586 = vmatprep.subr.mxu0 0.0
    %1587 = vmatpush1.msra.mxu0 0.0
    %1588 = vmatprep.subr.mxu0 0.0
    %1589 = vmatpush1.msra.mxu0 0.0
    %1590 = vmatprep.subr.mxu0 0.0
    %1591 = vmatpush1.msra.mxu0 0.0
    %1592 = vmatprep.subr.mxu0 0.0
    %1593 = vmatpush1.msra.mxu0 0.0
    %1594 = vmatprep.subr.mxu0 0.0
    %1595 = vmatpush1.msra.mxu0 0.0
    %1596 = vmatprep.subr.mxu0 0.0
    %1597 = vmatpush1.msra.mxu0 0.0
    %1598 = vmatprep.subr.mxu0 0.0
    %1599 = vmatpush1.msra.mxu0 0.0
    %1600 = vmatprep.subr.mxu0 0.0
    %1601 = vmatpush1.msra.mxu0 0.0
    %1602 = vmatprep.subr.mxu0 0.0
    %1603 = vmatpush1.msra.mxu0 0.0
    %1604 = vmatprep.subr.mxu0 0.0
    %1605 = vmatpush1.msra.mxu0 0.0
    %1606 = vmatprep.subr.mxu0 0.0
    %1607 = vmatpush1.msra.mxu0 0.0
    %1608 = vmatprep.subr.mxu0 0.0
    %1609 = vmatpush1.msra.mxu0 0.0
    %1610 = vmatprep.subr.mxu0 0.0
    %1611 = vmatpush1.msra.mxu0 0.0
    %1612 = vmatprep.subr.mxu0 0.0
    %1613 = vmatpush1.msra.mxu0 0.0
    %1614 = vmatprep.subr.mxu0 0.0
    %1615 = vmatpush1.msra.mxu0 0.0
    %1616 = vmatprep.subr.mxu0 0.0
    %1617 = vmatpush1.msra.mxu0 0.0
    %1618 = vmatprep.subr.mxu0 0.0
    %1619 = vmatpush1.msra.mxu0 0.0
    %1620 = vmatprep.subr.mxu0 0.0
    %1621 = vmatpush1.msra.mxu0 0.0
    %1622 = vmatprep.subr.mxu0 0.0
    %1623 = vmatpush1.msra.mxu0 0.0
    %1624 = vmatprep.subr.mxu0 0.0
    %1625 = vmatpush1.msra.mxu0 0.0
    %1626 = vmatprep.subr.mxu0 0.0
    %1627 = vmatpush1.msra.mxu0 0.0
    %1628 = vmatprep.subr.mxu0 0.0
    %1629 = vmatpush1.msra.mxu0 0.0
    %1630 = vmatprep.subr.mxu0 0.0
    %1631 = vmatpush1.msra.mxu0 0.0
    %1632 = vmatprep.subr.mxu0 0.0
    %1633 = vmatpush1.msra.mxu0 0.0
    %1634 = vmatprep.subr.mxu0 0.0
    %1635 = vmatpush1.msra.mxu0 0.0
    %1636 = vmatprep.mubr.f32.mxu0 0.0
    %1637 = vmatmul.mubr.f32.gmra.mrb[0].mxu0 %v1570
    %v1638 = vpop.f32.mrb[0].mxu0
    %v1639 = vadd.f32 0.0, %v1638
    %v1640 = vpop.f32.mrb[0].mxu0
    %1641 = vdwg.mxu0
    %1643 = vrot.lane.b32.xlu0 %v1201, 16
    %v1644 = vpop.permute.xlu0 %1643
    %1647 = vrot.lane.b32.xlu0 %v1274, 32
    %v1648 = vpop.permute.xlu0 %1647
    %1651 = vrot.lane.b32.xlu0 %v1347, 48
    %v1652 = vpop.permute.xlu0 %1651
    %v1654 = vsel %vm298, %v1128, %v1644
    %v1655 = vsel %vm41, %v1654, %v1648
    %vm1656 = vcmask 392192
    %v1657 = vsel %vm1656, %v1655, %v1652
    %1659 = vrot.lane.b32.xlu0 %v1493, 16
    %v1660 = vpop.permute.xlu0 %1659
    %1663 = vrot.lane.b32.xlu0 %v1566, 32
    %v1664 = vpop.permute.xlu0 %1663
    %1667 = vrot.lane.b32.xlu0 %v1639, 48
    %v1668 = vpop.permute.xlu0 %1667
    %v1670 = vsel %vm298, %v1420, %v1660
    %v1671 = vsel %vm41, %v1670, %v1664
    %v1672 = vsel %vm1656, %v1671, %v1668
    %v1673 = vlaneseq
    %v1674 = vshrl.u32 %v1673, 7
    %v1675 = vsub.s32 0, %v1674
    %v1676 = vrot.slane %v162, %v1675
    %vm1677 = vcmask 523264
    %v1679 = vsel %vm1677, %v1657, 0
    %v1682 = vsel %vm1677, %v1672, 0
    %1684 = vmatprep.subr.mxu0 0.0
    %1685 = vmatpush1.msra.mxu0 %v146
    %1686 = vmatprep.subr.mxu0 0.0
    %1687 = vmatpush1.msra.mxu0 %v147
    %1688 = vmatprep.subr.mxu0 0.0
    %1689 = vmatpush1.msra.mxu0 %v148
    %1690 = vmatprep.subr.mxu0 0.0
    %1691 = vmatpush1.msra.mxu0 %v149
    %1692 = vmatprep.subr.mxu0 0.0
    %1693 = vmatpush1.msra.mxu0 %v150
    %1694 = vmatprep.subr.mxu0 0.0
    %1695 = vmatpush1.msra.mxu0 %v151
    %1696 = vmatprep.subr.mxu0 0.0
    %1697 = vmatpush1.msra.mxu0 %v152
    %1698 = vmatprep.subr.mxu0 0.0
    %1699 = vmatpush1.msra.mxu0 %v153
    %1700 = vmatprep.subr.mxu0 0.0
    %1701 = vmatpush1.msra.mxu0 0.0
    %1702 = vmatprep.subr.mxu0 0.0
    %1703 = vmatpush1.msra.mxu0 0.0
    %1704 = vmatprep.subr.mxu0 0.0
    %1705 = vmatpush1.msra.mxu0 0.0
    %1706 = vmatprep.subr.mxu0 0.0
    %1707 = vmatpush1.msra.mxu0 0.0
    %1708 = vmatprep.subr.mxu0 0.0
    %1709 = vmatpush1.msra.mxu0 0.0
    %1710 = vmatprep.subr.mxu0 0.0
    %1711 = vmatpush1.msra.mxu0 0.0
    %1712 = vmatprep.subr.mxu0 0.0
    %1713 = vmatpush1.msra.mxu0 0.0
    %1714 = vmatprep.subr.mxu0 0.0
    %1715 = vmatpush1.msra.mxu0 0.0
    %1716 = vmatprep.subr.mxu0 0.0
    %1717 = vmatpush1.msra.mxu0 0.0
    %1718 = vmatprep.subr.mxu0 0.0
    %1719 = vmatpush1.msra.mxu0 0.0
    %1720 = vmatprep.subr.mxu0 0.0
    %1721 = vmatpush1.msra.mxu0 0.0
    %1722 = vmatprep.subr.mxu0 0.0
    %1723 = vmatpush1.msra.mxu0 0.0
    %1724 = vmatprep.subr.mxu0 0.0
    %1725 = vmatpush1.msra.mxu0 0.0
    %1726 = vmatprep.subr.mxu0 0.0
    %1727 = vmatpush1.msra.mxu0 0.0
    %1728 = vmatprep.subr.mxu0 0.0
    %1729 = vmatpush1.msra.mxu0 0.0
    %1730 = vmatprep.subr.mxu0 0.0
    %1731 = vmatpush1.msra.mxu0 0.0
    %1732 = vmatprep.subr.mxu0 0.0
    %1733 = vmatpush1.msra.mxu0 0.0
    %1734 = vmatprep.subr.mxu0 0.0
    %1735 = vmatpush1.msra.mxu0 0.0
    %1736 = vmatprep.subr.mxu0 0.0
    %1737 = vmatpush1.msra.mxu0 0.0
    %1738 = vmatprep.subr.mxu0 0.0
    %1739 = vmatpush1.msra.mxu0 0.0
    %1740 = vmatprep.subr.mxu0 0.0
    %1741 = vmatpush1.msra.mxu0 0.0
    %1742 = vmatprep.subr.mxu0 0.0
    %1743 = vmatpush1.msra.mxu0 0.0
    %1744 = vmatprep.subr.mxu0 0.0
    %1745 = vmatpush1.msra.mxu0 0.0
    %1746 = vmatprep.subr.mxu0 0.0
    %1747 = vmatpush1.msra.mxu0 0.0
    %1748 = vmatprep.mubr.f32.mxu0 0.0
    %1749 = vmatmul.mubr.f32.gmra.mrb[0].mxu0 %v1679
    %v1750 = vpop.f32.mrb[0].mxu0
    %v1751 = vadd.f32 %v1676, %v1750
    %v1752 = vpop.f32.mrb[0].mxu0
    %1753 = vmatprep.mubr.f32.mxu0 0.0
    %1754 = vmatmul.mubr.f32.gmra.mrb[0].mxu0 %v1682
    %v1755 = vpop.f32.mrb[0].mxu0
    %v1756 = vadd.f32 %v1676, %v1755
    %v1757 = vpop.f32.mrb[0].mxu0
    %1758 = vdwg.mxu0
    %v1759 = vadd.f32 %v1751, %v115
    %v1760 = vadd.f32 %v1756, %v120
    %v1761 = vsel %vm41, %v1759, 0.0
    %1762 = vadd.xlane.f32.xlu0 %v1761
    %v1763 = vpop.xlane.xlu0 %1762
    %v1764 = vsel %vm41, %v1760, 0.0
    %1765 = vadd.xlane.f32.xlu0 %v1764
    %v1766 = vpop.xlane.xlu0 %1765
    %v1767 = vrcp.pop 32.0
    %v1768 = vmul.f32 %v1763, %v1767
    %v1769 = vmul.f32 %v1766, %v1767
    %v1770 = vsub.f32 %v1759, %v1768
    %v1771 = vsub.f32 %v1760, %v1769
    %v1772 = vmul.f32 %v1770, %v1770
    %v1773 = vmul.f32 %v1771, %v1771
    %v1774 = vsel %vm41, %v1772, 0.0
    %1775 = vadd.xlane.f32.xlu0 %v1774
    %v1776 = vpop.xlane.xlu0 %1775
    %v1777 = vsel %vm41, %v1773, 0.0
    %1778 = vadd.xlane.f32.xlu0 %v1777
    %v1779 = vpop.xlane.xlu0 %1778
    %v1780 = vmul.f32 %v1776, %v1767
    %v1781 = vmul.f32 %v1779, %v1767
    %v1782 = vadd.f32 %v1780, 1e-05
    %v1783 = vadd.f32 %v1781, 1e-05
    %v1784 = vrsqrt.pop %v1782
    %v1785 = vrsqrt.pop %v1783
    %v1786 = vmul.f32 %v1770, %v1784
    %v1787 = vmul.f32 %v1771, %v1785
    %v1788 = vlaneseq
    %v1789 = vshrl.u32 %v1788, 7
    %v1790 = vsub.s32 0, %v1789
    %v1791 = vrot.slane %v163, %v1790
    %v1792 = vmul.f32 %v1786, %v1791
    %v1793 = vmul.f32 %v1787, %v1791
    %v1794 = vlaneseq
    %v1795 = vshrl.u32 %v1794, 7
    %v1796 = vsub.s32 0, %v1795
    %v1797 = vrot.slane %v164, %v1796
    %v1798 = vadd.f32 %v1792, %v1797
    %v1799 = vadd.f32 %v1793, %v1797
    %v1800 = vlaneseq
    %v1801 = vshrl.u32 %v1800, 7
    %v1802 = vsub.s32 0, %v1801
    %v1803 = vrot.slane %v145, %v1802
    %v1805 = vsel %vm41, %v1798, 0
    %v1808 = vsel %vm41, %v1799, 0
    %1810 = vmatprep.subr.mxu0 0.0
    %1811 = vmatpush1.msra.mxu0 %v141
    %1812 = vmatprep.subr.mxu0 0.0
    %1813 = vmatpush1.msra.mxu0 %v142
    %1814 = vmatprep.subr.mxu0 0.0
    %1815 = vmatpush1.msra.mxu0 %v143
    %1816 = vmatprep.subr.mxu0 0.0
    %1817 = vmatpush1.msra.mxu0 %v144
    %1818 = vmatprep.subr.mxu0 0.0
    %1819 = vmatpush1.msra.mxu0 0.0
    %1820 = vmatprep.subr.mxu0 0.0
    %1821 = vmatpush1.msra.mxu0 0.0
    %1822 = vmatprep.subr.mxu0 0.0
    %1823 = vmatpush1.msra.mxu0 0.0
    %1824 = vmatprep.subr.mxu0 0.0
    %1825 = vmatpush1.msra.mxu0 0.0
    %1826 = vmatprep.subr.mxu0 0.0
    %1827 = vmatpush1.msra.mxu0 0.0
    %1828 = vmatprep.subr.mxu0 0.0
    %1829 = vmatpush1.msra.mxu0 0.0
    %1830 = vmatprep.subr.mxu0 0.0
    %1831 = vmatpush1.msra.mxu0 0.0
    %1832 = vmatprep.subr.mxu0 0.0
    %1833 = vmatpush1.msra.mxu0 0.0
    %1834 = vmatprep.subr.mxu0 0.0
    %1835 = vmatpush1.msra.mxu0 0.0
    %1836 = vmatprep.subr.mxu0 0.0
    %1837 = vmatpush1.msra.mxu0 0.0
    %1838 = vmatprep.subr.mxu0 0.0
    %1839 = vmatpush1.msra.mxu0 0.0
    %1840 = vmatprep.subr.mxu0 0.0
    %1841 = vmatpush1.msra.mxu0 0.0
    %1842 = vmatprep.subr.mxu0 0.0
    %1843 = vmatpush1.msra.mxu0 0.0
    %1844 = vmatprep.subr.mxu0 0.0
    %1845 = vmatpush1.msra.mxu0 0.0
    %1846 = vmatprep.subr.mxu0 0.0
    %1847 = vmatpush1.msra.mxu0 0.0
    %1848 = vmatprep.subr.mxu0 0.0
    %1849 = vmatpush1.msra.mxu0 0.0
    %1850 = vmatprep.subr.mxu0 0.0
    %1851 = vmatpush1.msra.mxu0 0.0
    %1852 = vmatprep.subr.mxu0 0.0
    %1853 = vmatpush1.msra.mxu0 0.0
    %1854 = vmatprep.subr.mxu0 0.0
    %1855 = vmatpush1.msra.mxu0 0.0
    %1856 = vmatprep.subr.mxu0 0.0
    %1857 = vmatpush1.msra.mxu0 0.0
    %1858 = vmatprep.subr.mxu0 0.0
    %1859 = vmatpush1.msra.mxu0 0.0
    %1860 = vmatprep.subr.mxu0 0.0
    %1861 = vmatpush1.msra.mxu0 0.0
    %1862 = vmatprep.subr.mxu0 0.0
    %1863 = vmatpush1.msra.mxu0 0.0
    %1864 = vmatprep.subr.mxu0 0.0
    %1865 = vmatpush1.msra.mxu0 0.0
    %1866 = vmatprep.subr.mxu0 0.0
    %1867 = vmatpush1.msra.mxu0 0.0
    %1868 = vmatprep.subr.mxu0 0.0
    %1869 = vmatpush1.msra.mxu0 0.0
    %1870 = vmatprep.subr.mxu0 0.0
    %1871 = vmatpush1.msra.mxu0 0.0
    %1872 = vmatprep.subr.mxu0 0.0
    %1873 = vmatpush1.msra.mxu0 0.0
    %1874 = vmatprep.mubr.f32.mxu0 0.0
    %1875 = vmatmul.mubr.f32.gmra.mrb[0].mxu0 %v1805
    %v1876 = vpop.f32.mrb[0].mxu0
    %v1877 = vadd.f32 %v1803, %v1876
    %v1878 = vpop.f32.mrb[0].mxu0
    %1879 = vmatprep.mubr.f32.mxu0 0.0
    %1880 = vmatmul.mubr.f32.gmra.mrb[0].mxu0 %v1808
    %v1881 = vpop.f32.mrb[0].mxu0
    %v1882 = vadd.f32 %v1803, %v1881
    %v1883 = vpop.f32.mrb[0].mxu0
    %1884 = vdwg.mxu0
    %v1885 = vmax.f32 %v1877, 0.0
    %v1886 = vmax.f32 %v1882, 0.0
    %v1887 = vlaneseq
    %v1888 = vshrl.u32 %v1887, 7
    %v1889 = vsub.s32 0, %v1888
    %v1890 = vrot.slane %v165, %v1889
    %v1892 = vsel %vm1677, %v1885, 0
    %v1895 = vsel %vm1677, %v1886, 0
    %1897 = vmatprep.subr.mxu0 0.0
    %1898 = vmatpush1.msra.mxu0 %v154
    %1899 = vmatprep.subr.mxu0 0.0
    %1900 = vmatpush1.msra.mxu0 %v155
    %1901 = vmatprep.subr.mxu0 0.0
    %1902 = vmatpush1.msra.mxu0 %v156
    %1903 = vmatprep.subr.mxu0 0.0
    %1904 = vmatpush1.msra.mxu0 %v157
    %1905 = vmatprep.subr.mxu0 0.0
    %1906 = vmatpush1.msra.mxu0 %v158
    %1907 = vmatprep.subr.mxu0 0.0
    %1908 = vmatpush1.msra.mxu0 %v159
    %1909 = vmatprep.subr.mxu0 0.0
    %1910 = vmatpush1.msra.mxu0 %v160
    %1911 = vmatprep.subr.mxu0 0.0
    %1912 = vmatpush1.msra.mxu0 %v161
    %1913 = vmatprep.subr.mxu0 0.0
    %1914 = vmatpush1.msra.mxu0 0.0
    %1915 = vmatprep.subr.mxu0 0.0
    %1916 = vmatpush1.msra.mxu0 0.0
    %1917 = vmatprep.subr.mxu0 0.0
    %1918 = vmatpush1.msra.mxu0 0.0
    %1919 = vmatprep.subr.mxu0 0.0
    %1920 = vmatpush1.msra.mxu0 0.0
    %1921 = vmatprep.subr.mxu0 0.0
    %1922 = vmatpush1.msra.mxu0 0.0
    %1923 = vmatprep.subr.mxu0 0.0
    %1924 = vmatpush1.msra.mxu0 0.0
    %1925 = vmatprep.subr.mxu0 0.0
    %1926 = vmatpush1.msra.mxu0 0.0
    %1927 = vmatprep.subr.mxu0 0.0
    %1928 = vmatpush1.msra.mxu0 0.0
    %1929 = vmatprep.subr.mxu0 0.0
    %1930 = vmatpush1.msra.mxu0 0.0
    %1931 = vmatprep.subr.mxu0 0.0
    %1932 = vmatpush1.msra.mxu0 0.0
    %1933 = vmatprep.subr.mxu0 0.0
    %1934 = vmatpush1.msra.mxu0 0.0
    %1935 = vmatprep.subr.mxu0 0.0
    %1936 = vmatpush1.msra.mxu0 0.0
    %1937 = vmatprep.subr.mxu0 0.0
    %1938 = vmatpush1.msra.mxu0 0.0
    %1939 = vmatprep.subr.mxu0 0.0
    %1940 = vmatpush1.msra.mxu0 0.0
    %1941 = vmatprep.subr.mxu0 0.0
    %1942 = vmatpush1.msra.mxu0 0.0
    %1943 = vmatprep.subr.mxu0 0.0
    %1944 = vmatpush1.msra.mxu0 0.0
    %1945 = vmatprep.subr.mxu0 0.0
    %1946 = vmatpush1.msra.mxu0 0.0
    %1947 = vmatprep.subr.mxu0 0.0
    %1948 = vmatpush1.msra.mxu0 0.0
    %1949 = vmatprep.subr.mxu0 0.0
    %1950 = vmatpush1.msra.mxu0 0.0
    %1951 = vmatprep.subr.mxu0 0.0
    %1952 = vmatpush1.msra.mxu0 0.0
    %1953 = vmatprep.subr.mxu0 0.0
    %1954 = vmatpush1.msra.mxu0 0.0
    %1955 = vmatprep.subr.mxu0 0.0
    %1956 = vmatpush1.msra.mxu0 0.0
    %1957 = vmatprep.subr.mxu0 0.0
    %1958 = vmatpush1.msra.mxu0 0.0
    %1959 = vmatprep.subr.mxu0 0.0
    %1960 = vmatpush1.msra.mxu0 0.0
    %1961 = vmatprep.mubr.f32.mxu0 0.0
    %1962 = vmatmul.mubr.f32.gmra.mrb[0].mxu0 %v1892
    %v1963 = vpop.f32.mrb[0].mxu0
    %v1964 = vadd.f32 %v1890, %v1963
    %v1965 = vpop.f32.mrb[0].mxu0
    %1966 = vmatprep.mubr.f32.mxu0 0.0
    %1967 = vmatmul.mubr.f32.gmra.mrb[0].mxu0 %v1895
    %v1968 = vpop.f32.mrb[0].mxu0
    %v1969 = vadd.f32 %v1890, %v1968
    %v1970 = vpop.f32.mrb[0].mxu0
    %1971 = vdwg.mxu0
    %v1972 = vadd.f32 %v1964, %v1798
    %v1973 = vadd.f32 %v1969, %v1799
    %v1974 = vsel %vm41, %v1972, 0.0
    %1975 = vadd.xlane.f32.xlu0 %v1974
    %v1976 = vpop.xlane.xlu0 %1975
    %v1977 = vsel %vm41, %v1973, 0.0
    %1978 = vadd.xlane.f32.xlu0 %v1977
    %v1979 = vpop.xlane.xlu0 %1978
    %v1980 = vmul.f32 %v1976, %v1767
    %v1981 = vmul.f32 %v1979, %v1767
    %v1982 = vsub.f32 %v1972, %v1980
    %v1983 = vsub.f32 %v1973, %v1981
    %v1984 = vmul.f32 %v1982, %v1982
    %v1985 = vmul.f32 %v1983, %v1983
    %v1986 = vsel %vm41, %v1984, 0.0
    %1987 = vadd.xlane.f32.xlu0 %v1986
    %v1988 = vpop.xlane.xlu0 %1987
    %v1989 = vsel %vm41, %v1985, 0.0
    %1990 = vadd.xlane.f32.xlu0 %v1989
    %v1991 = vpop.xlane.xlu0 %1990
    %v1992 = vmul.f32 %v1988, %v1767
    %v1993 = vmul.f32 %v1991, %v1767
    %v1994 = vadd.f32 %v1992, 1e-05
    %v1995 = vadd.f32 %v1993, 1e-05
    %v1996 = vrsqrt.pop %v1994
    %v1997 = vrsqrt.pop %v1995
    %v1998 = vmul.f32 %v1982, %v1996
    %v1999 = vmul.f32 %v1983, %v1997
    %v2000 = vlaneseq
    %v2001 = vshrl.u32 %v2000, 7
    %v2002 = vsub.s32 0, %v2001
    %v2003 = vrot.slane %v166, %v2002
    %v2004 = vmul.f32 %v1998, %v2003
    %v2005 = vmul.f32 %v1999, %v2003
    %v2006 = vlaneseq
    %v2007 = vshrl.u32 %v2006, 7
    %v2008 = vsub.s32 0, %v2007
    %v2009 = vrot.slane %v167, %v2008
    %v2010 = vadd.f32 %v2004, %v2009
    %v2011 = vadd.f32 %v2005, %v2009
    %v2012 = vld [vmem:[%s2 + $0x50] sm:$0xff]
    %v2013 = vld [vmem:[%s2 + $0x58] sm:$0xff]
    %v2014 = vld [vmem:[%s2 + $0x60] sm:$0xff]
    %v2015 = vld [vmem:[%s2 + $0x68] sm:$0xff]
    %v2016 = vld [vmem:[%s2 + $0x70] sm:$0xff]
    %v2017 = vld [vmem:[%s2 + $0x78] sm:$0xff]
    %v2018 = vld [vmem:[%s2 + $0x80] sm:$0xff]
    %v2019 = vld [vmem:[%s2 + $0x88] sm:$0xff]
    %s2020 = scalar_lea.vmem %s2, 144
    %v2021 = vld [vmem:[%s2020] ss:$8 sm:$0x3]
    %v2022 = vld [vmem:[%s3 + $0x28] sm:$0xff]
    %v2023 = vld [vmem:[%s3 + $0x30] sm:$0xff]
    %v2024 = vld [vmem:[%s3 + $0x38] sm:$0xff]
    %v2025 = vld [vmem:[%s3 + $0x40] sm:$0xff]
    %v2026 = vld [vmem:[%s3 + $0x48] sm:$0x1]
    %v2027 = vld [vmem:[%s4 + $0xb8] sm:$0xff]
    %v2028 = vld [vmem:[%s4 + $0xc0] sm:$0xff]
    %v2029 = vld [vmem:[%s4 + $0xc8] sm:$0xff]
    %v2030 = vld [vmem:[%s4 + $0xd0] sm:$0xff]
    %v2031 = vld [vmem:[%s4 + $0xd8] sm:$0xff]
    %v2032 = vld [vmem:[%s4 + $0xe0] sm:$0xff]
    %v2033 = vld [vmem:[%s4 + $0xe8] sm:$0xff]
    %v2034 = vld [vmem:[%s4 + $0xf0] sm:$0xff]
    %v2035 = vld [vmem:[%s4 + $0xf8] sm:$0xff]
    %v2036 = vld [vmem:[%s4 + $0x100] sm:$0xff]
    %v2037 = vld [vmem:[%s4 + $0x108] sm:$0xff]
    %v2038 = vld [vmem:[%s4 + $0x110] sm:$0xff]
    %v2039 = vld [vmem:[%s4 + $0x118] sm:$0xff]
    %v2040 = vld [vmem:[%s4 + $0x120] sm:$0xff]
    %v2041 = vld [vmem:[%s4 + $0x128] sm:$0xff]
    %v2042 = vld [vmem:[%s4 + $0x130] sm:$0xff]
    %v2043 = vld [vmem:[%s4 + $0x138] sm:$0x1]
    %v2044 = vld [vmem:[%s4 + $0x139] sm:$0x1]
    %v2045 = vld [vmem:[%s4 + $0x13a] sm:$0x1]
    %v2046 = vld [vmem:[%s4 + $0x13b] sm:$0x1]
    %v2047 = vld [vmem:[%s4 + $0x13c] sm:$0x1]
    %v2048 = vld [vmem:[%s4 + $0x13d] sm:$0x1]
    %v2050 = vlaneseq
    %v2051 = vshrl.u32 %v2050, 7
    %v2052 = vsub.s32 0, %v2051
    %v2053 = vrot.slane %v2021, %v2052
    %v2054 = vlaneseq
    %v2055 = vshrl.u32 %v2054, 7
    %v2056 = vsub.s32 1, %v2055
    %v2057 = vrot.slane %v2021, %v2056
    %v2061 = vsel %vm41, %v2010, 0
    %v2064 = vsel %vm41, %v2011, 0
    %2066 = vmatprep.subr.mxu0 %v2013
    %2067 = vmatpush1.msra.mxu0 %v2012
    %2068 = vmatprep.subr.mxu0 %v2015
    %2069 = vmatpush1.msra.mxu0 %v2014
    %2070 = vmatprep.subr.mxu0 %v2017
    %2071 = vmatpush1.msra.mxu0 %v2016
    %2072 = vmatprep.subr.mxu0 %v2019
    %2073 = vmatpush1.msra.mxu0 %v2018
    %2074 = vmatprep.subr.mxu0 0.0
    %2075 = vmatpush1.msra.mxu0 0.0
    %2076 = vmatprep.subr.mxu0 0.0
    %2077 = vmatpush1.msra.mxu0 0.0
    %2078 = vmatprep.subr.mxu0 0.0
    %2079 = vmatpush1.msra.mxu0 0.0
    %2080 = vmatprep.subr.mxu0 0.0
    %2081 = vmatpush1.msra.mxu0 0.0
    %2082 = vmatprep.subr.mxu0 0.0
    %2083 = vmatpush1.msra.mxu0 0.0
    %2084 = vmatprep.subr.mxu0 0.0
    %2085 = vmatpush1.msra.mxu0 0.0
    %2086 = vmatprep.subr.mxu0 0.0
    %2087 = vmatpush1.msra.mxu0 0.0
    %2088 = vmatprep.subr.mxu0 0.0
    %2089 = vmatpush1.msra.mxu0 0.0
    %2090 = vmatprep.subr.mxu0 0.0
    %2091 = vmatpush1.msra.mxu0 0.0
    %2092 = vmatprep.subr.mxu0 0.0
    %2093 = vmatpush1.msra.mxu0 0.0
    %2094 = vmatprep.subr.mxu0 0.0
    %2095 = vmatpush1.msra.mxu0 0.0
    %2096 = vmatprep.subr.mxu0 0.0
    %2097 = vmatpush1.msra.mxu0 0.0
    %2098 = vmatprep.subr.mxu0 0.0
    %2099 = vmatpush1.msra.mxu0 0.0
    %2100 = vmatprep.subr.mxu0 0.0
    %2101 = vmatpush1.msra.mxu0 0.0
    %2102 = vmatprep.subr.mxu0 0.0
    %2103 = vmatpush1.msra.mxu0 0.0
    %2104 = vmatprep.subr.mxu0 0.0
    %2105 = vmatpush1.msra.mxu0 0.0
    %2106 = vmatprep.subr.mxu0 0.0
    %2107 = vmatpush1.msra.mxu0 0.0
    %2108 = vmatprep.subr.mxu0 0.0
    %2109 = vmatpush1.msra.mxu0 0.0
    %2110 = vmatprep.subr.mxu0 0.0
    %2111 = vmatpush1.msra.mxu0 0.0
    %2112 = vmatprep.subr.mxu0 0.0
    %2113 = vmatpush1.msra.mxu0 0.0
    %2114 = vmatprep.subr.mxu0 0.0
    %2115 = vmatpush1.msra.mxu0 0.0
    %2116 = vmatprep.subr.mxu0 0.0
    %2117 = vmatpush1.msra.mxu0 0.0
    %2118 = vmatprep.subr.mxu0 0.0
    %2119 = vmatpush1.msra.mxu0 0.0
    %2120 = vmatprep.subr.mxu0 0.0
    %2121 = vmatpush1.msra.mxu0 0.0
    %2122 = vmatprep.subr.mxu0 0.0
    %2123 = vmatpush1.msra.mxu0 0.0
    %2124 = vmatprep.subr.mxu0 0.0
    %2125 = vmatpush1.msra.mxu0 0.0
    %2126 = vmatprep.subr.mxu0 0.0
    %2127 = vmatpush1.msra.mxu0 0.0
    %2128 = vmatprep.subr.mxu0 0.0
    %2129 = vmatpush1.msra.mxu0 0.0
    %2130 = vmatprep.mubr.f32.mxu0 0.0
    %2131 = vmatmul.mubr.f32.gmra.mrb[0].mxu0 %v2061
    %v2132 = vpop.f32.mrb[0].mxu0
    %v2133 = vadd.f32 %v2053, %v2132
    %v2134 = vpop.f32.mrb[0].mxu0
    %v2135 = vadd.f32 %v2057, %v2134
    %2136 = vmatprep.mubr.f32.mxu0 0.0
    %2137 = vmatmul.mubr.f32.gmra.mrb[0].mxu0 %v2064
    %v2138 = vpop.f32.mrb[0].mxu0
    %v2139 = vadd.f32 %v2053, %v2138
    %v2140 = vpop.f32.mrb[0].mxu0
    %v2141 = vadd.f32 %v2057, %v2140
    %2142 = vdwg.mxu0
    %2144 = vrot.lane.b32.xlu0 %v2133, 112
    %v2145 = vpop.permute.xlu0 %2144
    %2146 = vrot.lane.b32.xlu0 %v2133, 96
    %v2147 = vpop.permute.xlu0 %2146
    %2148 = vrot.lane.b32.xlu0 %v2133, 80
    %v2149 = vpop.permute.xlu0 %2148
    %2151 = vrot.lane.b32.xlu0 %v2139, 112
    %v2152 = vpop.permute.xlu0 %2151
    %2153 = vrot.lane.b32.xlu0 %v2139, 96
    %v2154 = vpop.permute.xlu0 %2153
    %2155 = vrot.lane.b32.xlu0 %v2139, 80
    %v2156 = vpop.permute.xlu0 %2155
    %2158 = vrot.lane.b32.xlu0 %v2135, 112
    %v2159 = vpop.permute.xlu0 %2158
    %2161 = vrot.lane.b32.xlu0 %v2135, 96
    %v2162 = vpop.permute.xlu0 %2161
    %2164 = vrot.lane.b32.xlu0 %v2135, 80
    %v2165 = vpop.permute.xlu0 %2164
    %2168 = vrot.lane.b32.xlu0 %v2141, 112
    %v2169 = vpop.permute.xlu0 %2168
    %2171 = vrot.lane.b32.xlu0 %v2141, 96
    %v2172 = vpop.permute.xlu0 %2171
    %2174 = vrot.lane.b32.xlu0 %v2141, 80
    %v2175 = vpop.permute.xlu0 %2174
    %2177 = vrot.lane.b32.xlu0 %v2133, 64
    %v2178 = vpop.permute.xlu0 %2177
    %v2179 = vsel %vm298, %v2133, 0
    %v2181 = vsel %vm298, %v2178, 0
    %2183 = vmatprep.subr.mxu0 0.0
    %2184 = vmatpush1.xpose.msra.mxu0 %v2181
    %2185 = vmatprep.subr.mxu0 0.0
    %2186 = vmatpush1.xpose.msra.mxu0 0.0
    %2187 = vmatprep.subr.mxu0 0.0
    %2188 = vmatpush1.xpose.msra.mxu0 0.0
    %2189 = vmatprep.subr.mxu0 0.0
    %2190 = vmatpush1.xpose.msra.mxu0 0.0
    %2191 = vmatprep.subr.mxu0 0.0
    %2192 = vmatpush1.xpose.msra.mxu0 0.0
    %2193 = vmatprep.subr.mxu0 0.0
    %2194 = vmatpush1.xpose.msra.mxu0 0.0
    %2195 = vmatprep.subr.mxu0 0.0
    %2196 = vmatpush1.xpose.msra.mxu0 0.0
    %2197 = vmatprep.subr.mxu0 0.0
    %2198 = vmatpush1.xpose.msra.mxu0 0.0
    %2199 = vmatprep.subr.mxu0 0.0
    %2200 = vmatpush1.xpose.msra.mxu0 0.0
    %2201 = vmatprep.subr.mxu0 0.0
    %2202 = vmatpush1.xpose.msra.mxu0 0.0
    %2203 = vmatprep.subr.mxu0 0.0
    %2204 = vmatpush1.xpose.msra.mxu0 0.0
    %2205 = vmatprep.subr.mxu0 0.0
    %2206 = vmatpush1.xpose.msra.mxu0 0.0
    %2207 = vmatprep.subr.mxu0 0.0
    %2208 = vmatpush1.xpose.msra.mxu0 0.0
    %2209 = vmatprep.subr.mxu0 0.0
    %2210 = vmatpush1.xpose.msra.mxu0 0.0
    %2211 = vmatprep.subr.mxu0 0.0
    %2212 = vmatpush1.xpose.msra.mxu0 0.0
    %2213 = vmatprep.subr.mxu0 0.0
    %2214 = vmatpush1.xpose.msra.mxu0 0.0
    %2215 = vmatprep.subr.mxu0 0.0
    %2216 = vmatpush1.xpose.msra.mxu0 0.0
    %2217 = vmatprep.subr.mxu0 0.0
    %2218 = vmatpush1.xpose.msra.mxu0 0.0
    %2219 = vmatprep.subr.mxu0 0.0
    %2220 = vmatpush1.xpose.msra.mxu0 0.0
    %2221 = vmatprep.subr.mxu0 0.0
    %2222 = vmatpush1.xpose.msra.mxu0 0.0
    %2223 = vmatprep.subr.mxu0 0.0
    %2224 = vmatpush1.xpose.msra.mxu0 0.0
    %2225 = vmatprep.subr.mxu0 0.0
    %2226 = vmatpush1.xpose.msra.mxu0 0.0
    %2227 = vmatprep.subr.mxu0 0.0
    %2228 = vmatpush1.xpose.msra.mxu0 0.0
    %2229 = vmatprep.subr.mxu0 0.0
    %2230 = vmatpush1.xpose.msra.mxu0 0.0
    %2231 = vmatprep.subr.mxu0 0.0
    %2232 = vmatpush1.xpose.msra.mxu0 0.0
    %2233 = vmatprep.subr.mxu0 0.0
    %2234 = vmatpush1.xpose.msra.mxu0 0.0
    %2235 = vmatprep.subr.mxu0 0.0
    %2236 = vmatpush1.xpose.msra.mxu0 0.0
    %2237 = vmatprep.subr.mxu0 0.0
    %2238 = vmatpush1.xpose.msra.mxu0 0.0
    %2239 = vmatprep.subr.mxu0 0.0
    %2240 = vmatpush1.xpose.msra.mxu0 0.0
    %2241 = vmatprep.subr.mxu0 0.0
    %2242 = vmatpush1.xpose.msra.mxu0 0.0
    %2243 = vmatprep.subr.mxu0 0.0
    %2244 = vmatpush1.xpose.msra.mxu0 0.0
    %2245 = vmatprep.subr.mxu0 0.0
    %2246 = vmatpush1.xpose.msra.mxu0 0.0
    %2247 = vmatprep.mubr.f32.mxu0 0.0
    %2248 = vmatmul.mubr.f32.gmra.mrb[0].mxu0 %v2179
    %v2249 = vpop.f32.mrb[0].mxu0
    %v2250 = vadd.f32 0.0, %v2249
    %v2251 = vpop.f32.mrb[0].mxu0
    %2252 = vdwg.mxu0
    %2253 = vrot.lane.b32.xlu0 %v2145, 64
    %v2254 = vpop.permute.xlu0 %2253
    %v2255 = vsel %vm298, %v2145, 0
    %v2257 = vsel %vm298, %v2254, 0
    %2259 = vmatprep.subr.mxu0 0.0
    %2260 = vmatpush1.xpose.msra.mxu0 %v2257
    %2261 = vmatprep.subr.mxu0 0.0
    %2262 = vmatpush1.xpose.msra.mxu0 0.0
    %2263 = vmatprep.subr.mxu0 0.0
    %2264 = vmatpush1.xpose.msra.mxu0 0.0
    %2265 = vmatprep.subr.mxu0 0.0
    %2266 = vmatpush1.xpose.msra.mxu0 0.0
    %2267 = vmatprep.subr.mxu0 0.0
    %2268 = vmatpush1.xpose.msra.mxu0 0.0
    %2269 = vmatprep.subr.mxu0 0.0
    %2270 = vmatpush1.xpose.msra.mxu0 0.0
    %2271 = vmatprep.subr.mxu0 0.0
    %2272 = vmatpush1.xpose.msra.mxu0 0.0
    %2273 = vmatprep.subr.mxu0 0.0
    %2274 = vmatpush1.xpose.msra.mxu0 0.0
    %2275 = vmatprep.subr.mxu0 0.0
    %2276 = vmatpush1.xpose.msra.mxu0 0.0
    %2277 = vmatprep.subr.mxu0 0.0
    %2278 = vmatpush1.xpose.msra.mxu0 0.0
    %2279 = vmatprep.subr.mxu0 0.0
    %2280 = vmatpush1.xpose.msra.mxu0 0.0
    %2281 = vmatprep.subr.mxu0 0.0
    %2282 = vmatpush1.xpose.msra.mxu0 0.0
    %2283 = vmatprep.subr.mxu0 0.0
    %2284 = vmatpush1.xpose.msra.mxu0 0.0
    %2285 = vmatprep.subr.mxu0 0.0
    %2286 = vmatpush1.xpose.msra.mxu0 0.0
    %2287 = vmatprep.subr.mxu0 0.0
    %2288 = vmatpush1.xpose.msra.mxu0 0.0
    %2289 = vmatprep.subr.mxu0 0.0
    %2290 = vmatpush1.xpose.msra.mxu0 0.0
    %2291 = vmatprep.subr.mxu0 0.0
    %2292 = vmatpush1.xpose.msra.mxu0 0.0
    %2293 = vmatprep.subr.mxu0 0.0
    %2294 = vmatpush1.xpose.msra.mxu0 0.0
    %2295 = vmatprep.subr.mxu0 0.0
    %2296 = vmatpush1.xpose.msra.mxu0 0.0
    %2297 = vmatprep.subr.mxu0 0.0
    %2298 = vmatpush1.xpose.msra.mxu0 0.0
    %2299 = vmatprep.subr.mxu0 0.0
    %2300 = vmatpush1.xpose.msra.mxu0 0.0
    %2301 = vmatprep.subr.mxu0 0.0
    %2302 = vmatpush1.xpose.msra.mxu0 0.0
    %2303 = vmatprep.subr.mxu0 0.0
    %2304 = vmatpush1.xpose.msra.mxu0 0.0
    %2305 = vmatprep.subr.mxu0 0.0
    %2306 = vmatpush1.xpose.msra.mxu0 0.0
    %2307 = vmatprep.subr.mxu0 0.0
    %2308 = vmatpush1.xpose.msra.mxu0 0.0
    %2309 = vmatprep.subr.mxu0 0.0
    %2310 = vmatpush1.xpose.msra.mxu0 0.0
    %2311 = vmatprep.subr.mxu0 0.0
    %2312 = vmatpush1.xpose.msra.mxu0 0.0
    %2313 = vmatprep.subr.mxu0 0.0
    %2314 = vmatpush1.xpose.msra.mxu0 0.0
    %2315 = vmatprep.subr.mxu0 0.0
    %2316 = vmatpush1.xpose.msra.mxu0 0.0
    %2317 = vmatprep.subr.mxu0 0.0
    %2318 = vmatpush1.xpose.msra.mxu0 0.0
    %2319 = vmatprep.subr.mxu0 0.0
    %2320 = vmatpush1.xpose.msra.mxu0 0.0
    %2321 = vmatprep.subr.mxu0 0.0
    %2322 = vmatpush1.xpose.msra.mxu0 0.0
    %2323 = vmatprep.mubr.f32.mxu0 0.0
    %2324 = vmatmul.mubr.f32.gmra.mrb[0].mxu0 %v2255
    %v2325 = vpop.f32.mrb[0].mxu0
    %v2326 = vadd.f32 0.0, %v2325
    %v2327 = vpop.f32.mrb[0].mxu0
    %2328 = vdwg.mxu0
    %2329 = vrot.lane.b32.xlu0 %v2147, 64
    %v2330 = vpop.permute.xlu0 %2329
    %v2331 = vsel %vm298, %v2147, 0
    %v2333 = vsel %vm298, %v2330, 0
    %2335 = vmatprep.subr.mxu0 0.0
    %2336 = vmatpush1.xpose.msra.mxu0 %v2333
    %2337 = vmatprep.subr.mxu0 0.0
    %2338 = vmatpush1.xpose.msra.mxu0 0.0
    %2339 = vmatprep.subr.mxu0 0.0
    %2340 = vmatpush1.xpose.msra.mxu0 0.0
    %2341 = vmatprep.subr.mxu0 0.0
    %2342 = vmatpush1.xpose.msra.mxu0 0.0
    %2343 = vmatprep.subr.mxu0 0.0
    %2344 = vmatpush1.xpose.msra.mxu0 0.0
    %2345 = vmatprep.subr.mxu0 0.0
    %2346 = vmatpush1.xpose.msra.mxu0 0.0
    %2347 = vmatprep.subr.mxu0 0.0
    %2348 = vmatpush1.xpose.msra.mxu0 0.0
    %2349 = vmatprep.subr.mxu0 0.0
    %2350 = vmatpush1.xpose.msra.mxu0 0.0
    %2351 = vmatprep.subr.mxu0 0.0
    %2352 = vmatpush1.xpose.msra.mxu0 0.0
    %2353 = vmatprep.subr.mxu0 0.0
    %2354 = vmatpush1.xpose.msra.mxu0 0.0
    %2355 = vmatprep.subr.mxu0 0.0
    %2356 = vmatpush1.xpose.msra.mxu0 0.0
    %2357 = vmatprep.subr.mxu0 0.0
    %2358 = vmatpush1.xpose.msra.mxu0 0.0
    %2359 = vmatprep.subr.mxu0 0.0
    %2360 = vmatpush1.xpose.msra.mxu0 0.0
    %2361 = vmatprep.subr.mxu0 0.0
    %2362 = vmatpush1.xpose.msra.mxu0 0.0
    %2363 = vmatprep.subr.mxu0 0.0
    %2364 = vmatpush1.xpose.msra.mxu0 0.0
    %2365 = vmatprep.subr.mxu0 0.0
    %2366 = vmatpush1.xpose.msra.mxu0 0.0
    %2367 = vmatprep.subr.mxu0 0.0
    %2368 = vmatpush1.xpose.msra.mxu0 0.0
    %2369 = vmatprep.subr.mxu0 0.0
    %2370 = vmatpush1.xpose.msra.mxu0 0.0
    %2371 = vmatprep.subr.mxu0 0.0
    %2372 = vmatpush1.xpose.msra.mxu0 0.0
    %2373 = vmatprep.subr.mxu0 0.0
    %2374 = vmatpush1.xpose.msra.mxu0 0.0
    %2375 = vmatprep.subr.mxu0 0.0
    %2376 = vmatpush1.xpose.msra.mxu0 0.0
    %2377 = vmatprep.subr.mxu0 0.0
    %2378 = vmatpush1.xpose.msra.mxu0 0.0
    %2379 = vmatprep.subr.mxu0 0.0
    %2380 = vmatpush1.xpose.msra.mxu0 0.0
    %2381 = vmatprep.subr.mxu0 0.0
    %2382 = vmatpush1.xpose.msra.mxu0 0.0
    %2383 = vmatprep.subr.mxu0 0.0
    %2384 = vmatpush1.xpose.msra.mxu0 0.0
    %2385 = vmatprep.subr.mxu0 0.0
    %2386 = vmatpush1.xpose.msra.mxu0 0.0
    %2387 = vmatprep.subr.mxu0 0.0
    %2388 = vmatpush1.xpose.msra.mxu0 0.0
    %2389 = vmatprep.subr.mxu0 0.0
    %2390 = vmatpush1.xpose.msra.mxu0 0.0
    %2391 = vmatprep.subr.mxu0 0.0
    %2392 = vmatpush1.xpose.msra.mxu0 0.0
    %2393 = vmatprep.subr.mxu0 0.0
    %2394 = vmatpush1.xpose.msra.mxu0 0.0
    %2395 = vmatprep.subr.mxu0 0.0
    %2396 = vmatpush1.xpose.msra.mxu0 0.0
    %2397 = vmatprep.subr.mxu0 0.0
    %2398 = vmatpush1.xpose.msra.mxu0 0.0
    %2399 = vmatprep.mubr.f32.mxu0 0.0
    %2400 = vmatmul.mubr.f32.gmra.mrb[0].mxu0 %v2331
    %v2401 = vpop.f32.mrb[0].mxu0
    %v2402 = vadd.f32 0.0, %v2401
    %v2403 = vpop.f32.mrb[0].mxu0
    %2404 = vdwg.mxu0
    %2405 = vrot.lane.b32.xlu0 %v2149, 64
    %v2406 = vpop.permute.xlu0 %2405
    %v2407 = vsel %vm298, %v2149, 0
    %v2409 = vsel %vm298, %v2406, 0
    %2411 = vmatprep.subr.mxu0 0.0
    %2412 = vmatpush1.xpose.msra.mxu0 %v2409
    %2413 = vmatprep.subr.mxu0 0.0
    %2414 = vmatpush1.xpose.msra.mxu0 0.0
    %2415 = vmatprep.subr.mxu0 0.0
    %2416 = vmatpush1.xpose.msra.mxu0 0.0
    %2417 = vmatprep.subr.mxu0 0.0
    %2418 = vmatpush1.xpose.msra.mxu0 0.0
    %2419 = vmatprep.subr.mxu0 0.0
    %2420 = vmatpush1.xpose.msra.mxu0 0.0
    %2421 = vmatprep.subr.mxu0 0.0
    %2422 = vmatpush1.xpose.msra.mxu0 0.0
    %2423 = vmatprep.subr.mxu0 0.0
    %2424 = vmatpush1.xpose.msra.mxu0 0.0
    %2425 = vmatprep.subr.mxu0 0.0
    %2426 = vmatpush1.xpose.msra.mxu0 0.0
    %2427 = vmatprep.subr.mxu0 0.0
    %2428 = vmatpush1.xpose.msra.mxu0 0.0
    %2429 = vmatprep.subr.mxu0 0.0
    %2430 = vmatpush1.xpose.msra.mxu0 0.0
    %2431 = vmatprep.subr.mxu0 0.0
    %2432 = vmatpush1.xpose.msra.mxu0 0.0
    %2433 = vmatprep.subr.mxu0 0.0
    %2434 = vmatpush1.xpose.msra.mxu0 0.0
    %2435 = vmatprep.subr.mxu0 0.0
    %2436 = vmatpush1.xpose.msra.mxu0 0.0
    %2437 = vmatprep.subr.mxu0 0.0
    %2438 = vmatpush1.xpose.msra.mxu0 0.0
    %2439 = vmatprep.subr.mxu0 0.0
    %2440 = vmatpush1.xpose.msra.mxu0 0.0
    %2441 = vmatprep.subr.mxu0 0.0
    %2442 = vmatpush1.xpose.msra.mxu0 0.0
    %2443 = vmatprep.subr.mxu0 0.0
    %2444 = vmatpush1.xpose.msra.mxu0 0.0
    %2445 = vmatprep.subr.mxu0 0.0
    %2446 = vmatpush1.xpose.msra.mxu0 0.0
    %2447 = vmatprep.subr.mxu0 0.0
    %2448 = vmatpush1.xpose.msra.mxu0 0.0
    %2449 = vmatprep.subr.mxu0 0.0
    %2450 = vmatpush1.xpose.msra.mxu0 0.0
    %2451 = vmatprep.subr.mxu0 0.0
    %2452 = vmatpush1.xpose.msra.mxu0 0.0
    %2453 = vmatprep.subr.mxu0 0.0
    %2454 = vmatpush1.xpose.msra.mxu0 0.0
    %2455 = vmatprep.subr.mxu0 0.0
    %2456 = vmatpush1.xpose.msra.mxu0 0.0
    %2457 = vmatprep.subr.mxu0 0.0
    %2458 = vmatpush1.xpose.msra.mxu0 0.0
    %2459 = vmatprep.subr.mxu0 0.0
    %2460 = vmatpush1.xpose.msra.mxu0 0.0
    %2461 = vmatprep.subr.mxu0 0.0
    %2462 = vmatpush1.xpose.msra.mxu0 0.0
    %2463 = vmatprep.subr.mxu0 0.0
    %2464 = vmatpush1.xpose.msra.mxu0 0.0
    %2465 = vmatprep.subr.mxu0 0.0
    %2466 = vmatpush1.xpose.msra.mxu0 0.0
    %2467 = vmatprep.subr.mxu0 0.0
    %2468 = vmatpush1.xpose.msra.mxu0 0.0
    %2469 = vmatprep.subr.mxu0 0.0
    %2470 = vmatpush1.xpose.msra.mxu0 0.0
    %2471 = vmatprep.subr.mxu0 0.0
    %2472 = vmatpush1.xpose.msra.mxu0 0.0
    %2473 = vmatprep.subr.mxu0 0.0
    %2474 = vmatpush1.xpose.msra.mxu0 0.0
    %2475 = vmatprep.mubr.f32.mxu0 0.0
    %2476 = vmatmul.mubr.f32.gmra.mrb[0].mxu0 %v2407
    %v2477 = vpop.f32.mrb[0].mxu0
    %v2478 = vadd.f32 0.0, %v2477
    %v2479 = vpop.f32.mrb[0].mxu0
    %2480 = vdwg.mxu0
    %2481 = vrot.lane.b32.xlu0 %v2139, 64
    %v2482 = vpop.permute.xlu0 %2481
    %v2483 = vsel %vm298, %v2139, 0
    %v2485 = vsel %vm298, %v2482, 0
    %2487 = vmatprep.subr.mxu0 0.0
    %2488 = vmatpush1.xpose.msra.mxu0 %v2485
    %2489 = vmatprep.subr.mxu0 0.0
    %2490 = vmatpush1.xpose.msra.mxu0 0.0
    %2491 = vmatprep.subr.mxu0 0.0
    %2492 = vmatpush1.xpose.msra.mxu0 0.0
    %2493 = vmatprep.subr.mxu0 0.0
    %2494 = vmatpush1.xpose.msra.mxu0 0.0
    %2495 = vmatprep.subr.mxu0 0.0
    %2496 = vmatpush1.xpose.msra.mxu0 0.0
    %2497 = vmatprep.subr.mxu0 0.0
    %2498 = vmatpush1.xpose.msra.mxu0 0.0
    %2499 = vmatprep.subr.mxu0 0.0
    %2500 = vmatpush1.xpose.msra.mxu0 0.0
    %2501 = vmatprep.subr.mxu0 0.0
    %2502 = vmatpush1.xpose.msra.mxu0 0.0
    %2503 = vmatprep.subr.mxu0 0.0
    %2504 = vmatpush1.xpose.msra.mxu0 0.0
    %2505 = vmatprep.subr.mxu0 0.0
    %2506 = vmatpush1.xpose.msra.mxu0 0.0
    %2507 = vmatprep.subr.mxu0 0.0
    %2508 = vmatpush1.xpose.msra.mxu0 0.0
    %2509 = vmatprep.subr.mxu0 0.0
    %2510 = vmatpush1.xpose.msra.mxu0 0.0
    %2511 = vmatprep.subr.mxu0 0.0
    %2512 = vmatpush1.xpose.msra.mxu0 0.0
    %2513 = vmatprep.subr.mxu0 0.0
    %2514 = vmatpush1.xpose.msra.mxu0 0.0
    %2515 = vmatprep.subr.mxu0 0.0
    %2516 = vmatpush1.xpose.msra.mxu0 0.0
    %2517 = vmatprep.subr.mxu0 0.0
    %2518 = vmatpush1.xpose.msra.mxu0 0.0
    %2519 = vmatprep.subr.mxu0 0.0
    %2520 = vmatpush1.xpose.msra.mxu0 0.0
    %2521 = vmatprep.subr.mxu0 0.0
    %2522 = vmatpush1.xpose.msra.mxu0 0.0
    %2523 = vmatprep.subr.mxu0 0.0
    %2524 = vmatpush1.xpose.msra.mxu0 0.0
    %2525 = vmatprep.subr.mxu0 0.0
    %2526 = vmatpush1.xpose.msra.mxu0 0.0
    %2527 = vmatprep.subr.mxu0 0.0
    %2528 = vmatpush1.xpose.msra.mxu0 0.0
    %2529 = vmatprep.subr.mxu0 0.0
    %2530 = vmatpush1.xpose.msra.mxu0 0.0
    %2531 = vmatprep.subr.mxu0 0.0
    %2532 = vmatpush1.xpose.msra.mxu0 0.0
    %2533 = vmatprep.subr.mxu0 0.0
    %2534 = vmatpush1.xpose.msra.mxu0 0.0
    %2535 = vmatprep.subr.mxu0 0.0
    %2536 = vmatpush1.xpose.msra.mxu0 0.0
    %2537 = vmatprep.subr.mxu0 0.0
    %2538 = vmatpush1.xpose.msra.mxu0 0.0
    %2539 = vmatprep.subr.mxu0 0.0
    %2540 = vmatpush1.xpose.msra.mxu0 0.0
    %2541 = vmatprep.subr.mxu0 0.0
    %2542 = vmatpush1.xpose.msra.mxu0 0.0
    %2543 = vmatprep.subr.mxu0 0.0
    %2544 = vmatpush1.xpose.msra.mxu0 0.0
    %2545 = vmatprep.subr.mxu0 0.0
    %2546 = vmatpush1.xpose.msra.mxu0 0.0
    %2547 = vmatprep.subr.mxu0 0.0
    %2548 = vmatpush1.xpose.msra.mxu0 0.0
    %2549 = vmatprep.subr.mxu0 0.0
    %2550 = vmatpush1.xpose.msra.mxu0 0.0
    %2551 = vmatprep.mubr.f32.mxu0 0.0
    %2552 = vmatmul.mubr.f32.gmra.mrb[0].mxu0 %v2483
    %v2553 = vpop.f32.mrb[0].mxu0
    %v2554 = vadd.f32 0.0, %v2553
    %v2555 = vpop.f32.mrb[0].mxu0
    %2556 = vdwg.mxu0
    %2557 = vrot.lane.b32.xlu0 %v2152, 64
    %v2558 = vpop.permute.xlu0 %2557
    %v2559 = vsel %vm298, %v2152, 0
    %v2561 = vsel %vm298, %v2558, 0
    %2563 = vmatprep.subr.mxu0 0.0
    %2564 = vmatpush1.xpose.msra.mxu0 %v2561
    %2565 = vmatprep.subr.mxu0 0.0
    %2566 = vmatpush1.xpose.msra.mxu0 0.0
    %2567 = vmatprep.subr.mxu0 0.0
    %2568 = vmatpush1.xpose.msra.mxu0 0.0
    %2569 = vmatprep.subr.mxu0 0.0
    %2570 = vmatpush1.xpose.msra.mxu0 0.0
    %2571 = vmatprep.subr.mxu0 0.0
    %2572 = vmatpush1.xpose.msra.mxu0 0.0
    %2573 = vmatprep.subr.mxu0 0.0
    %2574 = vmatpush1.xpose.msra.mxu0 0.0
    %2575 = vmatprep.subr.mxu0 0.0
    %2576 = vmatpush1.xpose.msra.mxu0 0.0
    %2577 = vmatprep.subr.mxu0 0.0
    %2578 = vmatpush1.xpose.msra.mxu0 0.0
    %2579 = vmatprep.subr.mxu0 0.0
    %2580 = vmatpush1.xpose.msra.mxu0 0.0
    %2581 = vmatprep.subr.mxu0 0.0
    %2582 = vmatpush1.xpose.msra.mxu0 0.0
    %2583 = vmatprep.subr.mxu0 0.0
    %2584 = vmatpush1.xpose.msra.mxu0 0.0
    %2585 = vmatprep.subr.mxu0 0.0
    %2586 = vmatpush1.xpose.msra.mxu0 0.0
    %2587 = vmatprep.subr.mxu0 0.0
    %2588 = vmatpush1.xpose.msra.mxu0 0.0
    %2589 = vmatprep.subr.mxu0 0.0
    %2590 = vmatpush1.xpose.msra.mxu0 0.0
    %2591 = vmatprep.subr.mxu0 0.0
    %2592 = vmatpush1.xpose.msra.mxu0 0.0
    %2593 = vmatprep.subr.mxu0 0.0
    %2594 = vmatpush1.xpose.msra.mxu0 0.0
    %2595 = vmatprep.subr.mxu0 0.0
    %2596 = vmatpush1.xpose.msra.mxu0 0.0
    %2597 = vmatprep.subr.mxu0 0.0
    %2598 = vmatpush1.xpose.msra.mxu0 0.0
    %2599 = vmatprep.subr.mxu0 0.0
    %2600 = vmatpush1.xpose.msra.mxu0 0.0
    %2601 = vmatprep.subr.mxu0 0.0
    %2602 = vmatpush1.xpose.msra.mxu0 0.0
    %2603 = vmatprep.subr.mxu0 0.0
    %2604 = vmatpush1.xpose.msra.mxu0 0.0
    %2605 = vmatprep.subr.mxu0 0.0
    %2606 = vmatpush1.xpose.msra.mxu0 0.0
    %2607 = vmatprep.subr.mxu0 0.0
    %2608 = vmatpush1.xpose.msra.mxu0 0.0
    %2609 = vmatprep.subr.mxu0 0.0
    %2610 = vmatpush1.xpose.msra.mxu0 0.0
    %2611 = vmatprep.subr.mxu0 0.0
    %2612 = vmatpush1.xpose.msra.mxu0 0.0
    %2613 = vmatprep.subr.mxu0 0.0
    %2614 = vmatpush1.xpose.msra.mxu0 0.0
    %2615 = vmatprep.subr.mxu0 0.0
    %2616 = vmatpush1.xpose.msra.mxu0 0.0
    %2617 = vmatprep.subr.mxu0 0.0
    %2618 = vmatpush1.xpose.msra.mxu0 0.0
    %2619 = vmatprep.subr.mxu0 0.0
    %2620 = vmatpush1.xpose.msra.mxu0 0.0
    %2621 = vmatprep.subr.mxu0 0.0
    %2622 = vmatpush1.xpose.msra.mxu0 0.0
    %2623 = vmatprep.subr.mxu0 0.0
    %2624 = vmatpush1.xpose.msra.mxu0 0.0
    %2625 = vmatprep.subr.mxu0 0.0
    %2626 = vmatpush1.xpose.msra.mxu0 0.0
    %2627 = vmatprep.mubr.f32.mxu0 0.0
    %2628 = vmatmul.mubr.f32.gmra.mrb[0].mxu0 %v2559
    %v2629 = vpop.f32.mrb[0].mxu0
    %v2630 = vadd.f32 0.0, %v2629
    %v2631 = vpop.f32.mrb[0].mxu0
    %2632 = vdwg.mxu0
    %2633 = vrot.lane.b32.xlu0 %v2154, 64
    %v2634 = vpop.permute.xlu0 %2633
    %v2635 = vsel %vm298, %v2154, 0
    %v2637 = vsel %vm298, %v2634, 0
    %2639 = vmatprep.subr.mxu0 0.0
    %2640 = vmatpush1.xpose.msra.mxu0 %v2637
    %2641 = vmatprep.subr.mxu0 0.0
    %2642 = vmatpush1.xpose.msra.mxu0 0.0
    %2643 = vmatprep.subr.mxu0 0.0
    %2644 = vmatpush1.xpose.msra.mxu0 0.0
    %2645 = vmatprep.subr.mxu0 0.0
    %2646 = vmatpush1.xpose.msra.mxu0 0.0
    %2647 = vmatprep.subr.mxu0 0.0
    %2648 = vmatpush1.xpose.msra.mxu0 0.0
    %2649 = vmatprep.subr.mxu0 0.0
    %2650 = vmatpush1.xpose.msra.mxu0 0.0
    %2651 = vmatprep.subr.mxu0 0.0
    %2652 = vmatpush1.xpose.msra.mxu0 0.0
    %2653 = vmatprep.subr.mxu0 0.0
    %2654 = vmatpush1.xpose.msra.mxu0 0.0
    %2655 = vmatprep.subr.mxu0 0.0
    %2656 = vmatpush1.xpose.msra.mxu0 0.0
    %2657 = vmatprep.subr.mxu0 0.0
    %2658 = vmatpush1.xpose.msra.mxu0 0.0
    %2659 = vmatprep.subr.mxu0 0.0
    %2660 = vmatpush1.xpose.msra.mxu0 0.0
    %2661 = vmatprep.subr.mxu0 0.0
    %2662 = vmatpush1.xpose.msra.mxu0 0.0
    %2663 = vmatprep.subr.mxu0 0.0
    %2664 = vmatpush1.xpose.msra.mxu0 0.0
    %2665 = vmatprep.subr.mxu0 0.0
    %2666 = vmatpush1.xpose.msra.mxu0 0.0
    %2667 = vmatprep.subr.mxu0 0.0
    %2668 = vmatpush1.xpose.msra.mxu0 0.0
    %2669 = vmatprep.subr.mxu0 0.0
    %2670 = vmatpush1.xpose.msra.mxu0 0.0
    %2671 = vmatprep.subr.mxu0 0.0
    %2672 = vmatpush1.xpose.msra.mxu0 0.0
    %2673 = vmatprep.subr.mxu0 0.0
    %2674 = vmatpush1.xpose.msra.mxu0 0.0
    %2675 = vmatprep.subr.mxu0 0.0
    %2676 = vmatpush1.xpose.msra.mxu0 0.0
    %2677 = vmatprep.subr.mxu0 0.0
    %2678 = vmatpush1.xpose.msra.mxu0 0.0
    %2679 = vmatprep.subr.mxu0 0.0
    %2680 = vmatpush1.xpose.msra.mxu0 0.0
    %2681 = vmatprep.subr.mxu0 0.0
    %2682 = vmatpush1.xpose.msra.mxu0 0.0
    %2683 = vmatprep.subr.mxu0 0.0
    %2684 = vmatpush1.xpose.msra.mxu0 0.0
    %2685 = vmatprep.subr.mxu0 0.0
    %2686 = vmatpush1.xpose.msra.mxu0 0.0
    %2687 = vmatprep.subr.mxu0 0.0
    %2688 = vmatpush1.xpose.msra.mxu0 0.0
    %2689 = vmatprep.subr.mxu0 0.0
    %2690 = vmatpush1.xpose.msra.mxu0 0.0
    %2691 = vmatprep.subr.mxu0 0.0
    %2692 = vmatpush1.xpose.msra.mxu0 0.0
    %2693 = vmatprep.subr.mxu0 0.0
    %2694 = vmatpush1.xpose.msra.mxu0 0.0
    %2695 = vmatprep.subr.mxu0 0.0
    %2696 = vmatpush1.xpose.msra.mxu0 0.0
    %2697 = vmatprep.subr.mxu0 0.0
    %2698 = vmatpush1.xpose.msra.mxu0 0.0
    %2699 = vmatprep.subr.mxu0 0.0
    %2700 = vmatpush1.xpose.msra.mxu0 0.0
    %2701 = vmatprep.subr.mxu0 0.0
    %2702 = vmatpush1.xpose.msra.mxu0 0.0
    %2703 = vmatprep.mubr.f32.mxu0 0.0
    %2704 = vmatmul.mubr.f32.gmra.mrb[0].mxu0 %v2635
    %v2705 = vpop.f32.mrb[0].mxu0
    %v2706 = vadd.f32 0.0, %v2705
    %v2707 = vpop.f32.mrb[0].mxu0
    %2708 = vdwg.mxu0
    %2709 = vrot.lane.b32.xlu0 %v2156, 64
    %v2710 = vpop.permute.xlu0 %2709
    %v2711 = vsel %vm298, %v2156, 0
    %v2713 = vsel %vm298, %v2710, 0
    %2715 = vmatprep.subr.mxu0 0.0
    %2716 = vmatpush1.xpose.msra.mxu0 %v2713
    %2717 = vmatprep.subr.mxu0 0.0
    %2718 = vmatpush1.xpose.msra.mxu0 0.0
    %2719 = vmatprep.subr.mxu0 0.0
    %2720 = vmatpush1.xpose.msra.mxu0 0.0
    %2721 = vmatprep.subr.mxu0 0.0
    %2722 = vmatpush1.xpose.msra.mxu0 0.0
    %2723 = vmatprep.subr.mxu0 0.0
    %2724 = vmatpush1.xpose.msra.mxu0 0.0
    %2725 = vmatprep.subr.mxu0 0.0
    %2726 = vmatpush1.xpose.msra.mxu0 0.0
    %2727 = vmatprep.subr.mxu0 0.0
    %2728 = vmatpush1.xpose.msra.mxu0 0.0
    %2729 = vmatprep.subr.mxu0 0.0
    %2730 = vmatpush1.xpose.msra.mxu0 0.0
    %2731 = vmatprep.subr.mxu0 0.0
    %2732 = vmatpush1.xpose.msra.mxu0 0.0
    %2733 = vmatprep.subr.mxu0 0.0
    %2734 = vmatpush1.xpose.msra.mxu0 0.0
    %2735 = vmatprep.subr.mxu0 0.0
    %2736 = vmatpush1.xpose.msra.mxu0 0.0
    %2737 = vmatprep.subr.mxu0 0.0
    %2738 = vmatpush1.xpose.msra.mxu0 0.0
    %2739 = vmatprep.subr.mxu0 0.0
    %2740 = vmatpush1.xpose.msra.mxu0 0.0
    %2741 = vmatprep.subr.mxu0 0.0
    %2742 = vmatpush1.xpose.msra.mxu0 0.0
    %2743 = vmatprep.subr.mxu0 0.0
    %2744 = vmatpush1.xpose.msra.mxu0 0.0
    %2745 = vmatprep.subr.mxu0 0.0
    %2746 = vmatpush1.xpose.msra.mxu0 0.0
    %2747 = vmatprep.subr.mxu0 0.0
    %2748 = vmatpush1.xpose.msra.mxu0 0.0
    %2749 = vmatprep.subr.mxu0 0.0
    %2750 = vmatpush1.xpose.msra.mxu0 0.0
    %2751 = vmatprep.subr.mxu0 0.0
    %2752 = vmatpush1.xpose.msra.mxu0 0.0
    %2753 = vmatprep.subr.mxu0 0.0
    %2754 = vmatpush1.xpose.msra.mxu0 0.0
    %2755 = vmatprep.subr.mxu0 0.0
    %2756 = vmatpush1.xpose.msra.mxu0 0.0
    %2757 = vmatprep.subr.mxu0 0.0
    %2758 = vmatpush1.xpose.msra.mxu0 0.0
    %2759 = vmatprep.subr.mxu0 0.0
    %2760 = vmatpush1.xpose.msra.mxu0 0.0
    %2761 = vmatprep.subr.mxu0 0.0
    %2762 = vmatpush1.xpose.msra.mxu0 0.0
    %2763 = vmatprep.subr.mxu0 0.0
    %2764 = vmatpush1.xpose.msra.mxu0 0.0
    %2765 = vmatprep.subr.mxu0 0.0
    %2766 = vmatpush1.xpose.msra.mxu0 0.0
    %2767 = vmatprep.subr.mxu0 0.0
    %2768 = vmatpush1.xpose.msra.mxu0 0.0
    %2769 = vmatprep.subr.mxu0 0.0
    %2770 = vmatpush1.xpose.msra.mxu0 0.0
    %2771 = vmatprep.subr.mxu0 0.0
    %2772 = vmatpush1.xpose.msra.mxu0 0.0
    %2773 = vmatprep.subr.mxu0 0.0
    %2774 = vmatpush1.xpose.msra.mxu0 0.0
    %2775 = vmatprep.subr.mxu0 0.0
    %2776 = vmatpush1.xpose.msra.mxu0 0.0
    %2777 = vmatprep.subr.mxu0 0.0
    %2778 = vmatpush1.xpose.msra.mxu0 0.0
    %2779 = vmatprep.mubr.f32.mxu0 0.0
    %2780 = vmatmul.mubr.f32.gmra.mrb[0].mxu0 %v2711
    %v2781 = vpop.f32.mrb[0].mxu0
    %v2782 = vadd.f32 0.0, %v2781
    %v2783 = vpop.f32.mrb[0].mxu0
    %2784 = vdwg.mxu0
    %v2785 = vmul.f32 %v2250, 0.25
    %v2786 = vmul.f32 %v2326, 0.25
    %v2787 = vmul.f32 %v2402, 0.25
    %v2788 = vmul.f32 %v2478, 0.25
    %v2789 = vmul.f32 %v2554, 0.25
    %v2790 = vmul.f32 %v2630, 0.25
    %v2791 = vmul.f32 %v2706, 0.25
    %v2792 = vmul.f32 %v2782, 0.25
    %v2793 = vadd.f32 %v2785, %v924
    %v2794 = vadd.f32 %v2786, %v928
    %v2795 = vadd.f32 %v2787, %v932
    %v2796 = vadd.f32 %v2788, %v936
    %v2797 = vadd.f32 %v2789, %v940
    %v2798 = vadd.f32 %v2790, %v944
    %v2799 = vadd.f32 %v2791, %v948
    %v2800 = vadd.f32 %v2792, %v952
    %v2801 = vsel %vm969, %v2793, -inf
    %2802 = vmax.xlane.f32.xlu0 %v2801
    %v2803 = vpop.xlane.xlu0 %2802
    %v2804 = vsel %vm969, %v2794, -inf
    %2805 = vmax.xlane.f32.xlu0 %v2804
    %v2806 = vpop.xlane.xlu0 %2805
    %v2807 = vsel %vm969, %v2795, -inf
    %2808 = vmax.xlane.f32.xlu0 %v2807
    %v2809 = vpop.xlane.xlu0 %2808
    %v2810 = vsel %vm969, %v2796, -inf
    %2811 = vmax.xlane.f32.xlu0 %v2810
    %v2812 = vpop.xlane.xlu0 %2811
    %v2813 = vsel %vm969, %v2797, -inf
    %2814 = vmax.xlane.f32.xlu0 %v2813
    %v2815 = vpop.xlane.xlu0 %2814
    %v2816 = vsel %vm969, %v2798, -inf
    %2817 = vmax.xlane.f32.xlu0 %v2816
    %v2818 = vpop.xlane.xlu0 %2817
    %v2819 = vsel %vm969, %v2799, -inf
    %2820 = vmax.xlane.f32.xlu0 %v2819
    %v2821 = vpop.xlane.xlu0 %2820
    %v2822 = vsel %vm969, %v2800, -inf
    %2823 = vmax.xlane.f32.xlu0 %v2822
    %v2824 = vpop.xlane.xlu0 %2823
    %v2825 = vsub.f32 %v2793, %v2803
    %v2826 = vsub.f32 %v2794, %v2806
    %v2827 = vsub.f32 %v2795, %v2809
    %v2828 = vsub.f32 %v2796, %v2812
    %v2829 = vsub.f32 %v2797, %v2815
    %v2830 = vsub.f32 %v2798, %v2818
    %v2831 = vsub.f32 %v2799, %v2821
    %v2832 = vsub.f32 %v2800, %v2824
    %v2833 = vmul.f32 %v2825, 1.442695
    %v2834 = vpow.pop %v2833
    %v2835 = vmul.f32 %v2826, 1.442695
    %v2836 = vpow.pop %v2835
    %v2837 = vmul.f32 %v2827, 1.442695
    %v2838 = vpow.pop %v2837
    %v2839 = vmul.f32 %v2828, 1.442695
    %v2840 = vpow.pop %v2839
    %v2841 = vmul.f32 %v2829, 1.442695
    %v2842 = vpow.pop %v2841
    %v2843 = vmul.f32 %v2830, 1.442695
    %v2844 = vpow.pop %v2843
    %v2845 = vmul.f32 %v2831, 1.442695
    %v2846 = vpow.pop %v2845
    %v2847 = vmul.f32 %v2832, 1.442695
    %v2848 = vpow.pop %v2847
    %v2849 = vsel %vm969, %v2834, 0.0
    %2850 = vadd.xlane.f32.xlu0 %v2849
    %v2851 = vpop.xlane.xlu0 %2850
    %v2852 = vsel %vm969, %v2836, 0.0
    %2853 = vadd.xlane.f32.xlu0 %v2852
    %v2854 = vpop.xlane.xlu0 %2853
    %v2855 = vsel %vm969, %v2838, 0.0
    %2856 = vadd.xlane.f32.xlu0 %v2855
    %v2857 = vpop.xlane.xlu0 %2856
    %v2858 = vsel %vm969, %v2840, 0.0
    %2859 = vadd.xlane.f32.xlu0 %v2858
    %v2860 = vpop.xlane.xlu0 %2859
    %v2861 = vsel %vm969, %v2842, 0.0
    %2862 = vadd.xlane.f32.xlu0 %v2861
    %v2863 = vpop.xlane.xlu0 %2862
    %v2864 = vsel %vm969, %v2844, 0.0
    %2865 = vadd.xlane.f32.xlu0 %v2864
    %v2866 = vpop.xlane.xlu0 %2865
    %v2867 = vsel %vm969, %v2846, 0.0
    %2868 = vadd.xlane.f32.xlu0 %v2867
    %v2869 = vpop.xlane.xlu0 %2868
    %v2870 = vsel %vm969, %v2848, 0.0
    %2871 = vadd.xlane.f32.xlu0 %v2870
    %v2872 = vpop.xlane.xlu0 %2871
    %v2873 = vrcp.pop %v2851
    %v2874 = vrcp.pop %v2854
    %v2875 = vrcp.pop %v2857
    %v2876 = vrcp.pop %v2860
    %v2877 = vrcp.pop %v2863
    %v2878 = vrcp.pop %v2866
    %v2879 = vrcp.pop %v2869
    %v2880 = vrcp.pop %v2872
    %v2881 = vmul.f32 %v2834, %v2873
    %v2882 = vmul.f32 %v2836, %v2874
    %v2883 = vmul.f32 %v2838, %v2875
    %v2884 = vmul.f32 %v2840, %v2876
    %v2885 = vmul.f32 %v2842, %v2877
    %v2886 = vmul.f32 %v2844, %v2878
    %v2887 = vmul.f32 %v2846, %v2879
    %v2888 = vmul.f32 %v2848, %v2880
    %v2890 = vsel %vm969, %v2881, 0
    %2892 = vmatprep.subr.mxu0 0.0
    %2893 = vmatpush1.msra.mxu0 %v2135
    %2894 = vmatprep.subr.mxu0 0.0
    %2895 = vmatpush1.msra.mxu0 0.0
    %2896 = vmatprep.subr.mxu0 0.0
    %2897 = vmatpush1.msra.mxu0 0.0
    %2898 = vmatprep.subr.mxu0 0.0
    %2899 = vmatpush1.msra.mxu0 0.0
    %2900 = vmatprep.subr.mxu0 0.0
    %2901 = vmatpush1.msra.mxu0 0.0
    %2902 = vmatprep.subr.mxu0 0.0
    %2903 = vmatpush1.msra.mxu0 0.0
    %2904 = vmatprep.subr.mxu0 0.0
    %2905 = vmatpush1.msra.mxu0 0.0
    %2906 = vmatprep.subr.mxu0 0.0
    %2907 = vmatpush1.msra.mxu0 0.0
    %2908 = vmatprep.subr.mxu0 0.0
    %2909 = vmatpush1.msra.mxu0 0.0
    %2910 = vmatprep.subr.mxu0 0.0
    %2911 = vmatpush1.msra.mxu0 0.0
    %2912 = vmatprep.subr.mxu0 0.0
    %2913 = vmatpush1.msra.mxu0 0.0
    %2914 = vmatprep.subr.mxu0 0.0
    %2915 = vmatpush1.msra.mxu0 0.0
    %2916 = vmatprep.subr.mxu0 0.0
    %2917 = vmatpush1.msra.mxu0 0.0
    %2918 = vmatprep.subr.mxu0 0.0
    %2919 = vmatpush1.msra.mxu0 0.0
    %2920 = vmatprep.subr.mxu0 0.0
    %2921 = vmatpush1.msra.mxu0 0.0
    %2922 = vmatprep.subr.mxu0 0.0
    %2923 = vmatpush1.msra.mxu0 0.0
    %2924 = vmatprep.subr.mxu0 0.0
    %2925 = vmatpush1.msra.mxu0 0.0
    %2926 = vmatprep.subr.mxu0 0.0
    %2927 = vmatpush1.msra.mxu0 0.0
    %2928 = vmatprep.subr.mxu0 0.0
    %2929 = vmatpush1.msra.mxu0 0.0
    %2930 = vmatprep.subr.mxu0 0.0
    %2931 = vmatpush1.msra.mxu0 0.0
    %2932 = vmatprep.subr.mxu0 0.0
    %2933 = vmatpush1.msra.mxu0 0.0
    %2934 = vmatprep.subr.mxu0 0.0
    %2935 = vmatpush1.msra.mxu0 0.0
    %2936 = vmatprep.subr.mxu0 0.0
    %2937 = vmatpush1.msra.mxu0 0.0
    %2938 = vmatprep.subr.mxu0 0.0
    %2939 = vmatpush1.msra.mxu0 0.0
    %2940 = vmatprep.subr.mxu0 0.0
    %2941 = vmatpush1.msra.mxu0 0.0
    %2942 = vmatprep.subr.mxu0 0.0
    %2943 = vmatpush1.msra.mxu0 0.0
    %2944 = vmatprep.subr.mxu0 0.0
    %2945 = vmatpush1.msra.mxu0 0.0
    %2946 = vmatprep.subr.mxu0 0.0
    %2947 = vmatpush1.msra.mxu0 0.0
    %2948 = vmatprep.subr.mxu0 0.0
    %2949 = vmatpush1.msra.mxu0 0.0
    %2950 = vmatprep.subr.mxu0 0.0
    %2951 = vmatpush1.msra.mxu0 0.0
    %2952 = vmatprep.subr.mxu0 0.0
    %2953 = vmatpush1.msra.mxu0 0.0
    %2954 = vmatprep.subr.mxu0 0.0
    %2955 = vmatpush1.msra.mxu0 0.0
    %2956 = vmatprep.mubr.f32.mxu0 0.0
    %2957 = vmatmul.mubr.f32.gmra.mrb[0].mxu0 %v2890
    %v2958 = vpop.f32.mrb[0].mxu0
    %v2959 = vadd.f32 0.0, %v2958
    %v2960 = vpop.f32.mrb[0].mxu0
    %2961 = vdwg.mxu0
    %v2963 = vsel %vm969, %v2882, 0
    %2965 = vmatprep.subr.mxu0 0.0
    %2966 = vmatpush1.msra.mxu0 %v2159
    %2967 = vmatprep.subr.mxu0 0.0
    %2968 = vmatpush1.msra.mxu0 0.0
    %2969 = vmatprep.subr.mxu0 0.0
    %2970 = vmatpush1.msra.mxu0 0.0
    %2971 = vmatprep.subr.mxu0 0.0
    %2972 = vmatpush1.msra.mxu0 0.0
    %2973 = vmatprep.subr.mxu0 0.0
    %2974 = vmatpush1.msra.mxu0 0.0
    %2975 = vmatprep.subr.mxu0 0.0
    %2976 = vmatpush1.msra.mxu0 0.0
    %2977 = vmatprep.subr.mxu0 0.0
    %2978 = vmatpush1.msra.mxu0 0.0
    %2979 = vmatprep.subr.mxu0 0.0
    %2980 = vmatpush1.msra.mxu0 0.0
    %2981 = vmatprep.subr.mxu0 0.0
    %2982 = vmatpush1.msra.mxu0 0.0
    %2983 = vmatprep.subr.mxu0 0.0
    %2984 = vmatpush1.msra.mxu0 0.0
    %2985 = vmatprep.subr.mxu0 0.0
    %2986 = vmatpush1.msra.mxu0 0.0
    %2987 = vmatprep.subr.mxu0 0.0
    %2988 = vmatpush1.msra.mxu0 0.0
    %2989 = vmatprep.subr.mxu0 0.0
    %2990 = vmatpush1.msra.mxu0 0.0
    %2991 = vmatprep.subr.mxu0 0.0
    %2992 = vmatpush1.msra.mxu0 0.0
    %2993 = vmatprep.subr.mxu0 0.0
    %2994 = vmatpush1.msra.mxu0 0.0
    %2995 = vmatprep.subr.mxu0 0.0
    %2996 = vmatpush1.msra.mxu0 0.0
    %2997 = vmatprep.subr.mxu0 0.0
    %2998 = vmatpush1.msra.mxu0 0.0
    %2999 = vmatprep.subr.mxu0 0.0
    %3000 = vmatpush1.msra.mxu0 0.0
    %3001 = vmatprep.subr.mxu0 0.0
    %3002 = vmatpush1.msra.mxu0 0.0
    %3003 = vmatprep.subr.mxu0 0.0
    %3004 = vmatpush1.msra.mxu0 0.0
    %3005 = vmatprep.subr.mxu0 0.0
    %3006 = vmatpush1.msra.mxu0 0.0
    %3007 = vmatprep.subr.mxu0 0.0
    %3008 = vmatpush1.msra.mxu0 0.0
    %3009 = vmatprep.subr.mxu0 0.0
    %3010 = vmatpush1.msra.mxu0 0.0
    %3011 = vmatprep.subr.mxu0 0.0
    %3012 = vmatpush1.msra.mxu0 0.0
    %3013 = vmatprep.subr.mxu0 0.0
    %3014 = vmatpush1.msra.mxu0 0.0
    %3015 = vmatprep.subr.mxu0 0.0
    %3016 = vmatpush1.msra.mxu0 0.0
    %3017 = vmatprep.subr.mxu0 0.0
    %3018 = vmatpush1.msra.mxu0 0.0
    %3019 = vmatprep.subr.mxu0 0.0
    %3020 = vmatpush1.msra.mxu0 0.0
    %3021 = vmatprep.subr.mxu0 0.0
    %3022 = vmatpush1.msra.mxu0 0.0
    %3023 = vmatprep.subr.mxu0 0.0
    %3024 = vmatpush1.msra.mxu0 0.0
    %3025 = vmatprep.subr.mxu0 0.0
    %3026 = vmatpush1.msra.mxu0 0.0
    %3027 = vmatprep.subr.mxu0 0.0
    %3028 = vmatpush1.msra.mxu0 0.0
    %3029 = vmatprep.mubr.f32.mxu0 0.0
    %3030 = vmatmul.mubr.f32.gmra.mrb[0].mxu0 %v2963
    %v3031 = vpop.f32.mrb[0].mxu0
    %v3032 = vadd.f32 0.0, %v3031
    %v3033 = vpop.f32.mrb[0].mxu0
    %3034 = vdwg.mxu0
    %v3036 = vsel %vm969, %v2883, 0
    %3038 = vmatprep.subr.mxu0 0.0
    %3039 = vmatpush1.msra.mxu0 %v2162
    %3040 = vmatprep.subr.mxu0 0.0
    %3041 = vmatpush1.msra.mxu0 0.0
    %3042 = vmatprep.subr.mxu0 0.0
    %3043 = vmatpush1.msra.mxu0 0.0
    %3044 = vmatprep.subr.mxu0 0.0
    %3045 = vmatpush1.msra.mxu0 0.0
    %3046 = vmatprep.subr.mxu0 0.0
    %3047 = vmatpush1.msra.mxu0 0.0
    %3048 = vmatprep.subr.mxu0 0.0
    %3049 = vmatpush1.msra.mxu0 0.0
    %3050 = vmatprep.subr.mxu0 0.0
    %3051 = vmatpush1.msra.mxu0 0.0
    %3052 = vmatprep.subr.mxu0 0.0
    %3053 = vmatpush1.msra.mxu0 0.0
    %3054 = vmatprep.subr.mxu0 0.0
    %3055 = vmatpush1.msra.mxu0 0.0
    %3056 = vmatprep.subr.mxu0 0.0
    %3057 = vmatpush1.msra.mxu0 0.0
    %3058 = vmatprep.subr.mxu0 0.0
    %3059 = vmatpush1.msra.mxu0 0.0
    %3060 = vmatprep.subr.mxu0 0.0
    %3061 = vmatpush1.msra.mxu0 0.0
    %3062 = vmatprep.subr.mxu0 0.0
    %3063 = vmatpush1.msra.mxu0 0.0
    %3064 = vmatprep.subr.mxu0 0.0
    %3065 = vmatpush1.msra.mxu0 0.0
    %3066 = vmatprep.subr.mxu0 0.0
    %3067 = vmatpush1.msra.mxu0 0.0
    %3068 = vmatprep.subr.mxu0 0.0
    %3069 = vmatpush1.msra.mxu0 0.0
    %3070 = vmatprep.subr.mxu0 0.0
    %3071 = vmatpush1.msra.mxu0 0.0
    %3072 = vmatprep.subr.mxu0 0.0
    %3073 = vmatpush1.msra.mxu0 0.0
    %3074 = vmatprep.subr.mxu0 0.0
    %3075 = vmatpush1.msra.mxu0 0.0
    %3076 = vmatprep.subr.mxu0 0.0
    %3077 = vmatpush1.msra.mxu0 0.0
    %3078 = vmatprep.subr.mxu0 0.0
    %3079 = vmatpush1.msra.mxu0 0.0
    %3080 = vmatprep.subr.mxu0 0.0
    %3081 = vmatpush1.msra.mxu0 0.0
    %3082 = vmatprep.subr.mxu0 0.0
    %3083 = vmatpush1.msra.mxu0 0.0
    %3084 = vmatprep.subr.mxu0 0.0
    %3085 = vmatpush1.msra.mxu0 0.0
    %3086 = vmatprep.subr.mxu0 0.0
    %3087 = vmatpush1.msra.mxu0 0.0
    %3088 = vmatprep.subr.mxu0 0.0
    %3089 = vmatpush1.msra.mxu0 0.0
    %3090 = vmatprep.subr.mxu0 0.0
    %3091 = vmatpush1.msra.mxu0 0.0
    %3092 = vmatprep.subr.mxu0 0.0
    %3093 = vmatpush1.msra.mxu0 0.0
    %3094 = vmatprep.subr.mxu0 0.0
    %3095 = vmatpush1.msra.mxu0 0.0
    %3096 = vmatprep.subr.mxu0 0.0
    %3097 = vmatpush1.msra.mxu0 0.0
    %3098 = vmatprep.subr.mxu0 0.0
    %3099 = vmatpush1.msra.mxu0 0.0
    %3100 = vmatprep.subr.mxu0 0.0
    %3101 = vmatpush1.msra.mxu0 0.0
    %3102 = vmatprep.mubr.f32.mxu0 0.0
    %3103 = vmatmul.mubr.f32.gmra.mrb[0].mxu0 %v3036
    %v3104 = vpop.f32.mrb[0].mxu0
    %v3105 = vadd.f32 0.0, %v3104
    %v3106 = vpop.f32.mrb[0].mxu0
    %3107 = vdwg.mxu0
    %v3109 = vsel %vm969, %v2884, 0
    %3111 = vmatprep.subr.mxu0 0.0
    %3112 = vmatpush1.msra.mxu0 %v2165
    %3113 = vmatprep.subr.mxu0 0.0
    %3114 = vmatpush1.msra.mxu0 0.0
    %3115 = vmatprep.subr.mxu0 0.0
    %3116 = vmatpush1.msra.mxu0 0.0
    %3117 = vmatprep.subr.mxu0 0.0
    %3118 = vmatpush1.msra.mxu0 0.0
    %3119 = vmatprep.subr.mxu0 0.0
    %3120 = vmatpush1.msra.mxu0 0.0
    %3121 = vmatprep.subr.mxu0 0.0
    %3122 = vmatpush1.msra.mxu0 0.0
    %3123 = vmatprep.subr.mxu0 0.0
    %3124 = vmatpush1.msra.mxu0 0.0
    %3125 = vmatprep.subr.mxu0 0.0
    %3126 = vmatpush1.msra.mxu0 0.0
    %3127 = vmatprep.subr.mxu0 0.0
    %3128 = vmatpush1.msra.mxu0 0.0
    %3129 = vmatprep.subr.mxu0 0.0
    %3130 = vmatpush1.msra.mxu0 0.0
    %3131 = vmatprep.subr.mxu0 0.0
    %3132 = vmatpush1.msra.mxu0 0.0
    %3133 = vmatprep.subr.mxu0 0.0
    %3134 = vmatpush1.msra.mxu0 0.0
    %3135 = vmatprep.subr.mxu0 0.0
    %3136 = vmatpush1.msra.mxu0 0.0
    %3137 = vmatprep.subr.mxu0 0.0
    %3138 = vmatpush1.msra.mxu0 0.0
    %3139 = vmatprep.subr.mxu0 0.0
    %3140 = vmatpush1.msra.mxu0 0.0
    %3141 = vmatprep.subr.mxu0 0.0
    %3142 = vmatpush1.msra.mxu0 0.0
    %3143 = vmatprep.subr.mxu0 0.0
    %3144 = vmatpush1.msra.mxu0 0.0
    %3145 = vmatprep.subr.mxu0 0.0
    %3146 = vmatpush1.msra.mxu0 0.0
    %3147 = vmatprep.subr.mxu0 0.0
    %3148 = vmatpush1.msra.mxu0 0.0
    %3149 = vmatprep.subr.mxu0 0.0
    %3150 = vmatpush1.msra.mxu0 0.0
    %3151 = vmatprep.subr.mxu0 0.0
    %3152 = vmatpush1.msra.mxu0 0.0
    %3153 = vmatprep.subr.mxu0 0.0
    %3154 = vmatpush1.msra.mxu0 0.0
    %3155 = vmatprep.subr.mxu0 0.0
    %3156 = vmatpush1.msra.mxu0 0.0
    %3157 = vmatprep.subr.mxu0 0.0
    %3158 = vmatpush1.msra.mxu0 0.0
    %3159 = vmatprep.subr.mxu0 0.0
    %3160 = vmatpush1.msra.mxu0 0.0
    %3161 = vmatprep.subr.mxu0 0.0
    %3162 = vmatpush1.msra.mxu0 0.0
    %3163 = vmatprep.subr.mxu0 0.0
    %3164 = vmatpush1.msra.mxu0 0.0
    %3165 = vmatprep.subr.mxu0 0.0
    %3166 = vmatpush1.msra.mxu0 0.0
    %3167 = vmatprep.subr.mxu0 0.0
    %3168 = vmatpush1.msra.mxu0 0.0
    %3169 = vmatprep.subr.mxu0 0.0
    %3170 = vmatpush1.msra.mxu0 0.0
    %3171 = vmatprep.subr.mxu0 0.0
    %3172 = vmatpush1.msra.mxu0 0.0
    %3173 = vmatprep.subr.mxu0 0.0
    %3174 = vmatpush1.msra.mxu0 0.0
    %3175 = vmatprep.mubr.f32.mxu0 0.0
    %3176 = vmatmul.mubr.f32.gmra.mrb[0].mxu0 %v3109
    %v3177 = vpop.f32.mrb[0].mxu0
    %v3178 = vadd.f32 0.0, %v3177
    %v3179 = vpop.f32.mrb[0].mxu0
    %3180 = vdwg.mxu0
    %v3182 = vsel %vm969, %v2885, 0
    %3184 = vmatprep.subr.mxu0 0.0
    %3185 = vmatpush1.msra.mxu0 %v2141
    %3186 = vmatprep.subr.mxu0 0.0
    %3187 = vmatpush1.msra.mxu0 0.0
    %3188 = vmatprep.subr.mxu0 0.0
    %3189 = vmatpush1.msra.mxu0 0.0
    %3190 = vmatprep.subr.mxu0 0.0
    %3191 = vmatpush1.msra.mxu0 0.0
    %3192 = vmatprep.subr.mxu0 0.0
    %3193 = vmatpush1.msra.mxu0 0.0
    %3194 = vmatprep.subr.mxu0 0.0
    %3195 = vmatpush1.msra.mxu0 0.0
    %3196 = vmatprep.subr.mxu0 0.0
    %3197 = vmatpush1.msra.mxu0 0.0
    %3198 = vmatprep.subr.mxu0 0.0
    %3199 = vmatpush1.msra.mxu0 0.0
    %3200 = vmatprep.subr.mxu0 0.0
    %3201 = vmatpush1.msra.mxu0 0.0
    %3202 = vmatprep.subr.mxu0 0.0
    %3203 = vmatpush1.msra.mxu0 0.0
    %3204 = vmatprep.subr.mxu0 0.0
    %3205 = vmatpush1.msra.mxu0 0.0
    %3206 = vmatprep.subr.mxu0 0.0
    %3207 = vmatpush1.msra.mxu0 0.0
    %3208 = vmatprep.subr.mxu0 0.0
    %3209 = vmatpush1.msra.mxu0 0.0
    %3210 = vmatprep.subr.mxu0 0.0
    %3211 = vmatpush1.msra.mxu0 0.0
    %3212 = vmatprep.subr.mxu0 0.0
    %3213 = vmatpush1.msra.mxu0 0.0
    %3214 = vmatprep.subr.mxu0 0.0
    %3215 = vmatpush1.msra.mxu0 0.0
    %3216 = vmatprep.subr.mxu0 0.0
    %3217 = vmatpush1.msra.mxu0 0.0
    %3218 = vmatprep.subr.mxu0 0.0
    %3219 = vmatpush1.msra.mxu0 0.0
    %3220 = vmatprep.subr.mxu0 0.0
    %3221 = vmatpush1.msra.mxu0 0.0
    %3222 = vmatprep.subr.mxu0 0.0
    %3223 = vmatpush1.msra.mxu0 0.0
    %3224 = vmatprep.subr.mxu0 0.0
    %3225 = vmatpush1.msra.mxu0 0.0
    %3226 = vmatprep.subr.mxu0 0.0
    %3227 = vmatpush1.msra.mxu0 0.0
    %3228 = vmatprep.subr.mxu0 0.0
    %3229 = vmatpush1.msra.mxu0 0.0
    %3230 = vmatprep.subr.mxu0 0.0
    %3231 = vmatpush1.msra.mxu0 0.0
    %3232 = vmatprep.subr.mxu0 0.0
    %3233 = vmatpush1.msra.mxu0 0.0
    %3234 = vmatprep.subr.mxu0 0.0
    %3235 = vmatpush1.msra.mxu0 0.0
    %3236 = vmatprep.subr.mxu0 0.0
    %3237 = vmatpush1.msra.mxu0 0.0
    %3238 = vmatprep.subr.mxu0 0.0
    %3239 = vmatpush1.msra.mxu0 0.0
    %3240 = vmatprep.subr.mxu0 0.0
    %3241 = vmatpush1.msra.mxu0 0.0
    %3242 = vmatprep.subr.mxu0 0.0
    %3243 = vmatpush1.msra.mxu0 0.0
    %3244 = vmatprep.subr.mxu0 0.0
    %3245 = vmatpush1.msra.mxu0 0.0
    %3246 = vmatprep.subr.mxu0 0.0
    %3247 = vmatpush1.msra.mxu0 0.0
    %3248 = vmatprep.mubr.f32.mxu0 0.0
    %3249 = vmatmul.mubr.f32.gmra.mrb[0].mxu0 %v3182
    %v3250 = vpop.f32.mrb[0].mxu0
    %v3251 = vadd.f32 0.0, %v3250
    %v3252 = vpop.f32.mrb[0].mxu0
    %3253 = vdwg.mxu0
    %v3255 = vsel %vm969, %v2886, 0
    %3257 = vmatprep.subr.mxu0 0.0
    %3258 = vmatpush1.msra.mxu0 %v2169
    %3259 = vmatprep.subr.mxu0 0.0
    %3260 = vmatpush1.msra.mxu0 0.0
    %3261 = vmatprep.subr.mxu0 0.0
    %3262 = vmatpush1.msra.mxu0 0.0
    %3263 = vmatprep.subr.mxu0 0.0
    %3264 = vmatpush1.msra.mxu0 0.0
    %3265 = vmatprep.subr.mxu0 0.0
    %3266 = vmatpush1.msra.mxu0 0.0
    %3267 = vmatprep.subr.mxu0 0.0
    %3268 = vmatpush1.msra.mxu0 0.0
    %3269 = vmatprep.subr.mxu0 0.0
    %3270 = vmatpush1.msra.mxu0 0.0
    %3271 = vmatprep.subr.mxu0 0.0
    %3272 = vmatpush1.msra.mxu0 0.0
    %3273 = vmatprep.subr.mxu0 0.0
    %3274 = vmatpush1.msra.mxu0 0.0
    %3275 = vmatprep.subr.mxu0 0.0
    %3276 = vmatpush1.msra.mxu0 0.0
    %3277 = vmatprep.subr.mxu0 0.0
    %3278 = vmatpush1.msra.mxu0 0.0
    %3279 = vmatprep.subr.mxu0 0.0
    %3280 = vmatpush1.msra.mxu0 0.0
    %3281 = vmatprep.subr.mxu0 0.0
    %3282 = vmatpush1.msra.mxu0 0.0
    %3283 = vmatprep.subr.mxu0 0.0
    %3284 = vmatpush1.msra.mxu0 0.0
    %3285 = vmatprep.subr.mxu0 0.0
    %3286 = vmatpush1.msra.mxu0 0.0
    %3287 = vmatprep.subr.mxu0 0.0
    %3288 = vmatpush1.msra.mxu0 0.0
    %3289 = vmatprep.subr.mxu0 0.0
    %3290 = vmatpush1.msra.mxu0 0.0
    %3291 = vmatprep.subr.mxu0 0.0
    %3292 = vmatpush1.msra.mxu0 0.0
    %3293 = vmatprep.subr.mxu0 0.0
    %3294 = vmatpush1.msra.mxu0 0.0
    %3295 = vmatprep.subr.mxu0 0.0
    %3296 = vmatpush1.msra.mxu0 0.0
    %3297 = vmatprep.subr.mxu0 0.0
    %3298 = vmatpush1.msra.mxu0 0.0
    %3299 = vmatprep.subr.mxu0 0.0
    %3300 = vmatpush1.msra.mxu0 0.0
    %3301 = vmatprep.subr.mxu0 0.0
    %3302 = vmatpush1.msra.mxu0 0.0
    %3303 = vmatprep.subr.mxu0 0.0
    %3304 = vmatpush1.msra.mxu0 0.0
    %3305 = vmatprep.subr.mxu0 0.0
    %3306 = vmatpush1.msra.mxu0 0.0
    %3307 = vmatprep.subr.mxu0 0.0
    %3308 = vmatpush1.msra.mxu0 0.0
    %3309 = vmatprep.subr.mxu0 0.0
    %3310 = vmatpush1.msra.mxu0 0.0
    %3311 = vmatprep.subr.mxu0 0.0
    %3312 = vmatpush1.msra.mxu0 0.0
    %3313 = vmatprep.subr.mxu0 0.0
    %3314 = vmatpush1.msra.mxu0 0.0
    %3315 = vmatprep.subr.mxu0 0.0
    %3316 = vmatpush1.msra.mxu0 0.0
    %3317 = vmatprep.subr.mxu0 0.0
    %3318 = vmatpush1.msra.mxu0 0.0
    %3319 = vmatprep.subr.mxu0 0.0
    %3320 = vmatpush1.msra.mxu0 0.0
    %3321 = vmatprep.mubr.f32.mxu0 0.0
    %3322 = vmatmul.mubr.f32.gmra.mrb[0].mxu0 %v3255
    %v3323 = vpop.f32.mrb[0].mxu0
    %v3324 = vadd.f32 0.0, %v3323
    %v3325 = vpop.f32.mrb[0].mxu0
    %3326 = vdwg.mxu0
    %v3328 = vsel %vm969, %v2887, 0
    %3330 = vmatprep.subr.mxu0 0.0
    %3331 = vmatpush1.msra.mxu0 %v2172
    %3332 = vmatprep.subr.mxu0 0.0
    %3333 = vmatpush1.msra.mxu0 0.0
    %3334 = vmatprep.subr.mxu0 0.0
    %3335 = vmatpush1.msra.mxu0 0.0
    %3336 = vmatprep.subr.mxu0 0.0
    %3337 = vmatpush1.msra.mxu0 0.0
    %3338 = vmatprep.subr.mxu0 0.0
    %3339 = vmatpush1.msra.mxu0 0.0
    %3340 = vmatprep.subr.mxu0 0.0
    %3341 = vmatpush1.msra.mxu0 0.0
    %3342 = vmatprep.subr.mxu0 0.0
    %3343 = vmatpush1.msra.mxu0 0.0
    %3344 = vmatprep.subr.mxu0 0.0
    %3345 = vmatpush1.msra.mxu0 0.0
    %3346 = vmatprep.subr.mxu0 0.0
    %3347 = vmatpush1.msra.mxu0 0.0
    %3348 = vmatprep.subr.mxu0 0.0
    %3349 = vmatpush1.msra.mxu0 0.0
    %3350 = vmatprep.subr.mxu0 0.0
    %3351 = vmatpush1.msra.mxu0 0.0
    %3352 = vmatprep.subr.mxu0 0.0
    %3353 = vmatpush1.msra.mxu0 0.0
    %3354 = vmatprep.subr.mxu0 0.0
    %3355 = vmatpush1.msra.mxu0 0.0
    %3356 = vmatprep.subr.mxu0 0.0
    %3357 = vmatpush1.msra.mxu0 0.0
    %3358 = vmatprep.subr.mxu0 0.0
    %3359 = vmatpush1.msra.mxu0 0.0
    %3360 = vmatprep.subr.mxu0 0.0
    %3361 = vmatpush1.msra.mxu0 0.0
    %3362 = vmatprep.subr.mxu0 0.0
    %3363 = vmatpush1.msra.mxu0 0.0
    %3364 = vmatprep.subr.mxu0 0.0
    %3365 = vmatpush1.msra.mxu0 0.0
    %3366 = vmatprep.subr.mxu0 0.0
    %3367 = vmatpush1.msra.mxu0 0.0
    %3368 = vmatprep.subr.mxu0 0.0
    %3369 = vmatpush1.msra.mxu0 0.0
    %3370 = vmatprep.subr.mxu0 0.0
    %3371 = vmatpush1.msra.mxu0 0.0
    %3372 = vmatprep.subr.mxu0 0.0
    %3373 = vmatpush1.msra.mxu0 0.0
    %3374 = vmatprep.subr.mxu0 0.0
    %3375 = vmatpush1.msra.mxu0 0.0
    %3376 = vmatprep.subr.mxu0 0.0
    %3377 = vmatpush1.msra.mxu0 0.0
    %3378 = vmatprep.subr.mxu0 0.0
    %3379 = vmatpush1.msra.mxu0 0.0
    %3380 = vmatprep.subr.mxu0 0.0
    %3381 = vmatpush1.msra.mxu0 0.0
    %3382 = vmatprep.subr.mxu0 0.0
    %3383 = vmatpush1.msra.mxu0 0.0
    %3384 = vmatprep.subr.mxu0 0.0
    %3385 = vmatpush1.msra.mxu0 0.0
    %3386 = vmatprep.subr.mxu0 0.0
    %3387 = vmatpush1.msra.mxu0 0.0
    %3388 = vmatprep.subr.mxu0 0.0
    %3389 = vmatpush1.msra.mxu0 0.0
    %3390 = vmatprep.subr.mxu0 0.0
    %3391 = vmatpush1.msra.mxu0 0.0
    %3392 = vmatprep.subr.mxu0 0.0
    %3393 = vmatpush1.msra.mxu0 0.0
    %3394 = vmatprep.mubr.f32.mxu0 0.0
    %3395 = vmatmul.mubr.f32.gmra.mrb[0].mxu0 %v3328
    %v3396 = vpop.f32.mrb[0].mxu0
    %v3397 = vadd.f32 0.0, %v3396
    %v3398 = vpop.f32.mrb[0].mxu0
    %3399 = vdwg.mxu0
    %v3401 = vsel %vm969, %v2888, 0
    %3403 = vmatprep.subr.mxu0 0.0
    %3404 = vmatpush1.msra.mxu0 %v2175
    %3405 = vmatprep.subr.mxu0 0.0
    %3406 = vmatpush1.msra.mxu0 0.0
    %3407 = vmatprep.subr.mxu0 0.0
    %3408 = vmatpush1.msra.mxu0 0.0
    %3409 = vmatprep.subr.mxu0 0.0
    %3410 = vmatpush1.msra.mxu0 0.0
    %3411 = vmatprep.subr.mxu0 0.0
    %3412 = vmatpush1.msra.mxu0 0.0
    %3413 = vmatprep.subr.mxu0 0.0
    %3414 = vmatpush1.msra.mxu0 0.0
    %3415 = vmatprep.subr.mxu0 0.0
    %3416 = vmatpush1.msra.mxu0 0.0
    %3417 = vmatprep.subr.mxu0 0.0
    %3418 = vmatpush1.msra.mxu0 0.0
    %3419 = vmatprep.subr.mxu0 0.0
    %3420 = vmatpush1.msra.mxu0 0.0
    %3421 = vmatprep.subr.mxu0 0.0
    %3422 = vmatpush1.msra.mxu0 0.0
    %3423 = vmatprep.subr.mxu0 0.0
    %3424 = vmatpush1.msra.mxu0 0.0
    %3425 = vmatprep.subr.mxu0 0.0
    %3426 = vmatpush1.msra.mxu0 0.0
    %3427 = vmatprep.subr.mxu0 0.0
    %3428 = vmatpush1.msra.mxu0 0.0
    %3429 = vmatprep.subr.mxu0 0.0
    %3430 = vmatpush1.msra.mxu0 0.0
    %3431 = vmatprep.subr.mxu0 0.0
    %3432 = vmatpush1.msra.mxu0 0.0
    %3433 = vmatprep.subr.mxu0 0.0
    %3434 = vmatpush1.msra.mxu0 0.0
    %3435 = vmatprep.subr.mxu0 0.0
    %3436 = vmatpush1.msra.mxu0 0.0
    %3437 = vmatprep.subr.mxu0 0.0
    %3438 = vmatpush1.msra.mxu0 0.0
    %3439 = vmatprep.subr.mxu0 0.0
    %3440 = vmatpush1.msra.mxu0 0.0
    %3441 = vmatprep.subr.mxu0 0.0
    %3442 = vmatpush1.msra.mxu0 0.0
    %3443 = vmatprep.subr.mxu0 0.0
    %3444 = vmatpush1.msra.mxu0 0.0
    %3445 = vmatprep.subr.mxu0 0.0
    %3446 = vmatpush1.msra.mxu0 0.0
    %3447 = vmatprep.subr.mxu0 0.0
    %3448 = vmatpush1.msra.mxu0 0.0
    %3449 = vmatprep.subr.mxu0 0.0
    %3450 = vmatpush1.msra.mxu0 0.0
    %3451 = vmatprep.subr.mxu0 0.0
    %3452 = vmatpush1.msra.mxu0 0.0
    %3453 = vmatprep.subr.mxu0 0.0
    %3454 = vmatpush1.msra.mxu0 0.0
    %3455 = vmatprep.subr.mxu0 0.0
    %3456 = vmatpush1.msra.mxu0 0.0
    %3457 = vmatprep.subr.mxu0 0.0
    %3458 = vmatpush1.msra.mxu0 0.0
    %3459 = vmatprep.subr.mxu0 0.0
    %3460 = vmatpush1.msra.mxu0 0.0
    %3461 = vmatprep.subr.mxu0 0.0
    %3462 = vmatpush1.msra.mxu0 0.0
    %3463 = vmatprep.subr.mxu0 0.0
    %3464 = vmatpush1.msra.mxu0 0.0
    %3465 = vmatprep.subr.mxu0 0.0
    %3466 = vmatpush1.msra.mxu0 0.0
    %3467 = vmatprep.mubr.f32.mxu0 0.0
    %3468 = vmatmul.mubr.f32.gmra.mrb[0].mxu0 %v3401
    %v3469 = vpop.f32.mrb[0].mxu0
    %v3470 = vadd.f32 0.0, %v3469
    %v3471 = vpop.f32.mrb[0].mxu0
    %3472 = vdwg.mxu0
    %3474 = vrot.lane.b32.xlu0 %v3032, 16
    %v3475 = vpop.permute.xlu0 %3474
    %3478 = vrot.lane.b32.xlu0 %v3105, 32
    %v3479 = vpop.permute.xlu0 %3478
    %3482 = vrot.lane.b32.xlu0 %v3178, 48
    %v3483 = vpop.permute.xlu0 %3482
    %v3485 = vsel %vm298, %v2959, %v3475
    %v3486 = vsel %vm41, %v3485, %v3479
    %v3487 = vsel %vm1656, %v3486, %v3483
    %3489 = vrot.lane.b32.xlu0 %v3324, 16
    %v3490 = vpop.permute.xlu0 %3489
    %3493 = vrot.lane.b32.xlu0 %v3397, 32
    %v3494 = vpop.permute.xlu0 %3493
    %3497 = vrot.lane.b32.xlu0 %v3470, 48
    %v3498 = vpop.permute.xlu0 %3497
    %v3500 = vsel %vm298, %v3251, %v3490
    %v3501 = vsel %vm41, %v3500, %v3494
    %v3502 = vsel %vm1656, %v3501, %v3498
    %v3503 = vlaneseq
    %v3504 = vshrl.u32 %v3503, 7
    %v3505 = vsub.s32 0, %v3504
    %v3506 = vrot.slane %v2043, %v3505
    %v3508 = vsel %vm1677, %v3487, 0
    %v3511 = vsel %vm1677, %v3502, 0
    %3513 = vmatprep.subr.mxu0 0.0
    %3514 = vmatpush1.msra.mxu0 %v2027
    %3515 = vmatprep.subr.mxu0 0.0
    %3516 = vmatpush1.msra.mxu0 %v2028
    %3517 = vmatprep.subr.mxu0 0.0
    %3518 = vmatpush1.msra.mxu0 %v2029
    %3519 = vmatprep.subr.mxu0 0.0
    %3520 = vmatpush1.msra.mxu0 %v2030
    %3521 = vmatprep.subr.mxu0 0.0
    %3522 = vmatpush1.msra.mxu0 %v2031
    %3523 = vmatprep.subr.mxu0 0.0
    %3524 = vmatpush1.msra.mxu0 %v2032
    %3525 = vmatprep.subr.mxu0 0.0
    %3526 = vmatpush1.msra.mxu0 %v2033
    %3527 = vmatprep.subr.mxu0 0.0
    %3528 = vmatpush1.msra.mxu0 %v2034
    %3529 = vmatprep.subr.mxu0 0.0
    %3530 = vmatpush1.msra.mxu0 0.0
    %3531 = vmatprep.subr.mxu0 0.0
    %3532 = vmatpush1.msra.mxu0 0.0
    %3533 = vmatprep.subr.mxu0 0.0
    %3534 = vmatpush1.msra.mxu0 0.0
    %3535 = vmatprep.subr.mxu0 0.0
    %3536 = vmatpush1.msra.mxu0 0.0
    %3537 = vmatprep.subr.mxu0 0.0
    %3538 = vmatpush1.msra.mxu0 0.0
    %3539 = vmatprep.subr.mxu0 0.0
    %3540 = vmatpush1.msra.mxu0 0.0
    %3541 = vmatprep.subr.mxu0 0.0
    %3542 = vmatpush1.msra.mxu0 0.0
    %3543 = vmatprep.subr.mxu0 0.0
    %3544 = vmatpush1.msra.mxu0 0.0
    %3545 = vmatprep.subr.mxu0 0.0
    %3546 = vmatpush1.msra.mxu0 0.0
    %3547 = vmatprep.subr.mxu0 0.0
    %3548 = vmatpush1.msra.mxu0 0.0
    %3549 = vmatprep.subr.mxu0 0.0
    %3550 = vmatpush1.msra.mxu0 0.0
    %3551 = vmatprep.subr.mxu0 0.0
    %3552 = vmatpush1.msra.mxu0 0.0
    %3553 = vmatprep.subr.mxu0 0.0
    %3554 = vmatpush1.msra.mxu0 0.0
    %3555 = vmatprep.subr.mxu0 0.0
    %3556 = vmatpush1.msra.mxu0 0.0
    %3557 = vmatprep.subr.mxu0 0.0
    %3558 = vmatpush1.msra.mxu0 0.0
    %3559 = vmatprep.subr.mxu0 0.0
    %3560 = vmatpush1.msra.mxu0 0.0
    %3561 = vmatprep.subr.mxu0 0.0
    %3562 = vmatpush1.msra.mxu0 0.0
    %3563 = vmatprep.subr.mxu0 0.0
    %3564 = vmatpush1.msra.mxu0 0.0
    %3565 = vmatprep.subr.mxu0 0.0
    %3566 = vmatpush1.msra.mxu0 0.0
    %3567 = vmatprep.subr.mxu0 0.0
    %3568 = vmatpush1.msra.mxu0 0.0
    %3569 = vmatprep.subr.mxu0 0.0
    %3570 = vmatpush1.msra.mxu0 0.0
    %3571 = vmatprep.subr.mxu0 0.0
    %3572 = vmatpush1.msra.mxu0 0.0
    %3573 = vmatprep.subr.mxu0 0.0
    %3574 = vmatpush1.msra.mxu0 0.0
    %3575 = vmatprep.subr.mxu0 0.0
    %3576 = vmatpush1.msra.mxu0 0.0
    %3577 = vmatprep.mubr.f32.mxu0 0.0
    %3578 = vmatmul.mubr.f32.gmra.mrb[0].mxu0 %v3508
    %v3579 = vpop.f32.mrb[0].mxu0
    %v3580 = vadd.f32 %v3506, %v3579
    %v3581 = vpop.f32.mrb[0].mxu0
    %3582 = vmatprep.mubr.f32.mxu0 0.0
    %3583 = vmatmul.mubr.f32.gmra.mrb[0].mxu0 %v3511
    %v3584 = vpop.f32.mrb[0].mxu0
    %v3585 = vadd.f32 %v3506, %v3584
    %v3586 = vpop.f32.mrb[0].mxu0
    %3587 = vdwg.mxu0
    %v3588 = vadd.f32 %v3580, %v2010
    %v3589 = vadd.f32 %v3585, %v2011
    %v3590 = vsel %vm41, %v3588, 0.0
    %3591 = vadd.xlane.f32.xlu0 %v3590
    %v3592 = vpop.xlane.xlu0 %3591
    %v3593 = vsel %vm41, %v3589, 0.0
    %3594 = vadd.xlane.f32.xlu0 %v3593
    %v3595 = vpop.xlane.xlu0 %3594
    %v3596 = vmul.f32 %v3592, %v1767
    %v3597 = vmul.f32 %v3595, %v1767
    %v3598 = vsub.f32 %v3588, %v3596
    %v3599 = vsub.f32 %v3589, %v3597
    %v3600 = vmul.f32 %v3598, %v3598
    %v3601 = vmul.f32 %v3599, %v3599
    %v3602 = vsel %vm41, %v3600, 0.0
    %3603 = vadd.xlane.f32.xlu0 %v3602
    %v3604 = vpop.xlane.xlu0 %3603
    %v3605 = vsel %vm41, %v3601, 0.0
    %3606 = vadd.xlane.f32.xlu0 %v3605
    %v3607 = vpop.xlane.xlu0 %3606
    %v3608 = vmul.f32 %v3604, %v1767
    %v3609 = vmul.f32 %v3607, %v1767
    %v3610 = vadd.f32 %v3608, 1e-05
    %v3611 = vadd.f32 %v3609, 1e-05
    %v3612 = vrsqrt.pop %v3610
    %v3613 = vrsqrt.pop %v3611
    %v3614 = vmul.f32 %v3598, %v3612
    %v3615 = vmul.f32 %v3599, %v3613
    %v3616 = vlaneseq
    %v3617 = vshrl.u32 %v3616, 7
    %v3618 = vsub.s32 0, %v3617
    %v3619 = vrot.slane %v2044, %v3618
    %v3620 = vmul.f32 %v3614, %v3619
    %v3621 = vmul.f32 %v3615, %v3619
    %v3622 = vlaneseq
    %v3623 = vshrl.u32 %v3622, 7
    %v3624 = vsub.s32 0, %v3623
    %v3625 = vrot.slane %v2045, %v3624
    %v3626 = vadd.f32 %v3620, %v3625
    %v3627 = vadd.f32 %v3621, %v3625
    %v3628 = vlaneseq
    %v3629 = vshrl.u32 %v3628, 7
    %v3630 = vsub.s32 0, %v3629
    %v3631 = vrot.slane %v2026, %v3630
    %v3633 = vsel %vm41, %v3626, 0
    %v3636 = vsel %vm41, %v3627, 0
    %3638 = vmatprep.subr.mxu0 0.0
    %3639 = vmatpush1.msra.mxu0 %v2022
    %3640 = vmatprep.subr.mxu0 0.0
    %3641 = vmatpush1.msra.mxu0 %v2023
    %3642 = vmatprep.subr.mxu0 0.0
    %3643 = vmatpush1.msra.mxu0 %v2024
    %3644 = vmatprep.subr.mxu0 0.0
    %3645 = vmatpush1.msra.mxu0 %v2025
    %3646 = vmatprep.subr.mxu0 0.0
    %3647 = vmatpush1.msra.mxu0 0.0
    %3648 = vmatprep.subr.mxu0 0.0
    %3649 = vmatpush1.msra.mxu0 0.0
    %3650 = vmatprep.subr.mxu0 0.0
    %3651 = vmatpush1.msra.mxu0 0.0
    %3652 = vmatprep.subr.mxu0 0.0
    %3653 = vmatpush1.msra.mxu0 0.0
    %3654 = vmatprep.subr.mxu0 0.0
    %3655 = vmatpush1.msra.mxu0 0.0
    %3656 = vmatprep.subr.mxu0 0.0
    %3657 = vmatpush1.msra.mxu0 0.0
    %3658 = vmatprep.subr.mxu0 0.0
    %3659 = vmatpush1.msra.mxu0 0.0
    %3660 = vmatprep.subr.mxu0 0.0
    %3661 = vmatpush1.msra.mxu0 0.0
    %3662 = vmatprep.subr.mxu0 0.0
    %3663 = vmatpush1.msra.mxu0 0.0
    %3664 = vmatprep.subr.mxu0 0.0
    %3665 = vmatpush1.msra.mxu0 0.0
    %3666 = vmatprep.subr.mxu0 0.0
    %3667 = vmatpush1.msra.mxu0 0.0
    %3668 = vmatprep.subr.mxu0 0.0
    %3669 = vmatpush1.msra.mxu0 0.0
    %3670 = vmatprep.subr.mxu0 0.0
    %3671 = vmatpush1.msra.mxu0 0.0
    %3672 = vmatprep.subr.mxu0 0.0
    %3673 = vmatpush1.msra.mxu0 0.0
    %3674 = vmatprep.subr.mxu0 0.0
    %3675 = vmatpush1.msra.mxu0 0.0
    %3676 = vmatprep.subr.mxu0 0.0
    %3677 = vmatpush1.msra.mxu0 0.0
    %3678 = vmatprep.subr.mxu0 0.0
    %3679 = vmatpush1.msra.mxu0 0.0
    %3680 = vmatprep.subr.mxu0 0.0
    %3681 = vmatpush1.msra.mxu0 0.0
    %3682 = vmatprep.subr.mxu0 0.0
    %3683 = vmatpush1.msra.mxu0 0.0
    %3684 = vmatprep.subr.mxu0 0.0
    %3685 = vmatpush1.msra.mxu0 0.0
    %3686 = vmatprep.subr.mxu0 0.0
    %3687 = vmatpush1.msra.mxu0 0.0
    %3688 = vmatprep.subr.mxu0 0.0
    %3689 = vmatpush1.msra.mxu0 0.0
    %3690 = vmatprep.subr.mxu0 0.0
    %3691 = vmatpush1.msra.mxu0 0.0
    %3692 = vmatprep.subr.mxu0 0.0
    %3693 = vmatpush1.msra.mxu0 0.0
    %3694 = vmatprep.subr.mxu0 0.0
    %3695 = vmatpush1.msra.mxu0 0.0
    %3696 = vmatprep.subr.mxu0 0.0
    %3697 = vmatpush1.msra.mxu0 0.0
    %3698 = vmatprep.subr.mxu0 0.0
    %3699 = vmatpush1.msra.mxu0 0.0
    %3700 = vmatprep.subr.mxu0 0.0
    %3701 = vmatpush1.msra.mxu0 0.0
    %3702 = vmatprep.mubr.f32.mxu0 0.0
    %3703 = vmatmul.mubr.f32.gmra.mrb[0].mxu0 %v3633
    %v3704 = vpop.f32.mrb[0].mxu0
    %v3705 = vadd.f32 %v3631, %v3704
    %v3706 = vpop.f32.mrb[0].mxu0
    %3707 = vmatprep.mubr.f32.mxu0 0.0
    %3708 = vmatmul.mubr.f32.gmra.mrb[0].mxu0 %v3636
    %v3709 = vpop.f32.mrb[0].mxu0
    %v3710 = vadd.f32 %v3631, %v3709
    %v3711 = vpop.f32.mrb[0].mxu0
    %3712 = vdwg.mxu0
    %v3713 = vmax.f32 %v3705, 0.0
    %v3714 = vmax.f32 %v3710, 0.0
    %v3715 = vlaneseq
    %v3716 = vshrl.u32 %v3715, 7
    %v3717 = vsub.s32 0, %v3716
    %v3718 = vrot.slane %v2046, %v3717
    %v3720 = vsel %vm1677, %v3713, 0
    %v3723 = vsel %vm1677, %v3714, 0
    %3725 = vmatprep.subr.mxu0 0.0
    %3726 = vmatpush1.msra.mxu0 %v2035
    %3727 = vmatprep.subr.mxu0 0.0
    %3728 = vmatpush1.msra.mxu0 %v2036
    %3729 = vmatprep.subr.mxu0 0.0
    %3730 = vmatpush1.msra.mxu0 %v2037
    %3731 = vmatprep.subr.mxu0 0.0
    %3732 = vmatpush1.msra.mxu0 %v2038
    %3733 = vmatprep.subr.mxu0 0.0
    %3734 = vmatpush1.msra.mxu0 %v2039
    %3735 = vmatprep.subr.mxu0 0.0
    %3736 = vmatpush1.msra.mxu0 %v2040
    %3737 = vmatprep.subr.mxu0 0.0
    %3738 = vmatpush1.msra.mxu0 %v2041
    %3739 = vmatprep.subr.mxu0 0.0
    %3740 = vmatpush1.msra.mxu0 %v2042
    %3741 = vmatprep.subr.mxu0 0.0
    %3742 = vmatpush1.msra.mxu0 0.0
    %3743 = vmatprep.subr.mxu0 0.0
    %3744 = vmatpush1.msra.mxu0 0.0
    %3745 = vmatprep.subr.mxu0 0.0
    %3746 = vmatpush1.msra.mxu0 0.0
    %3747 = vmatprep.subr.mxu0 0.0
    %3748 = vmatpush1.msra.mxu0 0.0
    %3749 = vmatprep.subr.mxu0 0.0
    %3750 = vmatpush1.msra.mxu0 0.0
    %3751 = vmatprep.subr.mxu0 0.0
    %3752 = vmatpush1.msra.mxu0 0.0
    %3753 = vmatprep.subr.mxu0 0.0
    %3754 = vmatpush1.msra.mxu0 0.0
    %3755 = vmatprep.subr.mxu0 0.0
    %3756 = vmatpush1.msra.mxu0 0.0
    %3757 = vmatprep.subr.mxu0 0.0
    %3758 = vmatpush1.msra.mxu0 0.0
    %3759 = vmatprep.subr.mxu0 0.0
    %3760 = vmatpush1.msra.mxu0 0.0
    %3761 = vmatprep.subr.mxu0 0.0
    %3762 = vmatpush1.msra.mxu0 0.0
    %3763 = vmatprep.subr.mxu0 0.0
    %3764 = vmatpush1.msra.mxu0 0.0
    %3765 = vmatprep.subr.mxu0 0.0
    %3766 = vmatpush1.msra.mxu0 0.0
    %3767 = vmatprep.subr.mxu0 0.0
    %3768 = vmatpush1.msra.mxu0 0.0
    %3769 = vmatprep.subr.mxu0 0.0
    %3770 = vmatpush1.msra.mxu0 0.0
    %3771 = vmatprep.subr.mxu0 0.0
    %3772 = vmatpush1.msra.mxu0 0.0
    %3773 = vmatprep.subr.mxu0 0.0
    %3774 = vmatpush1.msra.mxu0 0.0
    %3775 = vmatprep.subr.mxu0 0.0
    %3776 = vmatpush1.msra.mxu0 0.0
    %3777 = vmatprep.subr.mxu0 0.0
    %3778 = vmatpush1.msra.mxu0 0.0
    %3779 = vmatprep.subr.mxu0 0.0
    %3780 = vmatpush1.msra.mxu0 0.0
    %3781 = vmatprep.subr.mxu0 0.0
    %3782 = vmatpush1.msra.mxu0 0.0
    %3783 = vmatprep.subr.mxu0 0.0
    %3784 = vmatpush1.msra.mxu0 0.0
    %3785 = vmatprep.subr.mxu0 0.0
    %3786 = vmatpush1.msra.mxu0 0.0
    %3787 = vmatprep.subr.mxu0 0.0
    %3788 = vmatpush1.msra.mxu0 0.0
    %3789 = vmatprep.mubr.f32.mxu0 0.0
    %3790 = vmatmul.mubr.f32.gmra.mrb[0].mxu0 %v3720
    %v3791 = vpop.f32.mrb[0].mxu0
    %v3792 = vadd.f32 %v3718, %v3791
    %v3793 = vpop.f32.mrb[0].mxu0
    %3794 = vmatprep.mubr.f32.mxu0 0.0
    %3795 = vmatmul.mubr.f32.gmra.mrb[0].mxu0 %v3723
    %v3796 = vpop.f32.mrb[0].mxu0
    %v3797 = vadd.f32 %v3718, %v3796
    %v3798 = vpop.f32.mrb[0].mxu0
    %3799 = vdwg.mxu0
    %v3800 = vadd.f32 %v3792, %v3626
    %v3801 = vadd.f32 %v3797, %v3627
    %v3802 = vsel %vm41, %v3800, 0.0
    %3803 = vadd.xlane.f32.xlu0 %v3802
    %v3804 = vpop.xlane.xlu0 %3803
    %v3805 = vsel %vm41, %v3801, 0.0
    %3806 = vadd.xlane.f32.xlu0 %v3805
    %v3807 = vpop.xlane.xlu0 %3806
    %v3808 = vmul.f32 %v3804, %v1767
    %v3809 = vmul.f32 %v3807, %v1767
    %v3810 = vsub.f32 %v3800, %v3808
    %v3811 = vsub.f32 %v3801, %v3809
    %v3812 = vmul.f32 %v3810, %v3810
    %v3813 = vmul.f32 %v3811, %v3811
    %v3814 = vsel %vm41, %v3812, 0.0
    %3815 = vadd.xlane.f32.xlu0 %v3814
    %v3816 = vpop.xlane.xlu0 %3815
    %v3817 = vsel %vm41, %v3813, 0.0
    %3818 = vadd.xlane.f32.xlu0 %v3817
    %v3819 = vpop.xlane.xlu0 %3818
    %v3820 = vmul.f32 %v3816, %v1767
    %v3821 = vmul.f32 %v3819, %v1767
    %v3822 = vadd.f32 %v3820, 1e-05
    %v3823 = vadd.f32 %v3821, 1e-05
    %v3824 = vrsqrt.pop %v3822
    %v3825 = vrsqrt.pop %v3823
    %v3826 = vmul.f32 %v3810, %v3824
    %v3827 = vmul.f32 %v3811, %v3825
    %v3828 = vlaneseq
    %v3829 = vshrl.u32 %v3828, 7
    %v3830 = vsub.s32 0, %v3829
    %v3831 = vrot.slane %v2047, %v3830
    %v3832 = vmul.f32 %v3826, %v3831
    %v3833 = vmul.f32 %v3827, %v3831
    %v3834 = vlaneseq
    %v3835 = vshrl.u32 %v3834, 7
    %v3836 = vsub.s32 0, %v3835
    %v3837 = vrot.slane %v2048, %v3836
    %v3838 = vadd.f32 %v3832, %v3837
    %v3839 = vadd.f32 %v3833, %v3837
    %3840 = vst.msk [vmem:[#allocation2] sm:$0xff] %vm41, %v3838
    %3841 = vst.msk [vmem:[#allocation2 + $0x8] sm:$0xff] %vm41, %v3839
    // Predicated region
    $region22: #{encoder_forward.1} parent=1 // pred_check
      _
    $region23: #{encoder_forward.1} parent=1 // pred_check_branch
      %3843 = sbr.rel (0) target = $region25
    $region24: #{encoder_forward.1} parent=1 // pred_region
      %s3845 = ssub.s32 256, 256
      %3846 = vsyncadd [#allocation3], %s3845
      %s3847 = sshll.u32 [#allocation2], 4
      %s3848 = int_to_ptr.vmem [resolvable:$true] %s3847
      %3853 = dma.vmem_to_hbm [thread:$0]  %s3848, 256, %s5, [#allocation3], 128, 128, 8
    $region25: #{encoder_forward.1} parent=1 // pred_fallthru
      _
    // Predicated region
    $region26: #{encoder_forward.1} parent=1 // pred_check
      _
    $region27: #{encoder_forward.1} parent=1 // pred_check_branch
      %3855 = sbr.rel (0) target = $region29
    $region28: #{encoder_forward.1} parent=1 // pred_region
      %3856 = dma.done [#allocation3], 256
    $region29: #{encoder_forward.1} parent=1 // pred_fallthru
      _
    %3857 = vsyncpa [#allocation3], 1

</llo_original>
